<compile_context>
chip_gen: v7x
topology: tpu7x:2x2x1
jax: 0.10.0
libtpu: 0.0.40
codegen_flags: <defaults>
</compile_context>

<pallas_src>
import functools

import jax
import jax.numpy as jnp
from jax.experimental import pallas as pl
from jax.experimental.pallas import tpu as pltpu


# ----------------------------------------------------------------------------
# helpers
# ----------------------------------------------------------------------------
def _round_up(x, m):
    return (x + m - 1) // m * m


def _pick_tile(dim, max_tile, quantum):
    """Largest tile <= max_tile that divides dim (dim itself if small)."""
    if dim <= max_tile:
        return dim
    t = (max_tile // quantum) * quantum
    while t > quantum and dim % t != 0:
        t -= quantum
    return t if (t > 0 and dim % t == 0) else dim


_VMEM_LIMIT = 48 * 1024 * 1024  # explicit scoped-VMEM budget (fits all gens)


# ----------------------------------------------------------------------------
# Pallas kernel 1: tiled  out = act(x @ w + b)  with f32 VMEM accumulator
# ----------------------------------------------------------------------------
def _matmul_bias_act_kernel(x_ref, w_ref, b_ref, o_ref, acc_ref, *, apply_relu):
    k = pl.program_id(1)

    @pl.when(k == 0)
    def _():
        acc_ref[...] = jnp.zeros_like(acc_ref)

    acc_ref[...] += jnp.dot(x_ref[...], w_ref[...],
                            preferred_element_type=jnp.float32)

    @pl.when(k == pl.num_programs(1) - 1)
    def _():
        res = acc_ref[...] + b_ref[...]          # f32 epilogue
        if apply_relu:
            res = jnp.maximum(res, 0.0)
        o_ref[...] = res.astype(o_ref.dtype)


def matmul_bias_act(x, w_bf16, b_f32, *, relu, tm_max=256, tk_max=512):
    """x: (M, Kx) f32/bf16, w: (Kw, N) bf16 (Kw >= Kx, extra rows zero),
    b: (N,) f32 -> (M, N) f32."""
    M, Kx = x.shape
    Kw, N = w_bf16.shape
    if Kx < Kw:                                   # K pre-padded on the weight
        x = jnp.pad(x, ((0, 0), (0, Kw - Kx)))
    Mp = _round_up(M, 8)
    if Mp != M:
        x = jnp.pad(x, ((0, Mp - M), (0, 0)))

    tm = _pick_tile(Mp, tm_max, 8)
    tk = _pick_tile(Kw, tk_max, 128)
    grid = (Mp // tm, Kw // tk)
    b2 = b_f32.reshape(1, N).astype(jnp.float32)

    out = pl.pallas_call(
        functools.partial(_matmul_bias_act_kernel, apply_relu=relu),
        out_shape=jax.ShapeDtypeStruct((Mp, N), jnp.float32),
        grid=grid,
        in_specs=[
            pl.BlockSpec((tm, tk), lambda i, k: (i, k)),
            pl.BlockSpec((tk, N), lambda i, k: (k, 0)),
            pl.BlockSpec((1, N), lambda i, k: (0, 0)),
        ],
        out_specs=pl.BlockSpec((tm, N), lambda i, k: (i, 0)),
        scratch_shapes=[pltpu.VMEM((tm, N), jnp.float32)],
        compiler_params=pltpu.CompilerParams(
            dimension_semantics=("parallel", "arbitrary"),
            vmem_limit_bytes=_VMEM_LIMIT),
    )(x.astype(jnp.bfloat16), w_bf16, b2)
    return out[:M] if Mp != M else out


# ----------------------------------------------------------------------------
# Pallas kernel 2: fused MLP  (fc1+ReLU -> fc2+ReLU -> heads), single call
# ----------------------------------------------------------------------------
def _mlp_fused_kernel(x_ref, w1_ref, b1_ref, w2_ref, b2_ref, wh_ref, bh_ref,
                      o_ref):
    h = jnp.dot(x_ref[...], w1_ref[...], preferred_element_type=jnp.float32)
    h = jnp.maximum(h + b1_ref[...], 0.0)
    h = jnp.dot(h.astype(jnp.bfloat16), w2_ref[...],
                preferred_element_type=jnp.float32)
    h = jnp.maximum(h + b2_ref[...], 0.0)
    out = jnp.dot(h.astype(jnp.bfloat16), wh_ref[...],
                  preferred_element_type=jnp.float32)
    o_ref[...] = (out + bh_ref[...]).astype(o_ref.dtype)


def _mlp_heads_fused(x, p):
    B, flat = x.shape
    Bp = _round_up(B, 8)
    if Bp != B:
        x = jnp.pad(x, ((0, Bp - B), (0, 0)))
    flat_w, H1 = p["fc1_w"].shape
    H2 = p["fc2_w"].shape[1]
    Nh = p["head_w"].shape[1]
    assert flat == flat_w, (flat, flat_w)

    out = pl.pallas_call(
        _mlp_fused_kernel,
        out_shape=jax.ShapeDtypeStruct((Bp, Nh), jnp.float32),
        grid=(1,),
        in_specs=[
            pl.BlockSpec((Bp, flat), lambda i: (0, 0)),
            pl.BlockSpec((flat, H1), lambda i: (0, 0)),
            pl.BlockSpec((1, H1), lambda i: (0, 0)),
            pl.BlockSpec((H1, H2), lambda i: (0, 0)),
            pl.BlockSpec((1, H2), lambda i: (0, 0)),
            pl.BlockSpec((H2, Nh), lambda i: (0, 0)),
            pl.BlockSpec((1, Nh), lambda i: (0, 0)),
        ],
        out_specs=pl.BlockSpec((Bp, Nh), lambda i: (0, 0)),
        compiler_params=pltpu.CompilerParams(
            dimension_semantics=("arbitrary",),
            vmem_limit_bytes=_VMEM_LIMIT),
    )(x.astype(jnp.bfloat16),
      p["fc1_w"], p["fc1_b"].reshape(1, -1),
      p["fc2_w"], p["fc2_b"].reshape(1, -1),
      p["head_w"], p["head_b"].reshape(1, -1))
    return out[:B]


def mlp_heads(x, p):
    """fc1+fc2+heads.  Fused single pallas_call when the bf16 weights fit a
    conservative VMEM budget (true for all small obs); else tiled per-layer."""
    flat, H1 = p["fc1_w"].shape
    H2 = p["fc2_w"].shape[1]
    Nh = p["head_w"].shape[1]
    weight_bytes = 2 * (flat * H1 + H1 * H2 + H2 * Nh)   # bf16
    if weight_bytes <= 20 * 1024 * 1024:
        return _mlp_heads_fused(x, p)
    # Fallback for very large flattened conv outputs (e.g. Atari-scale obs,
    # where fc1's weight alone would not fit single-block on v7x's 64 MiB).
    h = matmul_bias_act(x, p["fc1_w"], p["fc1_b"], relu=True)
    h = matmul_bias_act(h, p["fc2_w"], p["fc2_b"], relu=True)
    return matmul_bias_act(h, p["head_w"], p["head_b"], relu=False)


# ----------------------------------------------------------------------------
# Conv2d via im2col (glue) + Pallas matmul kernel (hot path)
# ----------------------------------------------------------------------------
def _conv_out_size(size, k, stride, pad):
    return (size + 2 * pad - k) // stride + 1


def _im2col(x_nhwc, k, stride, pad):
    """x: (B, H, W, C) -> patches (B, oh, ow, k*k*C), patch order (kh, kw, c)."""
    # TODO(synk): for Atari-scale obs, fold patch extraction into the kernel
    # (manual DMA of input rows) to avoid materializing the ~6x patch tensor.
    x = jnp.pad(x_nhwc, ((0, 0), (pad, pad), (pad, pad), (0, 0)))
    B, Hp, Wp, C = x.shape
    oh = (Hp - k) // stride + 1
    ow = (Wp - k) // stride + 1
    patches = []
    for i in range(k):
        for j in range(k):
            patches.append(
                x[:, i:i + stride * oh:stride, j:j + stride * ow:stride, :])
    cols = jnp.stack(patches, axis=3)            # (B, oh, ow, k*k, C)
    return cols.reshape(B, oh, ow, k * k * C), oh, ow


def conv2d_relu(x_nhwc, w_mat_bf16, b, *, k, stride, pad):
    """Conv2d + ReLU with a pre-reordered weight matrix (Kpad, Cout) bf16."""
    cols, oh, ow = _im2col(x_nhwc, k, stride, pad)       # (B, oh, ow, k*k*Cin)
    B, Kc = cols.shape[0], cols.shape[-1]
    Cout = w_mat_bf16.shape[1]
    y = matmul_bias_act(cols.reshape(B * oh * ow, Kc), w_mat_bf16, b, relu=True)
    return y.reshape(B, oh, ow, Cout)                    # NHWC


# ----------------------------------------------------------------------------
# Parameter construction (deterministic, synthetic, PyTorch layout) and
# one-time conversion to kernel layout (pre-transposed, pre-padded, bf16).
# ----------------------------------------------------------------------------
def init_params(key, in_channels, obs_hw, num_outputs):
    h1 = _conv_out_size(obs_hw[0], 5, 2, 2)
    w1 = _conv_out_size(obs_hw[1], 5, 2, 2)
    h2 = _conv_out_size(h1, 4, 2, 1)
    w2 = _conv_out_size(w1, 4, 2, 1)
    flat = h2 * w2 * 32

    ks = jax.random.split(key, 12)

    def u(k, shape, fan_in):
        lim = 1.0 / jnp.sqrt(float(fan_in))
        return jax.random.uniform(k, shape, jnp.float32, -lim, lim)

    return {
        "conv1_w": u(ks[0], (16, in_channels, 5, 5), in_channels * 25),
        "conv1_b": u(ks[1], (16,), in_channels * 25),
        "conv2_w": u(ks[2], (32, 16, 4, 4), 16 * 16),
        "conv2_b": u(ks[3], (32,), 16 * 16),
        "fc1_w":   u(ks[4], (1024, flat), flat),       # PyTorch Linear: (out, in)
        "fc1_b":   u(ks[5], (1024,), flat),
        "fc2_w":   u(ks[6], (512, 1024), 1024),
        "fc2_b":   u(ks[7], (512,), 1024),
        "out_w":   u(ks[8], (num_outputs, 512), 512),
        "out_b":   u(ks[9], (num_outputs,), 512),
        "val_w":   u(ks[10], (1, 512), 512),
        "val_b":   u(ks[11], (1,), 512),
    }


def prepare_params(raw, num_outputs):
    """One-time (outside jit): reorder/transpose/pad weights, cast to bf16."""
    def conv_w_to_mat(w_oihw):
        Cout, Cin, kh, kw = w_oihw.shape
        m = jnp.transpose(w_oihw, (2, 3, 1, 0)).reshape(kh * kw * Cin, Cout)
        kpad = _round_up(m.shape[0], 128)          # lane-align the K axis
        if m.shape[0] < kpad:
            m = jnp.pad(m, ((0, kpad - m.shape[0]), (0, 0)))
        return m.astype(jnp.bfloat16)

    # Fused heads: [output_layer | value_layer], padded to N multiple of 128
    head_w = jnp.concatenate([raw["out_w"].T, raw["val_w"].T], axis=1)
    head_b = jnp.concatenate([raw["out_b"], raw["val_b"]], axis=0)
    Nh = _round_up(num_outputs + 1, 128)
    head_w = jnp.pad(head_w, ((0, 0), (0, Nh - head_w.shape[1])))
    head_b = jnp.pad(head_b, (0, Nh - head_b.shape[0]))

    return {
        "conv1_w": conv_w_to_mat(raw["conv1_w"]),
        "conv1_b": raw["conv1_b"].astype(jnp.float32),
        "conv2_w": conv_w_to_mat(raw["conv2_w"]),
        "conv2_b": raw["conv2_b"].astype(jnp.float32),
        "fc1_w":   raw["fc1_w"].T.astype(jnp.bfloat16),   # (flat, 1024)
        "fc1_b":   raw["fc1_b"].astype(jnp.float32),
        "fc2_w":   raw["fc2_w"].T.astype(jnp.bfloat16),   # (1024, 512)
        "fc2_b":   raw["fc2_b"].astype(jnp.float32),
        "head_w":  head_w.astype(jnp.bfloat16),           # (512, Nh)
        "head_b":  head_b.astype(jnp.float32),
    }


# ----------------------------------------------------------------------------
# Forward pass (mirrors CustomNetwork.forward + value_function)
# ----------------------------------------------------------------------------
@functools.partial(jax.jit, static_argnames=("num_outputs",))
def custom_network_forward(params, obs_nhwc, *, num_outputs):
    x = obs_nhwc.astype(jnp.float32)                    # .float()
    # (torch permutes to NCHW; we keep NHWC and match weight/flatten ordering)
    x = conv2d_relu(x, params["conv1_w"], params["conv1_b"], k=5, stride=2, pad=2)
    x = conv2d_relu(x, params["conv2_w"], params["conv2_b"], k=4, stride=2, pad=1)
    # nn.Flatten on the NCHW tensor -> channel-major flattening
    B = x.shape[0]
    x = jnp.transpose(x, (0, 3, 1, 2)).reshape(B, -1)   # (B, 32*h2*w2)
    head = mlp_heads(x, params)                         # (B, Nh) f32, fused
    logits = head[:, :num_outputs]
    value = head[:, num_outputs]                        # value_function: squeeze(1)
    return logits, value


# ----------------------------------------------------------------------------
if __name__ == "__main__":
    key = jax.random.PRNGKey(0)
    B, H, W, C = 2, 16, 16, 4
    num_outputs = 8

    pkey, okey = jax.random.split(key)
    raw_params = init_params(pkey, in_channels=C, obs_hw=(H, W),
                             num_outputs=num_outputs)
    params = prepare_params(raw_params, num_outputs)
    obs = jax.random.uniform(okey, (B, H, W, C), jnp.float32)

    logits, value = custom_network_forward(params, obs, num_outputs=num_outputs)
    jax.block_until_ready((logits, value))

    assert logits.shape == (B, num_outputs), logits.shape
    assert value.shape == (B,), value.shape
    print("KERNEL_OK")
</pallas_src>

<mosaic_0001>
module attributes {stable_mosaic.version = 11 : i64} {
  func.func @_matmul_bias_act_kernel(%arg0: i32, %arg1: i32, %arg2: memref<128x128xbf16, #tpu.memory_space<vmem>>, %arg3: memref<128x16xbf16, #tpu.memory_space<vmem>>, %arg4: memref<1x16xf32, #tpu.memory_space<vmem>>, %arg5: memref<128x16xf32, #tpu.memory_space<vmem>>, %arg6: memref<128x16xf32, #tpu.memory_space<vmem>>) attributes {dimension_semantics = [#tpu.dimension_semantics<parallel>, #tpu.dimension_semantics<arbitrary>], iteration_bounds = array<i64: 1, 1>, scalar_prefetch = 0 : i64, scratch_operands = 1 : i64, tpu.core_type = #tpu.core_type<tc>, window_params = [{transform_indices = @transform_0, window_bounds = array<i64: 128, 128>}, {transform_indices = @transform_1, window_bounds = array<i64: 128, 16>}, {pipeline_mode = #tpu.pipeline_mode<synchronous>, transform_indices = @transform_2, window_bounds = array<i64: 1, 16>}, {transform_indices = @transform_3, window_bounds = array<i64: 128, 16>}]} {
    %c0_i32 = arith.constant 0 : i32
    %0 = arith.cmpi eq, %arg1, %c0_i32 : i32
    %1 = arith.extui %0 : i1 to i32
    %c0_i32_0 = arith.constant 0 : i32
    %2 = arith.cmpi ne, %1, %c0_i32_0 : i32
    scf.if %2 {
      %cst_10 = arith.constant 0.000000e+00 : f32
      %12 = vector.broadcast %cst_10 : f32 to vector<128x16xf32>
      %c0_11 = arith.constant 0 : index
      %c0_12 = arith.constant 0 : index
      %13 = vector.load %arg6[%c0_11, %c0_12] : memref<128x16xf32, #tpu.memory_space<vmem>>, vector<128x16xf32>
      tpu.vector_store %arg6[%c0_11, %c0_12], %12 {strides = array<i32>} : memref<128x16xf32, #tpu.memory_space<vmem>>, vector<128x16xf32>,
    } else {
    }
    %c0 = arith.constant 0 : index
    %c0_1 = arith.constant 0 : index
    %3 = vector.load %arg6[%c0, %c0_1] : memref<128x16xf32, #tpu.memory_space<vmem>>, vector<128x16xf32>
    %c0_2 = arith.constant 0 : index
    %c0_3 = arith.constant 0 : index
    %4 = vector.load %arg2[%c0_2, %c0_3] : memref<128x128xbf16, #tpu.memory_space<vmem>>, vector<128x128xbf16>
    %c0_4 = arith.constant 0 : index
    %c0_5 = arith.constant 0 : index
    %5 = vector.load %arg3[%c0_4, %c0_5] : memref<128x16xbf16, #tpu.memory_space<vmem>>, vector<128x16xbf16>
    %cst = arith.constant dense<0.000000e+00> : vector<128x16xf32>
    %6 = tpu.matmul %4, %5, %cst {dimension_numbers = #tpu.dot_dimension_numbers<[1], [0], [0], [1], [0, 0, 1, 1], [], []>} : vector<128x128xbf16>, vector<128x16xbf16>, vector<128x16xf32> -> vector<128x16xf32>
    %7 = arith.addf %3, %6 : vector<128x16xf32>
    %c0_6 = arith.constant 0 : index
    %c0_7 = arith.constant 0 : index
    %8 = vector.load %arg6[%c0_6, %c0_7] : memref<128x16xf32, #tpu.memory_space<vmem>>, vector<128x16xf32>
    tpu.vector_store %arg6[%c0_6, %c0_7], %7 {strides = array<i32>} : memref<128x16xf32, #tpu.memory_space<vmem>>, vector<128x16xf32>,
    %c0_i32_8 = arith.constant 0 : i32
    %9 = arith.cmpi eq, %arg1, %c0_i32_8 : i32
    %10 = arith.extui %9 : i1 to i32
    %c0_i32_9 = arith.constant 0 : i32
    %11 = arith.cmpi ne, %10, %c0_i32_9 : i32
    scf.if %11 {
      %c0_10 = arith.constant 0 : index
      %c0_11 = arith.constant 0 : index
      %12 = vector.load %arg6[%c0_10, %c0_11] : memref<128x16xf32, #tpu.memory_space<vmem>>, vector<128x16xf32>
      %c0_12 = arith.constant 0 : index
      %c0_13 = arith.constant 0 : index
      %13 = vector.load %arg4[%c0_12, %c0_13] : memref<1x16xf32, #tpu.memory_space<vmem>>, vector<1x16xf32>
      %14 = vector.broadcast %13 : vector<1x16xf32> to vector<128x16xf32>
      %15 = arith.addf %12, %14 : vector<128x16xf32>
      %cst_14 = arith.constant 0.000000e+00 : f32
      %16 = vector.broadcast %cst_14 : f32 to vector<128x16xf32>
      %17 = arith.maximumf %15, %16 : vector<128x16xf32>
      %c0_15 = arith.constant 0 : index
      %c0_16 = arith.constant 0 : index
      %18 = vector.load %arg5[%c0_15, %c0_16] : memref<128x16xf32, #tpu.memory_space<vmem>>, vector<128x16xf32>
      tpu.vector_store %arg5[%c0_15, %c0_16], %17 {strides = array<i32>} : memref<128x16xf32, #tpu.memory_space<vmem>>, vector<128x16xf32>,
    } else {
    }
    return
  }
  func.func @transform_0(%arg0: i32, %arg1: i32) -> (i32, i32) {
    %c0_i32 = arith.constant 0 : i32
    return %arg0, %arg1 : i32, i32
  }
  func.func @transform_1(%arg0: i32, %arg1: i32) -> (i32, i32) {
    %c0_i32 = arith.constant 0 : i32
    %c0_i32_0 = arith.constant 0 : i32
    return %arg1, %c0_i32 : i32, i32
  }
  func.func @transform_2(%arg0: i32, %arg1: i32) -> (i32, i32) {
    %c0_i32 = arith.constant 0 : i32
    %c0_i32_0 = arith.constant 0 : i32
    %c0_i32_1 = arith.constant 0 : i32
    return %c0_i32, %c0_i32_0 : i32, i32
  }
  func.func @transform_3(%arg0: i32, %arg1: i32) -> (i32, i32) {
    %c0_i32 = arith.constant 0 : i32
    %c0_i32_0 = arith.constant 0 : i32
    return %arg0, %c0_i32 : i32, i32
  }
}

module attributes {stable_mosaic.version = 11 : i64} {
  func.func @_matmul_bias_act_kernel(%arg0: i32, %arg1: i32, %arg2: memref<32x256xbf16, #tpu.memory_space<vmem>>, %arg3: memref<256x32xbf16, #tpu.memory_space<vmem>>, %arg4: memref<1x32xf32, #tpu.memory_space<vmem>>, %arg5: memref<32x32xf32, #tpu.memory_space<vmem>>, %arg6: memref<32x32xf32, #tpu.memory_space<vmem>>) attributes {dimension_semantics = [#tpu.dimension_semantics<parallel>, #tpu.dimension_semantics<arbitrary>], iteration_bounds = array<i64: 1, 1>, scalar_prefetch = 0 : i64, scratch_operands = 1 : i64, tpu.core_type = #tpu.core_type<tc>, window_params = [{transform_indices = @transform_0, window_bounds = array<i64: 32, 256>}, {transform_indices = @transform_1, window_bounds = array<i64: 256, 32>}, {pipeline_mode = #tpu.pipeline_mode<synchronous>, transform_indices = @transform_2, window_bounds = array<i64: 1, 32>}, {transform_indices = @transform_3, window_bounds = array<i64: 32, 32>}]} {
    %c0_i32 = arith.constant 0 : i32
    %0 = arith.cmpi eq, %arg1, %c0_i32 : i32
    %1 = arith.extui %0 : i1 to i32
    %c0_i32_0 = arith.constant 0 : i32
    %2 = arith.cmpi ne, %1, %c0_i32_0 : i32
    scf.if %2 {
      %cst_10 = arith.constant 0.000000e+00 : f32
      %12 = vector.broadcast %cst_10 : f32 to vector<32x32xf32>
      %c0_11 = arith.constant 0 : index
      %c0_12 = arith.constant 0 : index
      %13 = vector.load %arg6[%c0_11, %c0_12] : memref<32x32xf32, #tpu.memory_space<vmem>>, vector<32x32xf32>
      tpu.vector_store %arg6[%c0_11, %c0_12], %12 {strides = array<i32>} : memref<32x32xf32, #tpu.memory_space<vmem>>, vector<32x32xf32>,
    } else {
    }
    %c0 = arith.constant 0 : index
    %c0_1 = arith.constant 0 : index
    %3 = vector.load %arg6[%c0, %c0_1] : memref<32x32xf32, #tpu.memory_space<vmem>>, vector<32x32xf32>
    %c0_2 = arith.constant 0 : index
    %c0_3 = arith.constant 0 : index
    %4 = vector.load %arg2[%c0_2, %c0_3] : memref<32x256xbf16, #tpu.memory_space<vmem>>, vector<32x256xbf16>
    %c0_4 = arith.constant 0 : index
    %c0_5 = arith.constant 0 : index
    %5 = vector.load %arg3[%c0_4, %c0_5] : memref<256x32xbf16, #tpu.memory_space<vmem>>, vector<256x32xbf16>
    %cst = arith.constant dense<0.000000e+00> : vector<32x32xf32>
    %6 = tpu.matmul %4, %5, %cst {dimension_numbers = #tpu.dot_dimension_numbers<[1], [0], [0], [1], [0, 0, 1, 1], [], []>} : vector<32x256xbf16>, vector<256x32xbf16>, vector<32x32xf32> -> vector<32x32xf32>
    %7 = arith.addf %3, %6 : vector<32x32xf32>
    %c0_6 = arith.constant 0 : index
    %c0_7 = arith.constant 0 : index
    %8 = vector.load %arg6[%c0_6, %c0_7] : memref<32x32xf32, #tpu.memory_space<vmem>>, vector<32x32xf32>
    tpu.vector_store %arg6[%c0_6, %c0_7], %7 {strides = array<i32>} : memref<32x32xf32, #tpu.memory_space<vmem>>, vector<32x32xf32>,
    %c0_i32_8 = arith.constant 0 : i32
    %9 = arith.cmpi eq, %arg1, %c0_i32_8 : i32
    %10 = arith.extui %9 : i1 to i32
    %c0_i32_9 = arith.constant 0 : i32
    %11 = arith.cmpi ne, %10, %c0_i32_9 : i32
    scf.if %11 {
      %c0_10 = arith.constant 0 : index
      %c0_11 = arith.constant 0 : index
      %12 = vector.load %arg6[%c0_10, %c0_11] : memref<32x32xf32, #tpu.memory_space<vmem>>, vector<32x32xf32>
      %c0_12 = arith.constant 0 : index
      %c0_13 = arith.constant 0 : index
      %13 = vector.load %arg4[%c0_12, %c0_13] : memref<1x32xf32, #tpu.memory_space<vmem>>, vector<1x32xf32>
      %14 = vector.broadcast %13 : vector<1x32xf32> to vector<32x32xf32>
      %15 = arith.addf %12, %14 : vector<32x32xf32>
      %cst_14 = arith.constant 0.000000e+00 : f32
      %16 = vector.broadcast %cst_14 : f32 to vector<32x32xf32>
      %17 = arith.maximumf %15, %16 : vector<32x32xf32>
      %c0_15 = arith.constant 0 : index
      %c0_16 = arith.constant 0 : index
      %18 = vector.load %arg5[%c0_15, %c0_16] : memref<32x32xf32, #tpu.memory_space<vmem>>, vector<32x32xf32>
      tpu.vector_store %arg5[%c0_15, %c0_16], %17 {strides = array<i32>} : memref<32x32xf32, #tpu.memory_space<vmem>>, vector<32x32xf32>,
    } else {
    }
    return
  }
  func.func @transform_0(%arg0: i32, %arg1: i32) -> (i32, i32) {
    %c0_i32 = arith.constant 0 : i32
    return %arg0, %arg1 : i32, i32
  }
  func.func @transform_1(%arg0: i32, %arg1: i32) -> (i32, i32) {
    %c0_i32 = arith.constant 0 : i32
    %c0_i32_0 = arith.constant 0 : i32
    return %arg1, %c0_i32 : i32, i32
  }
  func.func @transform_2(%arg0: i32, %arg1: i32) -> (i32, i32) {
    %c0_i32 = arith.constant 0 : i32
    %c0_i32_0 = arith.constant 0 : i32
    %c0_i32_1 = arith.constant 0 : i32
    return %c0_i32, %c0_i32_0 : i32, i32
  }
  func.func @transform_3(%arg0: i32, %arg1: i32) -> (i32, i32) {
    %c0_i32 = arith.constant 0 : i32
    %c0_i32_0 = arith.constant 0 : i32
    return %arg0, %c0_i32 : i32, i32
  }
}

module attributes {stable_mosaic.version = 11 : i64} {
  func.func @_mlp_fused_kernel(%arg0: i32, %arg1: memref<8x512xbf16, #tpu.memory_space<vmem>>, %arg2: memref<512x1024xbf16, #tpu.memory_space<vmem>>, %arg3: memref<1x1024xf32, #tpu.memory_space<vmem>>, %arg4: memref<1024x512xbf16, #tpu.memory_space<vmem>>, %arg5: memref<1x512xf32, #tpu.memory_space<vmem>>, %arg6: memref<512x128xbf16, #tpu.memory_space<vmem>>, %arg7: memref<1x128xf32, #tpu.memory_space<vmem>>, %arg8: memref<8x128xf32, #tpu.memory_space<vmem>>) attributes {dimension_semantics = [#tpu.dimension_semantics<arbitrary>], iteration_bounds = array<i64: 1>, scalar_prefetch = 0 : i64, scratch_operands = 0 : i64, tpu.core_type = #tpu.core_type<tc>, window_params = [{pipeline_mode = #tpu.pipeline_mode<synchronous>, transform_indices = @transform_0, window_bounds = array<i64: 8, 512>}, {pipeline_mode = #tpu.pipeline_mode<synchronous>, transform_indices = @transform_1, window_bounds = array<i64: 512, 1024>}, {pipeline_mode = #tpu.pipeline_mode<synchronous>, transform_indices = @transform_2, window_bounds = array<i64: 1, 1024>}, {pipeline_mode = #tpu.pipeline_mode<synchronous>, transform_indices = @transform_3, window_bounds = array<i64: 1024, 512>}, {pipeline_mode = #tpu.pipeline_mode<synchronous>, transform_indices = @transform_4, window_bounds = array<i64: 1, 512>}, {pipeline_mode = #tpu.pipeline_mode<synchronous>, transform_indices = @transform_5, window_bounds = array<i64: 512, 128>}, {pipeline_mode = #tpu.pipeline_mode<synchronous>, transform_indices = @transform_6, window_bounds = array<i64: 1, 128>}, {pipeline_mode = #tpu.pipeline_mode<synchronous>, transform_indices = @transform_7, window_bounds = array<i64: 8, 128>}]} {
    %c0 = arith.constant 0 : index
    %c0_0 = arith.constant 0 : index
    %0 = vector.load %arg1[%c0, %c0_0] : memref<8x512xbf16, #tpu.memory_space<vmem>>, vector<8x512xbf16>
    %c0_1 = arith.constant 0 : index
    %c0_2 = arith.constant 0 : index
    %1 = vector.load %arg2[%c0_1, %c0_2] : memref<512x1024xbf16, #tpu.memory_space<vmem>>, vector<512x1024xbf16>
    %cst = arith.constant dense<0.000000e+00> : vector<8x1024xf32>
    %2 = tpu.matmul %0, %1, %cst {dimension_numbers = #tpu.dot_dimension_numbers<[1], [0], [0], [1], [0, 0, 1, 1], [], []>} : vector<8x512xbf16>, vector<512x1024xbf16>, vector<8x1024xf32> -> vector<8x1024xf32>
    %c0_3 = arith.constant 0 : index
    %c0_4 = arith.constant 0 : index
    %3 = vector.load %arg3[%c0_3, %c0_4] : memref<1x1024xf32, #tpu.memory_space<vmem>>, vector<1x1024xf32>
    %4 = vector.broadcast %3 : vector<1x1024xf32> to vector<8x1024xf32>
    %5 = arith.addf %2, %4 : vector<8x1024xf32>
    %cst_5 = arith.constant 0.000000e+00 : f32
    %6 = vector.broadcast %cst_5 : f32 to vector<8x1024xf32>
    %7 = arith.maximumf %5, %6 : vector<8x1024xf32>
    %8 = arith.truncf %7 : vector<8x1024xf32> to vector<8x1024xbf16>
    %c0_6 = arith.constant 0 : index
    %c0_7 = arith.constant 0 : index
    %9 = vector.load %arg4[%c0_6, %c0_7] : memref<1024x512xbf16, #tpu.memory_space<vmem>>, vector<1024x512xbf16>
    %cst_8 = arith.constant dense<0.000000e+00> : vector<8x512xf32>
    %10 = tpu.matmul %8, %9, %cst_8 {dimension_numbers = #tpu.dot_dimension_numbers<[1], [0], [0], [1], [0, 0, 1, 1], [], []>} : vector<8x1024xbf16>, vector<1024x512xbf16>, vector<8x512xf32> -> vector<8x512xf32>
    %c0_9 = arith.constant 0 : index
    %c0_10 = arith.constant 0 : index
    %11 = vector.load %arg5[%c0_9, %c0_10] : memref<1x512xf32, #tpu.memory_space<vmem>>, vector<1x512xf32>
    %12 = vector.broadcast %11 : vector<1x512xf32> to vector<8x512xf32>
    %13 = arith.addf %10, %12 : vector<8x512xf32>
    %cst_11 = arith.constant 0.000000e+00 : f32
    %14 = vector.broadcast %cst_11 : f32 to vector<8x512xf32>
    %15 = arith.maximumf %13, %14 : vector<8x512xf32>
    %16 = arith.truncf %15 : vector<8x512xf32> to vector<8x512xbf16>
    %c0_12 = arith.constant 0 : index
    %c0_13 = arith.constant 0 : index
    %17 = vector.load %arg6[%c0_12, %c0_13] : memref<512x128xbf16, #tpu.memory_space<vmem>>, vector<512x128xbf16>
    %cst_14 = arith.constant dense<0.000000e+00> : vector<8x128xf32>
    %18 = tpu.matmul %16, %17, %cst_14 {dimension_numbers = #tpu.dot_dimension_numbers<[1], [0], [0], [1], [0, 0, 1, 1], [], []>} : vector<8x512xbf16>, vector<512x128xbf16>, vector<8x128xf32> -> vector<8x128xf32>
    %c0_15 = arith.constant 0 : index
    %c0_16 = arith.constant 0 : index
    %19 = vector.load %arg7[%c0_15, %c0_16] : memref<1x128xf32, #tpu.memory_space<vmem>>, vector<1x128xf32>
    %20 = vector.broadcast %19 : vector<1x128xf32> to vector<8x128xf32>
    %21 = arith.addf %18, %20 : vector<8x128xf32>
    %c0_17 = arith.constant 0 : index
    %c0_18 = arith.constant 0 : index
    %22 = vector.load %arg8[%c0_17, %c0_18] : memref<8x128xf32, #tpu.memory_space<vmem>>, vector<8x128xf32>
    tpu.vector_store %arg8[%c0_17, %c0_18], %21 {strides = array<i32>} : memref<8x128xf32, #tpu.memory_space<vmem>>, vector<8x128xf32>,
    return
  }
  func.func @transform_0(%arg0: i32) -> (i32, i32) {
    %c0_i32 = arith.constant 0 : i32
    %c0_i32_0 = arith.constant 0 : i32
    %c0_i32_1 = arith.constant 0 : i32
    return %c0_i32, %c0_i32_0 : i32, i32
  }
  func.func @transform_1(%arg0: i32) -> (i32, i32) {
    %c0_i32 = arith.constant 0 : i32
    %c0_i32_0 = arith.constant 0 : i32
    %c0_i32_1 = arith.constant 0 : i32
    return %c0_i32, %c0_i32_0 : i32, i32
  }
  func.func @transform_2(%arg0: i32) -> (i32, i32) {
    %c0_i32 = arith.constant 0 : i32
    %c0_i32_0 = arith.constant 0 : i32
    %c0_i32_1 = arith.constant 0 : i32
    return %c0_i32, %c0_i32_0 : i32, i32
  }
  func.func @transform_3(%arg0: i32) -> (i32, i32) {
    %c0_i32 = arith.constant 0 : i32
    %c0_i32_0 = arith.constant 0 : i32
    %c0_i32_1 = arith.constant 0 : i32
    return %c0_i32, %c0_i32_0 : i32, i32
  }
  func.func @transform_4(%arg0: i32) -> (i32, i32) {
    %c0_i32 = arith.constant 0 : i32
    %c0_i32_0 = arith.constant 0 : i32
    %c0_i32_1 = arith.constant 0 : i32
    return %c0_i32, %c0_i32_0 : i32, i32
  }
  func.func @transform_5(%arg0: i32) -> (i32, i32) {
    %c0_i32 = arith.constant 0 : i32
    %c0_i32_0 = arith.constant 0 : i32
    %c0_i32_1 = arith.constant 0 : i32
    return %c0_i32, %c0_i32_0 : i32, i32
  }
  func.func @transform_6(%arg0: i32) -> (i32, i32) {
    %c0_i32 = arith.constant 0 : i32
    %c0_i32_0 = arith.constant 0 : i32
    %c0_i32_1 = arith.constant 0 : i32
    return %c0_i32, %c0_i32_0 : i32, i32
  }
  func.func @transform_7(%arg0: i32) -> (i32, i32) {
    %c0_i32 = arith.constant 0 : i32
    %c0_i32_0 = arith.constant 0 : i32
    %c0_i32_1 = arith.constant 0 : i32
    return %c0_i32, %c0_i32_0 : i32, i32
  }
}

</mosaic_0001>

<llo_original>
// kernel: custom_network_forward.3
$region0: #{custom_network_forward.3}
  #allocation0 [shape = 'u32[]', space=smem, size = 0x4, offset = 0x4, fixed_abs, tag = 'smem constant byte address 0x4 - core index']
  #allocation1 [shape = 'u32[144,128]{1,0:T(1,128)}', space=vmem, size = 0x12000, scoped, tag = 'internal scratch']
  #allocation2 [shape = 'f32[128,16]{1,0:T(8,128)}', space=vmem, size = 0x10000, scoped, tag = 'scratch operand']
  %s0 = inlined_call_operand.vmem [shape: bf16[128,128], index: 0, kind: input, shape index: {}]
  %s1 = inlined_call_operand.vmem [shape: bf16[128,16], index: 1, kind: input, shape index: {}]
  %s2 = inlined_call_operand.vmem [shape: f32[1,16], index: 2, kind: input, shape index: {}]
  %s3 = inlined_call_operand.vmem [shape: f32[128,16], index: 3, kind: output, shape index: {}]
  %s4 = sld [smem:[#allocation0]]
  $region30: #{custom_network_forward.3} parent=0
    _
  %s6 = ssub.s32 1, %s4
  %s7 = scalar_select 0, %s6, %s4
  // Predicated region
  $region2: #{custom_network_forward.3} parent=0 // pred_check
    _
  $region3: #{custom_network_forward.3} parent=0 // pred_check_branch
    %9 = sbr.rel (0) target = $region5
  $region4: #{custom_network_forward.3} parent=0 // pred_region
    _
  $region5: #{custom_network_forward.3} parent=0 // pred_fallthru
    _
  // Predicated region
  $region6: #{custom_network_forward.3} parent=0 // pred_check
    _
  $region7: #{custom_network_forward.3} parent=0 // pred_check_branch
    %11 = sbr.rel (0) target = $region9
  $region8: #{custom_network_forward.3} parent=0 // pred_region
    _
  $region9: #{custom_network_forward.3} parent=0 // pred_fallthru
    _
  // Predicated region
  $region10: #{custom_network_forward.3} parent=0 // pred_check
    _
  $region11: #{custom_network_forward.3} parent=0 // pred_check_branch
    %13 = sbr.rel (0) target = $region13
  $region12: #{custom_network_forward.3} parent=0 // pred_region
    _
  $region13: #{custom_network_forward.3} parent=0 // pred_fallthru
    _
  %p15 = scmp.eq.s32.totalorder 0, 0
  // Predicated region
  $region14: #{custom_network_forward.3} parent=0 // pred_check
    %p16 = pneg %p15
  $region15: #{custom_network_forward.3} parent=0 // pred_check_branch
    %18 = sbr.rel (%p16) target = $region17
  $region16: #{custom_network_forward.3} parent=0 // pred_region
    %vm19 = vcmask 130048
    %20 = vst.msk [vmem:[#allocation2] sm:$0xff] %vm19, 0.0
    %21 = vst.msk [vmem:[#allocation2 + $0x8] sm:$0xff] %vm19, 0.0
    %22 = vst.msk [vmem:[#allocation2 + $0x10] sm:$0xff] %vm19, 0.0
    %23 = vst.msk [vmem:[#allocation2 + $0x18] sm:$0xff] %vm19, 0.0
    %24 = vst.msk [vmem:[#allocation2 + $0x20] sm:$0xff] %vm19, 0.0
    %25 = vst.msk [vmem:[#allocation2 + $0x28] sm:$0xff] %vm19, 0.0
    %26 = vst.msk [vmem:[#allocation2 + $0x30] sm:$0xff] %vm19, 0.0
    %27 = vst.msk [vmem:[#allocation2 + $0x38] sm:$0xff] %vm19, 0.0
    %28 = vst.msk [vmem:[#allocation2 + $0x40] sm:$0xff] %vm19, 0.0
    %29 = vst.msk [vmem:[#allocation2 + $0x48] sm:$0xff] %vm19, 0.0
    %30 = vst.msk [vmem:[#allocation2 + $0x50] sm:$0xff] %vm19, 0.0
    %31 = vst.msk [vmem:[#allocation2 + $0x58] sm:$0xff] %vm19, 0.0
    %32 = vst.msk [vmem:[#allocation2 + $0x60] sm:$0xff] %vm19, 0.0
    %33 = vst.msk [vmem:[#allocation2 + $0x68] sm:$0xff] %vm19, 0.0
    %34 = vst.msk [vmem:[#allocation2 + $0x70] sm:$0xff] %vm19, 0.0
    %35 = vst.msk [vmem:[#allocation2 + $0x78] sm:$0xff] %vm19, 0.0
  $region17: #{custom_network_forward.3} parent=0 // pred_fallthru
    _
  %v36 = vld [vmem:[#allocation2] sm:$0xff]
  %v37 = vld [vmem:[#allocation2 + $0x8] sm:$0xff]
  %v38 = vld [vmem:[#allocation2 + $0x10] sm:$0xff]
  %v39 = vld [vmem:[#allocation2 + $0x18] sm:$0xff]
  %v40 = vld [vmem:[#allocation2 + $0x20] sm:$0xff]
  %v41 = vld [vmem:[#allocation2 + $0x28] sm:$0xff]
  %v42 = vld [vmem:[#allocation2 + $0x30] sm:$0xff]
  %v43 = vld [vmem:[#allocation2 + $0x38] sm:$0xff]
  %v44 = vld [vmem:[#allocation2 + $0x40] sm:$0xff]
  %v45 = vld [vmem:[#allocation2 + $0x48] sm:$0xff]
  %v46 = vld [vmem:[#allocation2 + $0x50] sm:$0xff]
  %v47 = vld [vmem:[#allocation2 + $0x58] sm:$0xff]
  %v48 = vld [vmem:[#allocation2 + $0x60] sm:$0xff]
  %v49 = vld [vmem:[#allocation2 + $0x68] sm:$0xff]
  %v50 = vld [vmem:[#allocation2 + $0x70] sm:$0xff]
  %v51 = vld [vmem:[#allocation2 + $0x78] sm:$0xff]
  %v52 = vld [vmem:[%s0] sm:$0xf]
  %v53 = vld [vmem:[%s0 + $0x4] sm:$0xf]
  %v54 = vld [vmem:[%s0 + $0x8] sm:$0xf]
  %v55 = vld [vmem:[%s0 + $0xc] sm:$0xf]
  %v56 = vld [vmem:[%s0 + $0x10] sm:$0xf]
  %v57 = vld [vmem:[%s0 + $0x14] sm:$0xf]
  %v58 = vld [vmem:[%s0 + $0x18] sm:$0xf]
  %v59 = vld [vmem:[%s0 + $0x1c] sm:$0xf]
  %v60 = vld [vmem:[%s0 + $0x20] sm:$0xf]
  %v61 = vld [vmem:[%s0 + $0x24] sm:$0xf]
  %v62 = vld [vmem:[%s0 + $0x28] sm:$0xf]
  %v63 = vld [vmem:[%s0 + $0x2c] sm:$0xf]
  %v64 = vld [vmem:[%s0 + $0x30] sm:$0xf]
  %v65 = vld [vmem:[%s0 + $0x34] sm:$0xf]
  %v66 = vld [vmem:[%s0 + $0x38] sm:$0xf]
  %v67 = vld [vmem:[%s0 + $0x3c] sm:$0xf]
  %v68 = vld [vmem:[%s1] sm:$0xf]
  %v69 = vld [vmem:[%s1 + $0x4] sm:$0xf]
  %v70 = vld [vmem:[%s1 + $0x8] sm:$0xf]
  %v71 = vld [vmem:[%s1 + $0xc] sm:$0xf]
  %v72 = vld [vmem:[%s1 + $0x10] sm:$0xf]
  %v73 = vld [vmem:[%s1 + $0x14] sm:$0xf]
  %v74 = vld [vmem:[%s1 + $0x18] sm:$0xf]
  %v75 = vld [vmem:[%s1 + $0x1c] sm:$0xf]
  %v76 = vld [vmem:[%s1 + $0x20] sm:$0xf]
  %v77 = vld [vmem:[%s1 + $0x24] sm:$0xf]
  %v78 = vld [vmem:[%s1 + $0x28] sm:$0xf]
  %v79 = vld [vmem:[%s1 + $0x2c] sm:$0xf]
  %v80 = vld [vmem:[%s1 + $0x30] sm:$0xf]
  %v81 = vld [vmem:[%s1 + $0x34] sm:$0xf]
  %v82 = vld [vmem:[%s1 + $0x38] sm:$0xf]
  %v83 = vld [vmem:[%s1 + $0x3c] sm:$0xf]
  %v100 = vunpack.c.l.b16 %v52
  %v101 = vunpack.c.l.b16 %v53
  %v102 = vunpack.c.l.b16 %v54
  %v103 = vunpack.c.l.b16 %v55
  %v104 = vunpack.c.l.b16 %v56
  %v105 = vunpack.c.l.b16 %v57
  %v106 = vunpack.c.l.b16 %v58
  %v107 = vunpack.c.l.b16 %v59
  %v108 = vunpack.c.l.b16 %v60
  %v109 = vunpack.c.l.b16 %v61
  %v110 = vunpack.c.l.b16 %v62
  %v111 = vunpack.c.l.b16 %v63
  %v112 = vunpack.c.l.b16 %v64
  %v113 = vunpack.c.l.b16 %v65
  %v114 = vunpack.c.l.b16 %v66
  %v115 = vunpack.c.l.b16 %v67
  %v116 = vpack.c.b16 %v101, %v100
  %v117 = vpack.c.b16 %v103, %v102
  %v118 = vpack.c.b16 %v105, %v104
  %v119 = vpack.c.b16 %v107, %v106
  %v120 = vpack.c.b16 %v109, %v108
  %v121 = vpack.c.b16 %v111, %v110
  %v122 = vpack.c.b16 %v113, %v112
  %v123 = vpack.c.b16 %v115, %v114
  %v148 = vunpack.c.l.b16 %v68
  %v149 = vunpack.c.l.b16 %v69
  %v150 = vunpack.c.l.b16 %v70
  %v151 = vunpack.c.l.b16 %v71
  %v152 = vunpack.c.l.b16 %v72
  %v153 = vunpack.c.l.b16 %v73
  %v154 = vunpack.c.l.b16 %v74
  %v155 = vunpack.c.l.b16 %v75
  %v156 = vunpack.c.l.b16 %v76
  %v157 = vunpack.c.l.b16 %v77
  %v158 = vunpack.c.l.b16 %v78
  %v159 = vunpack.c.l.b16 %v79
  %v160 = vunpack.c.l.b16 %v80
  %v161 = vunpack.c.l.b16 %v81
  %v162 = vunpack.c.l.b16 %v82
  %v163 = vunpack.c.l.b16 %v83
  %v164 = vpack.c.b16 %v149, %v148
  %v165 = vpack.c.b16 %v151, %v150
  %v166 = vpack.c.b16 %v153, %v152
  %v167 = vpack.c.b16 %v155, %v154
  %v168 = vpack.c.b16 %v157, %v156
  %v169 = vpack.c.b16 %v159, %v158
  %v170 = vpack.c.b16 %v161, %v160
  %v171 = vpack.c.b16 %v163, %v162
  %180 = vmatprep.subr.bf16.mxu0 0
  %181 = vmatpush1.bf16.msra.mxu0 %v164
  %182 = vmatprep.subr.bf16.mxu0 0
  %183 = vmatpush1.bf16.msra.mxu0 %v165
  %184 = vmatprep.subr.bf16.mxu0 0
  %185 = vmatpush1.bf16.msra.mxu0 %v166
  %186 = vmatprep.subr.bf16.mxu0 0
  %187 = vmatpush1.bf16.msra.mxu0 %v167
  %188 = vmatprep.subr.bf16.mxu0 0
  %189 = vmatpush1.bf16.msra.mxu0 %v168
  %190 = vmatprep.subr.bf16.mxu0 0
  %191 = vmatpush1.bf16.msra.mxu0 %v169
  %192 = vmatprep.subr.bf16.mxu0 0
  %193 = vmatpush1.bf16.msra.mxu0 %v170
  %194 = vmatprep.subr.bf16.mxu0 0
  %195 = vmatpush1.bf16.msra.mxu0 %v171
  %196 = vmatprep.subr.bf16.mxu0 0
  %197 = vmatpush1.bf16.msra.mxu0 0
  %198 = vmatprep.subr.bf16.mxu0 0
  %199 = vmatpush1.bf16.msra.mxu0 0
  %200 = vmatprep.subr.bf16.mxu0 0
  %201 = vmatpush1.bf16.msra.mxu0 0
  %202 = vmatprep.subr.bf16.mxu0 0
  %203 = vmatpush1.bf16.msra.mxu0 0
  %204 = vmatprep.subr.bf16.mxu0 0
  %205 = vmatpush1.bf16.msra.mxu0 0
  %206 = vmatprep.subr.bf16.mxu0 0
  %207 = vmatpush1.bf16.msra.mxu0 0
  %208 = vmatprep.subr.bf16.mxu0 0
  %209 = vmatpush1.bf16.msra.mxu0 0
  %210 = vmatprep.subr.bf16.mxu0 0
  %211 = vmatpush1.bf16.msra.mxu0 0
  %212 = vmatprep.mubr.bf16.mxu0 0
  %213 = vmatmul.mubr.bf16.gmra.mrb[0].mxu0 %v116
  %v214 = vpop.f32.mrb[0].mxu0
  %v215 = vadd.f32 0.0, %v214
  %v216 = vpop.f32.mrb[0].mxu0
  %v217 = vpop.f32.mrb[0].mxu0
  %v218 = vadd.f32 0.0, %v217
  %v219 = vpop.f32.mrb[0].mxu0
  %220 = vmatprep.mubr.bf16.mxu0 0
  %221 = vmatmul.mubr.bf16.gmra.mrb[0].mxu0 %v117
  %v222 = vpop.f32.mrb[0].mxu0
  %v223 = vadd.f32 0.0, %v222
  %v224 = vpop.f32.mrb[0].mxu0
  %v225 = vpop.f32.mrb[0].mxu0
  %v226 = vadd.f32 0.0, %v225
  %v227 = vpop.f32.mrb[0].mxu0
  %228 = vmatprep.mubr.bf16.mxu0 0
  %229 = vmatmul.mubr.bf16.gmra.mrb[0].mxu0 %v118
  %v230 = vpop.f32.mrb[0].mxu0
  %v231 = vadd.f32 0.0, %v230
  %v232 = vpop.f32.mrb[0].mxu0
  %v233 = vpop.f32.mrb[0].mxu0
  %v234 = vadd.f32 0.0, %v233
  %v235 = vpop.f32.mrb[0].mxu0
  %236 = vmatprep.mubr.bf16.mxu0 0
  %237 = vmatmul.mubr.bf16.gmra.mrb[0].mxu0 %v119
  %v238 = vpop.f32.mrb[0].mxu0
  %v239 = vadd.f32 0.0, %v238
  %v240 = vpop.f32.mrb[0].mxu0
  %v241 = vpop.f32.mrb[0].mxu0
  %v242 = vadd.f32 0.0, %v241
  %v243 = vpop.f32.mrb[0].mxu0
  %244 = vmatprep.mubr.bf16.mxu0 0
  %245 = vmatmul.mubr.bf16.gmra.mrb[0].mxu0 %v120
  %v246 = vpop.f32.mrb[0].mxu0
  %v247 = vadd.f32 0.0, %v246
  %v248 = vpop.f32.mrb[0].mxu0
  %v249 = vpop.f32.mrb[0].mxu0
  %v250 = vadd.f32 0.0, %v249
  %v251 = vpop.f32.mrb[0].mxu0
  %252 = vmatprep.mubr.bf16.mxu0 0
  %253 = vmatmul.mubr.bf16.gmra.mrb[0].mxu0 %v121
  %v254 = vpop.f32.mrb[0].mxu0
  %v255 = vadd.f32 0.0, %v254
  %v256 = vpop.f32.mrb[0].mxu0
  %v257 = vpop.f32.mrb[0].mxu0
  %v258 = vadd.f32 0.0, %v257
  %v259 = vpop.f32.mrb[0].mxu0
  %260 = vmatprep.mubr.bf16.mxu0 0
  %261 = vmatmul.mubr.bf16.gmra.mrb[0].mxu0 %v122
  %v262 = vpop.f32.mrb[0].mxu0
  %v263 = vadd.f32 0.0, %v262
  %v264 = vpop.f32.mrb[0].mxu0
  %v265 = vpop.f32.mrb[0].mxu0
  %v266 = vadd.f32 0.0, %v265
  %v267 = vpop.f32.mrb[0].mxu0
  %268 = vmatprep.mubr.bf16.mxu0 0
  %269 = vmatmul.mubr.bf16.gmra.mrb[0].mxu0 %v123
  %v270 = vpop.f32.mrb[0].mxu0
  %v271 = vadd.f32 0.0, %v270
  %v272 = vpop.f32.mrb[0].mxu0
  %v273 = vpop.f32.mrb[0].mxu0
  %v274 = vadd.f32 0.0, %v273
  %v275 = vpop.f32.mrb[0].mxu0
  %276 = vdwg.mxu0
  %v277 = vadd.f32 %v36, %v215
  %v278 = vadd.f32 %v37, %v218
  %v279 = vadd.f32 %v38, %v223
  %v280 = vadd.f32 %v39, %v226
  %v281 = vadd.f32 %v40, %v231
  %v282 = vadd.f32 %v41, %v234
  %v283 = vadd.f32 %v42, %v239
  %v284 = vadd.f32 %v43, %v242
  %v285 = vadd.f32 %v44, %v247
  %v286 = vadd.f32 %v45, %v250
  %v287 = vadd.f32 %v46, %v255
  %v288 = vadd.f32 %v47, %v258
  %v289 = vadd.f32 %v48, %v263
  %v290 = vadd.f32 %v49, %v266
  %v291 = vadd.f32 %v50, %v271
  %v292 = vadd.f32 %v51, %v274
  %vm293 = vcmask 130048
  %294 = vst.msk [vmem:[#allocation2] sm:$0xff] %vm293, %v277
  %295 = vst.msk [vmem:[#allocation2 + $0x8] sm:$0xff] %vm293, %v278
  %296 = vst.msk [vmem:[#allocation2 + $0x10] sm:$0xff] %vm293, %v279
  %297 = vst.msk [vmem:[#allocation2 + $0x18] sm:$0xff] %vm293, %v280
  %298 = vst.msk [vmem:[#allocation2 + $0x20] sm:$0xff] %vm293, %v281
  %299 = vst.msk [vmem:[#allocation2 + $0x28] sm:$0xff] %vm293, %v282
  %300 = vst.msk [vmem:[#allocation2 + $0x30] sm:$0xff] %vm293, %v283
  %301 = vst.msk [vmem:[#allocation2 + $0x38] sm:$0xff] %vm293, %v284
  %302 = vst.msk [vmem:[#allocation2 + $0x40] sm:$0xff] %vm293, %v285
  %303 = vst.msk [vmem:[#allocation2 + $0x48] sm:$0xff] %vm293, %v286
  %304 = vst.msk [vmem:[#allocation2 + $0x50] sm:$0xff] %vm293, %v287
  %305 = vst.msk [vmem:[#allocation2 + $0x58] sm:$0xff] %vm293, %v288
  %306 = vst.msk [vmem:[#allocation2 + $0x60] sm:$0xff] %vm293, %v289
  %307 = vst.msk [vmem:[#allocation2 + $0x68] sm:$0xff] %vm293, %v290
  %308 = vst.msk [vmem:[#allocation2 + $0x70] sm:$0xff] %vm293, %v291
  %309 = vst.msk [vmem:[#allocation2 + $0x78] sm:$0xff] %vm293, %v292
  // Predicated region
  $region18: #{custom_network_forward.3} parent=0 // pred_check
    %p310 = pneg %p15
  $region19: #{custom_network_forward.3} parent=0 // pred_check_branch
    %312 = sbr.rel (%p310) target = $region21
  $region20: #{custom_network_forward.3} parent=0 // pred_region
    %v313 = vld [vmem:[#allocation2] sm:$0xff]
    %v314 = vld [vmem:[#allocation2 + $0x8] sm:$0xff]
    %v315 = vld [vmem:[#allocation2 + $0x10] sm:$0xff]
    %v316 = vld [vmem:[#allocation2 + $0x18] sm:$0xff]
    %v317 = vld [vmem:[#allocation2 + $0x20] sm:$0xff]
    %v318 = vld [vmem:[#allocation2 + $0x28] sm:$0xff]
    %v319 = vld [vmem:[#allocation2 + $0x30] sm:$0xff]
    %v320 = vld [vmem:[#allocation2 + $0x38] sm:$0xff]
    %v321 = vld [vmem:[#allocation2 + $0x40] sm:$0xff]
    %v322 = vld [vmem:[#allocation2 + $0x48] sm:$0xff]
    %v323 = vld [vmem:[#allocation2 + $0x50] sm:$0xff]
    %v324 = vld [vmem:[#allocation2 + $0x58] sm:$0xff]
    %v325 = vld [vmem:[#allocation2 + $0x60] sm:$0xff]
    %v326 = vld [vmem:[#allocation2 + $0x68] sm:$0xff]
    %v327 = vld [vmem:[#allocation2 + $0x70] sm:$0xff]
    %v328 = vld [vmem:[#allocation2 + $0x78] sm:$0xff]
    %v329 = vld [vmem:[%s2] sm:$0x1]
    %v331 = vlaneseq
    %v332 = vshrl.u32 %v331, 7
    %v333 = vsub.s32 0, %v332
    %v334 = vrot.slane %v329, %v333
    %v336 = vadd.f32 %v313, %v334
    %v337 = vadd.f32 %v314, %v334
    %v338 = vadd.f32 %v315, %v334
    %v339 = vadd.f32 %v316, %v334
    %v340 = vadd.f32 %v317, %v334
    %v341 = vadd.f32 %v318, %v334
    %v342 = vadd.f32 %v319, %v334
    %v343 = vadd.f32 %v320, %v334
    %v344 = vadd.f32 %v321, %v334
    %v345 = vadd.f32 %v322, %v334
    %v346 = vadd.f32 %v323, %v334
    %v347 = vadd.f32 %v324, %v334
    %v348 = vadd.f32 %v325, %v334
    %v349 = vadd.f32 %v326, %v334
    %v350 = vadd.f32 %v327, %v334
    %v351 = vadd.f32 %v328, %v334
    %v352 = vmax.f32 %v336, 0.0
    %v353 = vmax.f32 %v337, 0.0
    %v354 = vmax.f32 %v338, 0.0
    %v355 = vmax.f32 %v339, 0.0
    %v356 = vmax.f32 %v340, 0.0
    %v357 = vmax.f32 %v341, 0.0
    %v358 = vmax.f32 %v342, 0.0
    %v359 = vmax.f32 %v343, 0.0
    %v360 = vmax.f32 %v344, 0.0
    %v361 = vmax.f32 %v345, 0.0
    %v362 = vmax.f32 %v346, 0.0
    %v363 = vmax.f32 %v347, 0.0
    %v364 = vmax.f32 %v348, 0.0
    %v365 = vmax.f32 %v349, 0.0
    %v366 = vmax.f32 %v350, 0.0
    %v367 = vmax.f32 %v351, 0.0
    %368 = vst.msk [vmem:[%s3] sm:$0xff] %vm293, %v352
    %369 = vst.msk [vmem:[%s3 + $0x8] sm:$0xff] %vm293, %v353
    %370 = vst.msk [vmem:[%s3 + $0x10] sm:$0xff] %vm293, %v354
    %371 = vst.msk [vmem:[%s3 + $0x18] sm:$0xff] %vm293, %v355
    %372 = vst.msk [vmem:[%s3 + $0x20] sm:$0xff] %vm293, %v356
    %373 = vst.msk [vmem:[%s3 + $0x28] sm:$0xff] %vm293, %v357
    %374 = vst.msk [vmem:[%s3 + $0x30] sm:$0xff] %vm293, %v358
    %375 = vst.msk [vmem:[%s3 + $0x38] sm:$0xff] %vm293, %v359
    %376 = vst.msk [vmem:[%s3 + $0x40] sm:$0xff] %vm293, %v360
    %377 = vst.msk [vmem:[%s3 + $0x48] sm:$0xff] %vm293, %v361
    %378 = vst.msk [vmem:[%s3 + $0x50] sm:$0xff] %vm293, %v362
    %379 = vst.msk [vmem:[%s3 + $0x58] sm:$0xff] %vm293, %v363
    %380 = vst.msk [vmem:[%s3 + $0x60] sm:$0xff] %vm293, %v364
    %381 = vst.msk [vmem:[%s3 + $0x68] sm:$0xff] %vm293, %v365
    %382 = vst.msk [vmem:[%s3 + $0x70] sm:$0xff] %vm293, %v366
    %383 = vst.msk [vmem:[%s3 + $0x78] sm:$0xff] %vm293, %v367
  $region21: #{custom_network_forward.3} parent=0 // pred_fallthru
    _
  // Predicated region
  $region22: #{custom_network_forward.3} parent=0 // pred_check
    _
  $region23: #{custom_network_forward.3} parent=0 // pred_check_branch
    %385 = sbr.rel (0) target = $region25
  $region24: #{custom_network_forward.3} parent=0 // pred_region
    _
  $region25: #{custom_network_forward.3} parent=0 // pred_fallthru
    _
  // Predicated region
  $region26: #{custom_network_forward.3} parent=0 // pred_check
    _
  $region27: #{custom_network_forward.3} parent=0 // pred_check_branch
    %387 = sbr.rel (0) target = $region29
  $region28: #{custom_network_forward.3} parent=0 // pred_region
    _
  $region29: #{custom_network_forward.3} parent=0 // pred_fallthru
    _

// kernel: custom_network_forward.4
$region0: #{custom_network_forward.4}
  #allocation0 [shape = 'u32[]', space=smem, size = 0x4, offset = 0x4, fixed_abs, tag = 'smem constant byte address 0x4 - core index']
  #allocation1 [shape = 'u32[144,128]{1,0:T(1,128)}', space=vmem, size = 0x12000, scoped, tag = 'internal scratch']
  #allocation2 [shape = 'f32[32,32]{1,0:T(8,128)}', space=vmem, size = 0x4000, scoped, tag = 'scratch operand']
  %s0 = inlined_call_operand.vmem [shape: bf16[32,256], index: 0, kind: input, shape index: {}]
  %s1 = inlined_call_operand.vmem [shape: bf16[256,32], index: 1, kind: input, shape index: {}]
  %s2 = inlined_call_operand.vmem [shape: f32[1,32], index: 2, kind: input, shape index: {}]
  %s3 = inlined_call_operand.vmem [shape: f32[32,32], index: 3, kind: output, shape index: {}]
  %s4 = sld [smem:[#allocation0]]
  $region30: #{custom_network_forward.4} parent=0
    _
  %s6 = ssub.s32 1, %s4
  %s7 = scalar_select 0, %s6, %s4
  // Predicated region
  $region2: #{custom_network_forward.4} parent=0 // pred_check
    _
  $region3: #{custom_network_forward.4} parent=0 // pred_check_branch
    %9 = sbr.rel (0) target = $region5
  $region4: #{custom_network_forward.4} parent=0 // pred_region
    _
  $region5: #{custom_network_forward.4} parent=0 // pred_fallthru
    _
  // Predicated region
  $region6: #{custom_network_forward.4} parent=0 // pred_check
    _
  $region7: #{custom_network_forward.4} parent=0 // pred_check_branch
    %11 = sbr.rel (0) target = $region9
  $region8: #{custom_network_forward.4} parent=0 // pred_region
    _
  $region9: #{custom_network_forward.4} parent=0 // pred_fallthru
    _
  // Predicated region
  $region10: #{custom_network_forward.4} parent=0 // pred_check
    _
  $region11: #{custom_network_forward.4} parent=0 // pred_check_branch
    %13 = sbr.rel (0) target = $region13
  $region12: #{custom_network_forward.4} parent=0 // pred_region
    _
  $region13: #{custom_network_forward.4} parent=0 // pred_fallthru
    _
  %p15 = scmp.eq.s32.totalorder 0, 0
  // Predicated region
  $region14: #{custom_network_forward.4} parent=0 // pred_check
    %p16 = pneg %p15
  $region15: #{custom_network_forward.4} parent=0 // pred_check_branch
    %18 = sbr.rel (%p16) target = $region17
  $region16: #{custom_network_forward.4} parent=0 // pred_region
    %vm19 = vcmask 261120
    %20 = vst.msk [vmem:[#allocation2] sm:$0xff] %vm19, 0.0
    %21 = vst.msk [vmem:[#allocation2 + $0x8] sm:$0xff] %vm19, 0.0
    %22 = vst.msk [vmem:[#allocation2 + $0x10] sm:$0xff] %vm19, 0.0
    %23 = vst.msk [vmem:[#allocation2 + $0x18] sm:$0xff] %vm19, 0.0
  $region17: #{custom_network_forward.4} parent=0 // pred_fallthru
    _
  %v24 = vld [vmem:[#allocation2] sm:$0xff]
  %v25 = vld [vmem:[#allocation2 + $0x8] sm:$0xff]
  %v26 = vld [vmem:[#allocation2 + $0x10] sm:$0xff]
  %v27 = vld [vmem:[#allocation2 + $0x18] sm:$0xff]
  %v28 = vld [vmem:[%s0] sm:$0xff]
  %v29 = vld [vmem:[%s0 + $0x8] sm:$0xff]
  %v30 = vld [vmem:[%s0 + $0x10] sm:$0xff]
  %v31 = vld [vmem:[%s0 + $0x18] sm:$0xff]
  %v32 = vld [vmem:[%s1] sm:$0xf]
  %v33 = vld [vmem:[%s1 + $0x4] sm:$0xf]
  %v34 = vld [vmem:[%s1 + $0x8] sm:$0xf]
  %v35 = vld [vmem:[%s1 + $0xc] sm:$0xf]
  %v36 = vld [vmem:[%s1 + $0x10] sm:$0xf]
  %v37 = vld [vmem:[%s1 + $0x14] sm:$0xf]
  %v38 = vld [vmem:[%s1 + $0x18] sm:$0xf]
  %v39 = vld [vmem:[%s1 + $0x1c] sm:$0xf]
  %v40 = vld [vmem:[%s1 + $0x20] sm:$0xf]
  %v41 = vld [vmem:[%s1 + $0x24] sm:$0xf]
  %v42 = vld [vmem:[%s1 + $0x28] sm:$0xf]
  %v43 = vld [vmem:[%s1 + $0x2c] sm:$0xf]
  %v44 = vld [vmem:[%s1 + $0x30] sm:$0xf]
  %v45 = vld [vmem:[%s1 + $0x34] sm:$0xf]
  %v46 = vld [vmem:[%s1 + $0x38] sm:$0xf]
  %v47 = vld [vmem:[%s1 + $0x3c] sm:$0xf]
  %v48 = vld [vmem:[%s1 + $0x40] sm:$0xf]
  %v49 = vld [vmem:[%s1 + $0x44] sm:$0xf]
  %v50 = vld [vmem:[%s1 + $0x48] sm:$0xf]
  %v51 = vld [vmem:[%s1 + $0x4c] sm:$0xf]
  %v52 = vld [vmem:[%s1 + $0x50] sm:$0xf]
  %v53 = vld [vmem:[%s1 + $0x54] sm:$0xf]
  %v54 = vld [vmem:[%s1 + $0x58] sm:$0xf]
  %v55 = vld [vmem:[%s1 + $0x5c] sm:$0xf]
  %v56 = vld [vmem:[%s1 + $0x60] sm:$0xf]
  %v57 = vld [vmem:[%s1 + $0x64] sm:$0xf]
  %v58 = vld [vmem:[%s1 + $0x68] sm:$0xf]
  %v59 = vld [vmem:[%s1 + $0x6c] sm:$0xf]
  %v60 = vld [vmem:[%s1 + $0x70] sm:$0xf]
  %v61 = vld [vmem:[%s1 + $0x74] sm:$0xf]
  %v62 = vld [vmem:[%s1 + $0x78] sm:$0xf]
  %v63 = vld [vmem:[%s1 + $0x7c] sm:$0xf]
  %v68 = vunpack.c.l.b16 %v28
  %v69 = vunpack.c.h.b16 %v28
  %v70 = vunpack.c.l.b16 %v29
  %v71 = vunpack.c.h.b16 %v29
  %v72 = vunpack.c.l.b16 %v30
  %v73 = vunpack.c.h.b16 %v30
  %v74 = vunpack.c.l.b16 %v31
  %v75 = vunpack.c.h.b16 %v31
  %v76 = vpack.c.b16 %v70, %v68
  %v77 = vpack.c.b16 %v71, %v69
  %v78 = vpack.c.b16 %v74, %v72
  %v79 = vpack.c.b16 %v75, %v73
  %v116 = vunpack.c.l.b16 %v32
  %v117 = vunpack.c.l.b16 %v33
  %v118 = vunpack.c.l.b16 %v34
  %v119 = vunpack.c.l.b16 %v35
  %v120 = vunpack.c.l.b16 %v36
  %v121 = vunpack.c.l.b16 %v37
  %v122 = vunpack.c.l.b16 %v38
  %v123 = vunpack.c.l.b16 %v39
  %v124 = vunpack.c.l.b16 %v40
  %v125 = vunpack.c.l.b16 %v41
  %v126 = vunpack.c.l.b16 %v42
  %v127 = vunpack.c.l.b16 %v43
  %v128 = vunpack.c.l.b16 %v44
  %v129 = vunpack.c.l.b16 %v45
  %v130 = vunpack.c.l.b16 %v46
  %v131 = vunpack.c.l.b16 %v47
  %v132 = vunpack.c.l.b16 %v48
  %v133 = vunpack.c.l.b16 %v49
  %v134 = vunpack.c.l.b16 %v50
  %v135 = vunpack.c.l.b16 %v51
  %v136 = vunpack.c.l.b16 %v52
  %v137 = vunpack.c.l.b16 %v53
  %v138 = vunpack.c.l.b16 %v54
  %v139 = vunpack.c.l.b16 %v55
  %v140 = vunpack.c.l.b16 %v56
  %v141 = vunpack.c.l.b16 %v57
  %v142 = vunpack.c.l.b16 %v58
  %v143 = vunpack.c.l.b16 %v59
  %v144 = vunpack.c.l.b16 %v60
  %v145 = vunpack.c.l.b16 %v61
  %v146 = vunpack.c.l.b16 %v62
  %v147 = vunpack.c.l.b16 %v63
  %v148 = vpack.c.b16 %v117, %v116
  %v149 = vpack.c.b16 %v119, %v118
  %v150 = vpack.c.b16 %v121, %v120
  %v151 = vpack.c.b16 %v123, %v122
  %v152 = vpack.c.b16 %v125, %v124
  %v153 = vpack.c.b16 %v127, %v126
  %v154 = vpack.c.b16 %v129, %v128
  %v155 = vpack.c.b16 %v131, %v130
  %v156 = vpack.c.b16 %v133, %v132
  %v157 = vpack.c.b16 %v135, %v134
  %v158 = vpack.c.b16 %v137, %v136
  %v159 = vpack.c.b16 %v139, %v138
  %v160 = vpack.c.b16 %v141, %v140
  %v161 = vpack.c.b16 %v143, %v142
  %v162 = vpack.c.b16 %v145, %v144
  %v163 = vpack.c.b16 %v147, %v146
  %180 = vmatprep.subr.bf16.mxu0 0
  %181 = vmatpush1.bf16.msra.mxu0 %v148
  %182 = vmatprep.subr.bf16.mxu0 0
  %183 = vmatpush1.bf16.msra.mxu0 %v149
  %184 = vmatprep.subr.bf16.mxu0 0
  %185 = vmatpush1.bf16.msra.mxu0 %v150
  %186 = vmatprep.subr.bf16.mxu0 0
  %187 = vmatpush1.bf16.msra.mxu0 %v151
  %188 = vmatprep.subr.bf16.mxu0 0
  %189 = vmatpush1.bf16.msra.mxu0 %v152
  %190 = vmatprep.subr.bf16.mxu0 0
  %191 = vmatpush1.bf16.msra.mxu0 %v153
  %192 = vmatprep.subr.bf16.mxu0 0
  %193 = vmatpush1.bf16.msra.mxu0 %v154
  %194 = vmatprep.subr.bf16.mxu0 0
  %195 = vmatpush1.bf16.msra.mxu0 %v155
  %196 = vmatprep.subr.bf16.mxu0 0
  %197 = vmatpush1.bf16.msra.mxu0 %v156
  %198 = vmatprep.subr.bf16.mxu0 0
  %199 = vmatpush1.bf16.msra.mxu0 %v157
  %200 = vmatprep.subr.bf16.mxu0 0
  %201 = vmatpush1.bf16.msra.mxu0 %v158
  %202 = vmatprep.subr.bf16.mxu0 0
  %203 = vmatpush1.bf16.msra.mxu0 %v159
  %204 = vmatprep.subr.bf16.mxu0 0
  %205 = vmatpush1.bf16.msra.mxu0 %v160
  %206 = vmatprep.subr.bf16.mxu0 0
  %207 = vmatpush1.bf16.msra.mxu0 %v161
  %208 = vmatprep.subr.bf16.mxu0 0
  %209 = vmatpush1.bf16.msra.mxu0 %v162
  %210 = vmatprep.subr.bf16.mxu0 0
  %211 = vmatpush1.bf16.msra.mxu0 %v163
  %212 = vmatprep.mubr.bf16.mxu0 %v77
  %213 = vmatmul.mubr.bf16.gmra.mrb[0].mxu0 %v76
  %v214 = vpop.f32.mrb[0].mxu0
  %v215 = vadd.f32 0.0, %v214
  %v216 = vpop.f32.mrb[0].mxu0
  %v217 = vpop.f32.mrb[0].mxu0
  %v218 = vadd.f32 0.0, %v217
  %v219 = vpop.f32.mrb[0].mxu0
  %220 = vmatprep.mubr.bf16.mxu0 %v79
  %221 = vmatmul.mubr.bf16.gmra.mrb[0].mxu0 %v78
  %v222 = vpop.f32.mrb[0].mxu0
  %v223 = vadd.f32 0.0, %v222
  %v224 = vpop.f32.mrb[0].mxu0
  %v225 = vpop.f32.mrb[0].mxu0
  %v226 = vadd.f32 0.0, %v225
  %v227 = vpop.f32.mrb[0].mxu0
  %228 = vdwg.mxu0
  %v229 = vadd.f32 %v24, %v215
  %v230 = vadd.f32 %v25, %v218
  %v231 = vadd.f32 %v26, %v223
  %v232 = vadd.f32 %v27, %v226
  %vm233 = vcmask 261120
  %234 = vst.msk [vmem:[#allocation2] sm:$0xff] %vm233, %v229
  %235 = vst.msk [vmem:[#allocation2 + $0x8] sm:$0xff] %vm233, %v230
  %236 = vst.msk [vmem:[#allocation2 + $0x10] sm:$0xff] %vm233, %v231
  %237 = vst.msk [vmem:[#allocation2 + $0x18] sm:$0xff] %vm233, %v232
  // Predicated region
  $region18: #{custom_network_forward.4} parent=0 // pred_check
    %p238 = pneg %p15
  $region19: #{custom_network_forward.4} parent=0 // pred_check_branch
    %240 = sbr.rel (%p238) target = $region21
  $region20: #{custom_network_forward.4} parent=0 // pred_region
    %v241 = vld [vmem:[#allocation2] sm:$0xff]
    %v242 = vld [vmem:[#allocation2 + $0x8] sm:$0xff]
    %v243 = vld [vmem:[#allocation2 + $0x10] sm:$0xff]
    %v244 = vld [vmem:[#allocation2 + $0x18] sm:$0xff]
    %v245 = vld [vmem:[%s2] sm:$0x1]
    %v247 = vlaneseq
    %v248 = vshrl.u32 %v247, 7
    %v249 = vsub.s32 0, %v248
    %v250 = vrot.slane %v245, %v249
    %v252 = vadd.f32 %v241, %v250
    %v253 = vadd.f32 %v242, %v250
    %v254 = vadd.f32 %v243, %v250
    %v255 = vadd.f32 %v244, %v250
    %v256 = vmax.f32 %v252, 0.0
    %v257 = vmax.f32 %v253, 0.0
    %v258 = vmax.f32 %v254, 0.0
    %v259 = vmax.f32 %v255, 0.0
    %260 = vst.msk [vmem:[%s3] sm:$0xff] %vm233, %v256
    %261 = vst.msk [vmem:[%s3 + $0x8] sm:$0xff] %vm233, %v257
    %262 = vst.msk [vmem:[%s3 + $0x10] sm:$0xff] %vm233, %v258
    %263 = vst.msk [vmem:[%s3 + $0x18] sm:$0xff] %vm233, %v259
  $region21: #{custom_network_forward.4} parent=0 // pred_fallthru
    _
  // Predicated region
  $region22: #{custom_network_forward.4} parent=0 // pred_check
    _
  $region23: #{custom_network_forward.4} parent=0 // pred_check_branch
    %265 = sbr.rel (0) target = $region25
  $region24: #{custom_network_forward.4} parent=0 // pred_region
    _
  $region25: #{custom_network_forward.4} parent=0 // pred_fallthru
    _
  // Predicated region
  $region26: #{custom_network_forward.4} parent=0 // pred_check
    _
  $region27: #{custom_network_forward.4} parent=0 // pred_check_branch
    %267 = sbr.rel (0) target = $region29
  $region28: #{custom_network_forward.4} parent=0 // pred_region
    _
  $region29: #{custom_network_forward.4} parent=0 // pred_fallthru
    _

// kernel: custom_network_forward.5
$region0: #{custom_network_forward.5}
  #allocation0 [shape = 'u32[]', space=smem, size = 0x4, offset = 0x4, fixed_abs, tag = 'smem constant byte address 0x4 - core index']
  #allocation1 [shape = 'u32[144,128]{1,0:T(1,128)}', space=vmem, size = 0x12000, scoped, tag = 'internal scratch']
  %s0 = inlined_call_operand.vmem [shape: bf16[8,512], index: 0, kind: input, shape index: {}]
  %s1 = inlined_call_operand.vmem [shape: bf16[512,1024], index: 1, kind: input, shape index: {}]
  %s2 = inlined_call_operand.vmem [shape: f32[1,1024], index: 2, kind: input, shape index: {}]
  %s3 = inlined_call_operand.vmem [shape: bf16[1024,512], index: 3, kind: input, shape index: {}]
  %s4 = inlined_call_operand.vmem [shape: f32[1,512], index: 4, kind: input, shape index: {}]
  %s5 = inlined_call_operand.vmem [shape: bf16[512,128], index: 5, kind: input, shape index: {}]
  %s6 = inlined_call_operand.vmem [shape: f32[1,128], index: 6, kind: input, shape index: {}]
  %s7 = inlined_call_operand.vmem [shape: f32[8,128], index: 7, kind: output, shape index: {}]
  %s8 = sld [smem:[#allocation0]]
  $region38: #{custom_network_forward.5} parent=0
    _
  %s10 = ssub.s32 1, %s8
  %s11 = scalar_select 0, %s10, %s8
  // Predicated region
  $region2: #{custom_network_forward.5} parent=0 // pred_check
    _
  $region3: #{custom_network_forward.5} parent=0 // pred_check_branch
    %13 = sbr.rel (0) target = $region5
  $region4: #{custom_network_forward.5} parent=0 // pred_region
    _
  $region5: #{custom_network_forward.5} parent=0 // pred_fallthru
    _
  // Predicated region
  $region6: #{custom_network_forward.5} parent=0 // pred_check
    _
  $region7: #{custom_network_forward.5} parent=0 // pred_check_branch
    %15 = sbr.rel (0) target = $region9
  $region8: #{custom_network_forward.5} parent=0 // pred_region
    _
  $region9: #{custom_network_forward.5} parent=0 // pred_fallthru
    _
  // Predicated region
  $region10: #{custom_network_forward.5} parent=0 // pred_check
    _
  $region11: #{custom_network_forward.5} parent=0 // pred_check_branch
    %17 = sbr.rel (0) target = $region13
  $region12: #{custom_network_forward.5} parent=0 // pred_region
    _
  $region13: #{custom_network_forward.5} parent=0 // pred_fallthru
    _
  // Predicated region
  $region14: #{custom_network_forward.5} parent=0 // pred_check
    _
  $region15: #{custom_network_forward.5} parent=0 // pred_check_branch
    %19 = sbr.rel (0) target = $region17
  $region16: #{custom_network_forward.5} parent=0 // pred_region
    _
  $region17: #{custom_network_forward.5} parent=0 // pred_fallthru
    _
  // Predicated region
  $region18: #{custom_network_forward.5} parent=0 // pred_check
    _
  $region19: #{custom_network_forward.5} parent=0 // pred_check_branch
    %21 = sbr.rel (0) target = $region21
  $region20: #{custom_network_forward.5} parent=0 // pred_region
    _
  $region21: #{custom_network_forward.5} parent=0 // pred_fallthru
    _
  // Predicated region
  $region22: #{custom_network_forward.5} parent=0 // pred_check
    _
  $region23: #{custom_network_forward.5} parent=0 // pred_check_branch
    %23 = sbr.rel (0) target = $region25
  $region24: #{custom_network_forward.5} parent=0 // pred_region
    _
  $region25: #{custom_network_forward.5} parent=0 // pred_fallthru
    _
  // Predicated region
  $region26: #{custom_network_forward.5} parent=0 // pred_check
    _
  $region27: #{custom_network_forward.5} parent=0 // pred_check_branch
    %25 = sbr.rel (0) target = $region29
  $region28: #{custom_network_forward.5} parent=0 // pred_region
    _
  $region29: #{custom_network_forward.5} parent=0 // pred_fallthru
    _
  %v27 = vld [vmem:[%s0] sm:$0xff]
  %v28 = vld [vmem:[%s0 + $0x8] sm:$0xff]
  %v29 = vld [vmem:[%s1] sm:$0xff]
  %v30 = vld [vmem:[%s1 + $0x8] sm:$0xff]
  %v31 = vld [vmem:[%s1 + $0x10] sm:$0xff]
  %v32 = vld [vmem:[%s1 + $0x18] sm:$0xff]
  %v33 = vld [vmem:[%s1 + $0x20] sm:$0xff]
  %v34 = vld [vmem:[%s1 + $0x28] sm:$0xff]
  %v35 = vld [vmem:[%s1 + $0x30] sm:$0xff]
  %v36 = vld [vmem:[%s1 + $0x38] sm:$0xff]
  %v37 = vld [vmem:[%s1 + $0x40] sm:$0xff]
  %v38 = vld [vmem:[%s1 + $0x48] sm:$0xff]
  %v39 = vld [vmem:[%s1 + $0x50] sm:$0xff]
  %v40 = vld [vmem:[%s1 + $0x58] sm:$0xff]
  %v41 = vld [vmem:[%s1 + $0x60] sm:$0xff]
  %v42 = vld [vmem:[%s1 + $0x68] sm:$0xff]
  %v43 = vld [vmem:[%s1 + $0x70] sm:$0xff]
  %v44 = vld [vmem:[%s1 + $0x78] sm:$0xff]
  %v45 = vld [vmem:[%s1 + $0x80] sm:$0xff]
  %v46 = vld [vmem:[%s1 + $0x88] sm:$0xff]
  %v47 = vld [vmem:[%s1 + $0x90] sm:$0xff]
  %v48 = vld [vmem:[%s1 + $0x98] sm:$0xff]
  %v49 = vld [vmem:[%s1 + $0xa0] sm:$0xff]
  %v50 = vld [vmem:[%s1 + $0xa8] sm:$0xff]
  %v51 = vld [vmem:[%s1 + $0xb0] sm:$0xff]
  %v52 = vld [vmem:[%s1 + $0xb8] sm:$0xff]
  %v53 = vld [vmem:[%s1 + $0xc0] sm:$0xff]
  %v54 = vld [vmem:[%s1 + $0xc8] sm:$0xff]
  %v55 = vld [vmem:[%s1 + $0xd0] sm:$0xff]
  %v56 = vld [vmem:[%s1 + $0xd8] sm:$0xff]
  %v57 = vld [vmem:[%s1 + $0xe0] sm:$0xff]
  %v58 = vld [vmem:[%s1 + $0xe8] sm:$0xff]
  %v59 = vld [vmem:[%s1 + $0xf0] sm:$0xff]
  %v60 = vld [vmem:[%s1 + $0xf8] sm:$0xff]
  %v61 = vld [vmem:[%s1 + $0x100] sm:$0xff]
  %v62 = vld [vmem:[%s1 + $0x108] sm:$0xff]
  %v63 = vld [vmem:[%s1 + $0x110] sm:$0xff]
  %v64 = vld [vmem:[%s1 + $0x118] sm:$0xff]
  %v65 = vld [vmem:[%s1 + $0x120] sm:$0xff]
  %v66 = vld [vmem:[%s1 + $0x128] sm:$0xff]
  %v67 = vld [vmem:[%s1 + $0x130] sm:$0xff]
  %v68 = vld [vmem:[%s1 + $0x138] sm:$0xff]
  %v69 = vld [vmem:[%s1 + $0x140] sm:$0xff]
  %v70 = vld [vmem:[%s1 + $0x148] sm:$0xff]
  %v71 = vld [vmem:[%s1 + $0x150] sm:$0xff]
  %v72 = vld [vmem:[%s1 + $0x158] sm:$0xff]
  %v73 = vld [vmem:[%s1 + $0x160] sm:$0xff]
  %v74 = vld [vmem:[%s1 + $0x168] sm:$0xff]
  %v75 = vld [vmem:[%s1 + $0x170] sm:$0xff]
  %v76 = vld [vmem:[%s1 + $0x178] sm:$0xff]
  %v77 = vld [vmem:[%s1 + $0x180] sm:$0xff]
  %v78 = vld [vmem:[%s1 + $0x188] sm:$0xff]
  %v79 = vld [vmem:[%s1 + $0x190] sm:$0xff]
  %v80 = vld [vmem:[%s1 + $0x198] sm:$0xff]
  %v81 = vld [vmem:[%s1 + $0x1a0] sm:$0xff]
  %v82 = vld [vmem:[%s1 + $0x1a8] sm:$0xff]
  %v83 = vld [vmem:[%s1 + $0x1b0] sm:$0xff]
  %v84 = vld [vmem:[%s1 + $0x1b8] sm:$0xff]
  %v85 = vld [vmem:[%s1 + $0x1c0] sm:$0xff]
  %v86 = vld [vmem:[%s1 + $0x1c8] sm:$0xff]
  %v87 = vld [vmem:[%s1 + $0x1d0] sm:$0xff]
  %v88 = vld [vmem:[%s1 + $0x1d8] sm:$0xff]
  %v89 = vld [vmem:[%s1 + $0x1e0] sm:$0xff]
  %v90 = vld [vmem:[%s1 + $0x1e8] sm:$0xff]
  %v91 = vld [vmem:[%s1 + $0x1f0] sm:$0xff]
  %v92 = vld [vmem:[%s1 + $0x1f8] sm:$0xff]
  %v93 = vld [vmem:[%s1 + $0x200] sm:$0xff]
  %v94 = vld [vmem:[%s1 + $0x208] sm:$0xff]
  %v95 = vld [vmem:[%s1 + $0x210] sm:$0xff]
  %v96 = vld [vmem:[%s1 + $0x218] sm:$0xff]
  %v97 = vld [vmem:[%s1 + $0x220] sm:$0xff]
  %v98 = vld [vmem:[%s1 + $0x228] sm:$0xff]
  %v99 = vld [vmem:[%s1 + $0x230] sm:$0xff]
  %v100 = vld [vmem:[%s1 + $0x238] sm:$0xff]
  %v101 = vld [vmem:[%s1 + $0x240] sm:$0xff]
  %v102 = vld [vmem:[%s1 + $0x248] sm:$0xff]
  %v103 = vld [vmem:[%s1 + $0x250] sm:$0xff]
  %v104 = vld [vmem:[%s1 + $0x258] sm:$0xff]
  %v105 = vld [vmem:[%s1 + $0x260] sm:$0xff]
  %v106 = vld [vmem:[%s1 + $0x268] sm:$0xff]
  %v107 = vld [vmem:[%s1 + $0x270] sm:$0xff]
  %v108 = vld [vmem:[%s1 + $0x278] sm:$0xff]
  %v109 = vld [vmem:[%s1 + $0x280] sm:$0xff]
  %v110 = vld [vmem:[%s1 + $0x288] sm:$0xff]
  %v111 = vld [vmem:[%s1 + $0x290] sm:$0xff]
  %v112 = vld [vmem:[%s1 + $0x298] sm:$0xff]
  %v113 = vld [vmem:[%s1 + $0x2a0] sm:$0xff]
  %v114 = vld [vmem:[%s1 + $0x2a8] sm:$0xff]
  %v115 = vld [vmem:[%s1 + $0x2b0] sm:$0xff]
  %v116 = vld [vmem:[%s1 + $0x2b8] sm:$0xff]
  %v117 = vld [vmem:[%s1 + $0x2c0] sm:$0xff]
  %v118 = vld [vmem:[%s1 + $0x2c8] sm:$0xff]
  %v119 = vld [vmem:[%s1 + $0x2d0] sm:$0xff]
  %v120 = vld [vmem:[%s1 + $0x2d8] sm:$0xff]
  %v121 = vld [vmem:[%s1 + $0x2e0] sm:$0xff]
  %v122 = vld [vmem:[%s1 + $0x2e8] sm:$0xff]
  %v123 = vld [vmem:[%s1 + $0x2f0] sm:$0xff]
  %v124 = vld [vmem:[%s1 + $0x2f8] sm:$0xff]
  %v125 = vld [vmem:[%s1 + $0x300] sm:$0xff]
  %v126 = vld [vmem:[%s1 + $0x308] sm:$0xff]
  %v127 = vld [vmem:[%s1 + $0x310] sm:$0xff]
  %v128 = vld [vmem:[%s1 + $0x318] sm:$0xff]
  %v129 = vld [vmem:[%s1 + $0x320] sm:$0xff]
  %v130 = vld [vmem:[%s1 + $0x328] sm:$0xff]
  %v131 = vld [vmem:[%s1 + $0x330] sm:$0xff]
  %v132 = vld [vmem:[%s1 + $0x338] sm:$0xff]
  %v133 = vld [vmem:[%s1 + $0x340] sm:$0xff]
  %v134 = vld [vmem:[%s1 + $0x348] sm:$0xff]
  %v135 = vld [vmem:[%s1 + $0x350] sm:$0xff]
  %v136 = vld [vmem:[%s1 + $0x358] sm:$0xff]
  %v137 = vld [vmem:[%s1 + $0x360] sm:$0xff]
  %v138 = vld [vmem:[%s1 + $0x368] sm:$0xff]
  %v139 = vld [vmem:[%s1 + $0x370] sm:$0xff]
  %v140 = vld [vmem:[%s1 + $0x378] sm:$0xff]
  %v141 = vld [vmem:[%s1 + $0x380] sm:$0xff]
  %v142 = vld [vmem:[%s1 + $0x388] sm:$0xff]
  %v143 = vld [vmem:[%s1 + $0x390] sm:$0xff]
  %v144 = vld [vmem:[%s1 + $0x398] sm:$0xff]
  %v145 = vld [vmem:[%s1 + $0x3a0] sm:$0xff]
  %v146 = vld [vmem:[%s1 + $0x3a8] sm:$0xff]
  %v147 = vld [vmem:[%s1 + $0x3b0] sm:$0xff]
  %v148 = vld [vmem:[%s1 + $0x3b8] sm:$0xff]
  %v149 = vld [vmem:[%s1 + $0x3c0] sm:$0xff]
  %v150 = vld [vmem:[%s1 + $0x3c8] sm:$0xff]
  %v151 = vld [vmem:[%s1 + $0x3d0] sm:$0xff]
  %v152 = vld [vmem:[%s1 + $0x3d8] sm:$0xff]
  %v153 = vld [vmem:[%s1 + $0x3e0] sm:$0xff]
  %v154 = vld [vmem:[%s1 + $0x3e8] sm:$0xff]
  %v155 = vld [vmem:[%s1 + $0x3f0] sm:$0xff]
  %v156 = vld [vmem:[%s1 + $0x3f8] sm:$0xff]
  %v157 = vld [vmem:[%s1 + $0x400] sm:$0xff]
  %v158 = vld [vmem:[%s1 + $0x408] sm:$0xff]
  %v159 = vld [vmem:[%s1 + $0x410] sm:$0xff]
  %v160 = vld [vmem:[%s1 + $0x418] sm:$0xff]
  %v161 = vld [vmem:[%s1 + $0x420] sm:$0xff]
  %v162 = vld [vmem:[%s1 + $0x428] sm:$0xff]
  %v163 = vld [vmem:[%s1 + $0x430] sm:$0xff]
  %v164 = vld [vmem:[%s1 + $0x438] sm:$0xff]
  %v165 = vld [vmem:[%s1 + $0x440] sm:$0xff]
  %v166 = vld [vmem:[%s1 + $0x448] sm:$0xff]
  %v167 = vld [vmem:[%s1 + $0x450] sm:$0xff]
  %v168 = vld [vmem:[%s1 + $0x458] sm:$0xff]
  %v169 = vld [vmem:[%s1 + $0x460] sm:$0xff]
  %v170 = vld [vmem:[%s1 + $0x468] sm:$0xff]
  %v171 = vld [vmem:[%s1 + $0x470] sm:$0xff]
  %v172 = vld [vmem:[%s1 + $0x478] sm:$0xff]
  %v173 = vld [vmem:[%s1 + $0x480] sm:$0xff]
  %v174 = vld [vmem:[%s1 + $0x488] sm:$0xff]
  %v175 = vld [vmem:[%s1 + $0x490] sm:$0xff]
  %v176 = vld [vmem:[%s1 + $0x498] sm:$0xff]
  %v177 = vld [vmem:[%s1 + $0x4a0] sm:$0xff]
  %v178 = vld [vmem:[%s1 + $0x4a8] sm:$0xff]
  %v179 = vld [vmem:[%s1 + $0x4b0] sm:$0xff]
  %v180 = vld [vmem:[%s1 + $0x4b8] sm:$0xff]
  %v181 = vld [vmem:[%s1 + $0x4c0] sm:$0xff]
  %v182 = vld [vmem:[%s1 + $0x4c8] sm:$0xff]
  %v183 = vld [vmem:[%s1 + $0x4d0] sm:$0xff]
  %v184 = vld [vmem:[%s1 + $0x4d8] sm:$0xff]
  %v185 = vld [vmem:[%s1 + $0x4e0] sm:$0xff]
  %v186 = vld [vmem:[%s1 + $0x4e8] sm:$0xff]
  %v187 = vld [vmem:[%s1 + $0x4f0] sm:$0xff]
  %v188 = vld [vmem:[%s1 + $0x4f8] sm:$0xff]
  %v189 = vld [vmem:[%s1 + $0x500] sm:$0xff]
  %v190 = vld [vmem:[%s1 + $0x508] sm:$0xff]
  %v191 = vld [vmem:[%s1 + $0x510] sm:$0xff]
  %v192 = vld [vmem:[%s1 + $0x518] sm:$0xff]
  %v193 = vld [vmem:[%s1 + $0x520] sm:$0xff]
  %v194 = vld [vmem:[%s1 + $0x528] sm:$0xff]
  %v195 = vld [vmem:[%s1 + $0x530] sm:$0xff]
  %v196 = vld [vmem:[%s1 + $0x538] sm:$0xff]
  %v197 = vld [vmem:[%s1 + $0x540] sm:$0xff]
  %v198 = vld [vmem:[%s1 + $0x548] sm:$0xff]
  %v199 = vld [vmem:[%s1 + $0x550] sm:$0xff]
  %v200 = vld [vmem:[%s1 + $0x558] sm:$0xff]
  %v201 = vld [vmem:[%s1 + $0x560] sm:$0xff]
  %v202 = vld [vmem:[%s1 + $0x568] sm:$0xff]
  %v203 = vld [vmem:[%s1 + $0x570] sm:$0xff]
  %v204 = vld [vmem:[%s1 + $0x578] sm:$0xff]
  %v205 = vld [vmem:[%s1 + $0x580] sm:$0xff]
  %v206 = vld [vmem:[%s1 + $0x588] sm:$0xff]
  %v207 = vld [vmem:[%s1 + $0x590] sm:$0xff]
  %v208 = vld [vmem:[%s1 + $0x598] sm:$0xff]
  %v209 = vld [vmem:[%s1 + $0x5a0] sm:$0xff]
  %v210 = vld [vmem:[%s1 + $0x5a8] sm:$0xff]
  %v211 = vld [vmem:[%s1 + $0x5b0] sm:$0xff]
  %v212 = vld [vmem:[%s1 + $0x5b8] sm:$0xff]
  %v213 = vld [vmem:[%s1 + $0x5c0] sm:$0xff]
  %v214 = vld [vmem:[%s1 + $0x5c8] sm:$0xff]
  %v215 = vld [vmem:[%s1 + $0x5d0] sm:$0xff]
  %v216 = vld [vmem:[%s1 + $0x5d8] sm:$0xff]
  %v217 = vld [vmem:[%s1 + $0x5e0] sm:$0xff]
  %v218 = vld [vmem:[%s1 + $0x5e8] sm:$0xff]
  %v219 = vld [vmem:[%s1 + $0x5f0] sm:$0xff]
  %v220 = vld [vmem:[%s1 + $0x5f8] sm:$0xff]
  %v221 = vld [vmem:[%s1 + $0x600] sm:$0xff]
  %v222 = vld [vmem:[%s1 + $0x608] sm:$0xff]
  %v223 = vld [vmem:[%s1 + $0x610] sm:$0xff]
  %v224 = vld [vmem:[%s1 + $0x618] sm:$0xff]
  %v225 = vld [vmem:[%s1 + $0x620] sm:$0xff]
  %v226 = vld [vmem:[%s1 + $0x628] sm:$0xff]
  %v227 = vld [vmem:[%s1 + $0x630] sm:$0xff]
  %v228 = vld [vmem:[%s1 + $0x638] sm:$0xff]
  %v229 = vld [vmem:[%s1 + $0x640] sm:$0xff]
  %v230 = vld [vmem:[%s1 + $0x648] sm:$0xff]
  %v231 = vld [vmem:[%s1 + $0x650] sm:$0xff]
  %v232 = vld [vmem:[%s1 + $0x658] sm:$0xff]
  %v233 = vld [vmem:[%s1 + $0x660] sm:$0xff]
  %v234 = vld [vmem:[%s1 + $0x668] sm:$0xff]
  %v235 = vld [vmem:[%s1 + $0x670] sm:$0xff]
  %v236 = vld [vmem:[%s1 + $0x678] sm:$0xff]
  %v237 = vld [vmem:[%s1 + $0x680] sm:$0xff]
  %v238 = vld [vmem:[%s1 + $0x688] sm:$0xff]
  %v239 = vld [vmem:[%s1 + $0x690] sm:$0xff]
  %v240 = vld [vmem:[%s1 + $0x698] sm:$0xff]
  %v241 = vld [vmem:[%s1 + $0x6a0] sm:$0xff]
  %v242 = vld [vmem:[%s1 + $0x6a8] sm:$0xff]
  %v243 = vld [vmem:[%s1 + $0x6b0] sm:$0xff]
  %v244 = vld [vmem:[%s1 + $0x6b8] sm:$0xff]
  %v245 = vld [vmem:[%s1 + $0x6c0] sm:$0xff]
  %v246 = vld [vmem:[%s1 + $0x6c8] sm:$0xff]
  %v247 = vld [vmem:[%s1 + $0x6d0] sm:$0xff]
  %v248 = vld [vmem:[%s1 + $0x6d8] sm:$0xff]
  %v249 = vld [vmem:[%s1 + $0x6e0] sm:$0xff]
  %v250 = vld [vmem:[%s1 + $0x6e8] sm:$0xff]
  %v251 = vld [vmem:[%s1 + $0x6f0] sm:$0xff]
  %v252 = vld [vmem:[%s1 + $0x6f8] sm:$0xff]
  %v253 = vld [vmem:[%s1 + $0x700] sm:$0xff]
  %v254 = vld [vmem:[%s1 + $0x708] sm:$0xff]
  %v255 = vld [vmem:[%s1 + $0x710] sm:$0xff]
  %v256 = vld [vmem:[%s1 + $0x718] sm:$0xff]
  %v257 = vld [vmem:[%s1 + $0x720] sm:$0xff]
  %v258 = vld [vmem:[%s1 + $0x728] sm:$0xff]
  %v259 = vld [vmem:[%s1 + $0x730] sm:$0xff]
  %v260 = vld [vmem:[%s1 + $0x738] sm:$0xff]
  %v261 = vld [vmem:[%s1 + $0x740] sm:$0xff]
  %v262 = vld [vmem:[%s1 + $0x748] sm:$0xff]
  %v263 = vld [vmem:[%s1 + $0x750] sm:$0xff]
  %v264 = vld [vmem:[%s1 + $0x758] sm:$0xff]
  %v265 = vld [vmem:[%s1 + $0x760] sm:$0xff]
  %v266 = vld [vmem:[%s1 + $0x768] sm:$0xff]
  %v267 = vld [vmem:[%s1 + $0x770] sm:$0xff]
  %v268 = vld [vmem:[%s1 + $0x778] sm:$0xff]
  %v269 = vld [vmem:[%s1 + $0x780] sm:$0xff]
  %v270 = vld [vmem:[%s1 + $0x788] sm:$0xff]
  %v271 = vld [vmem:[%s1 + $0x790] sm:$0xff]
  %v272 = vld [vmem:[%s1 + $0x798] sm:$0xff]
  %v273 = vld [vmem:[%s1 + $0x7a0] sm:$0xff]
  %v274 = vld [vmem:[%s1 + $0x7a8] sm:$0xff]
  %v275 = vld [vmem:[%s1 + $0x7b0] sm:$0xff]
  %v276 = vld [vmem:[%s1 + $0x7b8] sm:$0xff]
  %v277 = vld [vmem:[%s1 + $0x7c0] sm:$0xff]
  %v278 = vld [vmem:[%s1 + $0x7c8] sm:$0xff]
  %v279 = vld [vmem:[%s1 + $0x7d0] sm:$0xff]
  %v280 = vld [vmem:[%s1 + $0x7d8] sm:$0xff]
  %v281 = vld [vmem:[%s1 + $0x7e0] sm:$0xff]
  %v282 = vld [vmem:[%s1 + $0x7e8] sm:$0xff]
  %v283 = vld [vmem:[%s1 + $0x7f0] sm:$0xff]
  %v284 = vld [vmem:[%s1 + $0x7f8] sm:$0xff]
  %v285 = vld [vmem:[%s2] sm:$0xff]
  %v287 = vlaneseq
  %v288 = vshrl.u32 %v287, 7
  %v289 = vsub.s32 0, %v288
  %v290 = vrot.slane %v285, %v289
  %v291 = vlaneseq
  %v292 = vshrl.u32 %v291, 7
  %v293 = vsub.s32 1, %v292
  %v294 = vrot.slane %v285, %v293
  %v295 = vlaneseq
  %v296 = vshrl.u32 %v295, 7
  %v297 = vsub.s32 2, %v296
  %v298 = vrot.slane %v285, %v297
  %v299 = vlaneseq
  %v300 = vshrl.u32 %v299, 7
  %v301 = vsub.s32 3, %v300
  %v302 = vrot.slane %v285, %v301
  %v303 = vlaneseq
  %v304 = vshrl.u32 %v303, 7
  %v305 = vsub.s32 4, %v304
  %v306 = vrot.slane %v285, %v305
  %v307 = vlaneseq
  %v308 = vshrl.u32 %v307, 7
  %v309 = vsub.s32 5, %v308
  %v310 = vrot.slane %v285, %v309
  %v311 = vlaneseq
  %v312 = vshrl.u32 %v311, 7
  %v313 = vsub.s32 6, %v312
  %v314 = vrot.slane %v285, %v313
  %v315 = vlaneseq
  %v316 = vshrl.u32 %v315, 7
  %v317 = vsub.s32 7, %v316
  %v318 = vrot.slane %v285, %v317
  %v329 = vunpack.c.l.b16 %v27
  %v330 = vunpack.c.h.b16 %v27
  %v331 = vunpack.c.l.b16 %v28
  %v332 = vunpack.c.h.b16 %v28
  %v333 = vpack.c.b16 %v329, %v329
  %v334 = vpack.c.b16 %v330, %v330
  %v335 = vpack.c.b16 %v331, %v331
  %v336 = vpack.c.b16 %v332, %v332
  %v597 = vunpack.c.l.b16 %v29
  %v598 = vunpack.c.h.b16 %v29
  %v599 = vunpack.c.l.b16 %v30
  %v600 = vunpack.c.h.b16 %v30
  %v601 = vunpack.c.l.b16 %v31
  %v602 = vunpack.c.h.b16 %v31
  %v603 = vunpack.c.l.b16 %v32
  %v604 = vunpack.c.h.b16 %v32
  %v605 = vunpack.c.l.b16 %v33
  %v606 = vunpack.c.h.b16 %v33
  %v607 = vunpack.c.l.b16 %v34
  %v608 = vunpack.c.h.b16 %v34
  %v609 = vunpack.c.l.b16 %v35
  %v610 = vunpack.c.h.b16 %v35
  %v611 = vunpack.c.l.b16 %v36
  %v612 = vunpack.c.h.b16 %v36
  %v613 = vunpack.c.l.b16 %v37
  %v614 = vunpack.c.h.b16 %v37
  %v615 = vunpack.c.l.b16 %v38
  %v616 = vunpack.c.h.b16 %v38
  %v617 = vunpack.c.l.b16 %v39
  %v618 = vunpack.c.h.b16 %v39
  %v619 = vunpack.c.l.b16 %v40
  %v620 = vunpack.c.h.b16 %v40
  %v621 = vunpack.c.l.b16 %v41
  %v622 = vunpack.c.h.b16 %v41
  %v623 = vunpack.c.l.b16 %v42
  %v624 = vunpack.c.h.b16 %v42
  %v625 = vunpack.c.l.b16 %v43
  %v626 = vunpack.c.h.b16 %v43
  %v627 = vunpack.c.l.b16 %v44
  %v628 = vunpack.c.h.b16 %v44
  %v629 = vunpack.c.l.b16 %v45
  %v630 = vunpack.c.h.b16 %v45
  %v631 = vunpack.c.l.b16 %v46
  %v632 = vunpack.c.h.b16 %v46
  %v633 = vunpack.c.l.b16 %v47
  %v634 = vunpack.c.h.b16 %v47
  %v635 = vunpack.c.l.b16 %v48
  %v636 = vunpack.c.h.b16 %v48
  %v637 = vunpack.c.l.b16 %v49
  %v638 = vunpack.c.h.b16 %v49
  %v639 = vunpack.c.l.b16 %v50
  %v640 = vunpack.c.h.b16 %v50
  %v641 = vunpack.c.l.b16 %v51
  %v642 = vunpack.c.h.b16 %v51
  %v643 = vunpack.c.l.b16 %v52
  %v644 = vunpack.c.h.b16 %v52
  %v645 = vunpack.c.l.b16 %v53
  %v646 = vunpack.c.h.b16 %v53
  %v647 = vunpack.c.l.b16 %v54
  %v648 = vunpack.c.h.b16 %v54
  %v649 = vunpack.c.l.b16 %v55
  %v650 = vunpack.c.h.b16 %v55
  %v651 = vunpack.c.l.b16 %v56
  %v652 = vunpack.c.h.b16 %v56
  %v653 = vunpack.c.l.b16 %v57
  %v654 = vunpack.c.h.b16 %v57
  %v655 = vunpack.c.l.b16 %v58
  %v656 = vunpack.c.h.b16 %v58
  %v657 = vunpack.c.l.b16 %v59
  %v658 = vunpack.c.h.b16 %v59
  %v659 = vunpack.c.l.b16 %v60
  %v660 = vunpack.c.h.b16 %v60
  %v661 = vunpack.c.l.b16 %v61
  %v662 = vunpack.c.h.b16 %v61
  %v663 = vunpack.c.l.b16 %v62
  %v664 = vunpack.c.h.b16 %v62
  %v665 = vunpack.c.l.b16 %v63
  %v666 = vunpack.c.h.b16 %v63
  %v667 = vunpack.c.l.b16 %v64
  %v668 = vunpack.c.h.b16 %v64
  %v669 = vunpack.c.l.b16 %v65
  %v670 = vunpack.c.h.b16 %v65
  %v671 = vunpack.c.l.b16 %v66
  %v672 = vunpack.c.h.b16 %v66
  %v673 = vunpack.c.l.b16 %v67
  %v674 = vunpack.c.h.b16 %v67
  %v675 = vunpack.c.l.b16 %v68
  %v676 = vunpack.c.h.b16 %v68
  %v677 = vunpack.c.l.b16 %v69
  %v678 = vunpack.c.h.b16 %v69
  %v679 = vunpack.c.l.b16 %v70
  %v680 = vunpack.c.h.b16 %v70
  %v681 = vunpack.c.l.b16 %v71
  %v682 = vunpack.c.h.b16 %v71
  %v683 = vunpack.c.l.b16 %v72
  %v684 = vunpack.c.h.b16 %v72
  %v685 = vunpack.c.l.b16 %v73
  %v686 = vunpack.c.h.b16 %v73
  %v687 = vunpack.c.l.b16 %v74
  %v688 = vunpack.c.h.b16 %v74
  %v689 = vunpack.c.l.b16 %v75
  %v690 = vunpack.c.h.b16 %v75
  %v691 = vunpack.c.l.b16 %v76
  %v692 = vunpack.c.h.b16 %v76
  %v693 = vunpack.c.l.b16 %v77
  %v694 = vunpack.c.h.b16 %v77
  %v695 = vunpack.c.l.b16 %v78
  %v696 = vunpack.c.h.b16 %v78
  %v697 = vunpack.c.l.b16 %v79
  %v698 = vunpack.c.h.b16 %v79
  %v699 = vunpack.c.l.b16 %v80
  %v700 = vunpack.c.h.b16 %v80
  %v701 = vunpack.c.l.b16 %v81
  %v702 = vunpack.c.h.b16 %v81
  %v703 = vunpack.c.l.b16 %v82
  %v704 = vunpack.c.h.b16 %v82
  %v705 = vunpack.c.l.b16 %v83
  %v706 = vunpack.c.h.b16 %v83
  %v707 = vunpack.c.l.b16 %v84
  %v708 = vunpack.c.h.b16 %v84
  %v709 = vunpack.c.l.b16 %v85
  %v710 = vunpack.c.h.b16 %v85
  %v711 = vunpack.c.l.b16 %v86
  %v712 = vunpack.c.h.b16 %v86
  %v713 = vunpack.c.l.b16 %v87
  %v714 = vunpack.c.h.b16 %v87
  %v715 = vunpack.c.l.b16 %v88
  %v716 = vunpack.c.h.b16 %v88
  %v717 = vunpack.c.l.b16 %v89
  %v718 = vunpack.c.h.b16 %v89
  %v719 = vunpack.c.l.b16 %v90
  %v720 = vunpack.c.h.b16 %v90
  %v721 = vunpack.c.l.b16 %v91
  %v722 = vunpack.c.h.b16 %v91
  %v723 = vunpack.c.l.b16 %v92
  %v724 = vunpack.c.h.b16 %v92
  %v725 = vunpack.c.l.b16 %v93
  %v726 = vunpack.c.h.b16 %v93
  %v727 = vunpack.c.l.b16 %v94
  %v728 = vunpack.c.h.b16 %v94
  %v729 = vunpack.c.l.b16 %v95
  %v730 = vunpack.c.h.b16 %v95
  %v731 = vunpack.c.l.b16 %v96
  %v732 = vunpack.c.h.b16 %v96
  %v733 = vunpack.c.l.b16 %v97
  %v734 = vunpack.c.h.b16 %v97
  %v735 = vunpack.c.l.b16 %v98
  %v736 = vunpack.c.h.b16 %v98
  %v737 = vunpack.c.l.b16 %v99
  %v738 = vunpack.c.h.b16 %v99
  %v739 = vunpack.c.l.b16 %v100
  %v740 = vunpack.c.h.b16 %v100
  %v741 = vunpack.c.l.b16 %v101
  %v742 = vunpack.c.h.b16 %v101
  %v743 = vunpack.c.l.b16 %v102
  %v744 = vunpack.c.h.b16 %v102
  %v745 = vunpack.c.l.b16 %v103
  %v746 = vunpack.c.h.b16 %v103
  %v747 = vunpack.c.l.b16 %v104
  %v748 = vunpack.c.h.b16 %v104
  %v749 = vunpack.c.l.b16 %v105
  %v750 = vunpack.c.h.b16 %v105
  %v751 = vunpack.c.l.b16 %v106
  %v752 = vunpack.c.h.b16 %v106
  %v753 = vunpack.c.l.b16 %v107
  %v754 = vunpack.c.h.b16 %v107
  %v755 = vunpack.c.l.b16 %v108
  %v756 = vunpack.c.h.b16 %v108
  %v757 = vunpack.c.l.b16 %v109
  %v758 = vunpack.c.h.b16 %v109
  %v759 = vunpack.c.l.b16 %v110
  %v760 = vunpack.c.h.b16 %v110
  %v761 = vunpack.c.l.b16 %v111
  %v762 = vunpack.c.h.b16 %v111
  %v763 = vunpack.c.l.b16 %v112
  %v764 = vunpack.c.h.b16 %v112
  %v765 = vunpack.c.l.b16 %v113
  %v766 = vunpack.c.h.b16 %v113
  %v767 = vunpack.c.l.b16 %v114
  %v768 = vunpack.c.h.b16 %v114
  %v769 = vunpack.c.l.b16 %v115
  %v770 = vunpack.c.h.b16 %v115
  %v771 = vunpack.c.l.b16 %v116
  %v772 = vunpack.c.h.b16 %v116
  %v773 = vunpack.c.l.b16 %v117
  %v774 = vunpack.c.h.b16 %v117
  %v775 = vunpack.c.l.b16 %v118
  %v776 = vunpack.c.h.b16 %v118
  %v777 = vunpack.c.l.b16 %v119
  %v778 = vunpack.c.h.b16 %v119
  %v779 = vunpack.c.l.b16 %v120
  %v780 = vunpack.c.h.b16 %v120
  %v781 = vunpack.c.l.b16 %v121
  %v782 = vunpack.c.h.b16 %v121
  %v783 = vunpack.c.l.b16 %v122
  %v784 = vunpack.c.h.b16 %v122
  %v785 = vunpack.c.l.b16 %v123
  %v786 = vunpack.c.h.b16 %v123
  %v787 = vunpack.c.l.b16 %v124
  %v788 = vunpack.c.h.b16 %v124
  %v789 = vunpack.c.l.b16 %v125
  %v790 = vunpack.c.h.b16 %v125
  %v791 = vunpack.c.l.b16 %v126
  %v792 = vunpack.c.h.b16 %v126
  %v793 = vunpack.c.l.b16 %v127
  %v794 = vunpack.c.h.b16 %v127
  %v795 = vunpack.c.l.b16 %v128
  %v796 = vunpack.c.h.b16 %v128
  %v797 = vunpack.c.l.b16 %v129
  %v798 = vunpack.c.h.b16 %v129
  %v799 = vunpack.c.l.b16 %v130
  %v800 = vunpack.c.h.b16 %v130
  %v801 = vunpack.c.l.b16 %v131
  %v802 = vunpack.c.h.b16 %v131
  %v803 = vunpack.c.l.b16 %v132
  %v804 = vunpack.c.h.b16 %v132
  %v805 = vunpack.c.l.b16 %v133
  %v806 = vunpack.c.h.b16 %v133
  %v807 = vunpack.c.l.b16 %v134
  %v808 = vunpack.c.h.b16 %v134
  %v809 = vunpack.c.l.b16 %v135
  %v810 = vunpack.c.h.b16 %v135
  %v811 = vunpack.c.l.b16 %v136
  %v812 = vunpack.c.h.b16 %v136
  %v813 = vunpack.c.l.b16 %v137
  %v814 = vunpack.c.h.b16 %v137
  %v815 = vunpack.c.l.b16 %v138
  %v816 = vunpack.c.h.b16 %v138
  %v817 = vunpack.c.l.b16 %v139
  %v818 = vunpack.c.h.b16 %v139
  %v819 = vunpack.c.l.b16 %v140
  %v820 = vunpack.c.h.b16 %v140
  %v821 = vunpack.c.l.b16 %v141
  %v822 = vunpack.c.h.b16 %v141
  %v823 = vunpack.c.l.b16 %v142
  %v824 = vunpack.c.h.b16 %v142
  %v825 = vunpack.c.l.b16 %v143
  %v826 = vunpack.c.h.b16 %v143
  %v827 = vunpack.c.l.b16 %v144
  %v828 = vunpack.c.h.b16 %v144
  %v829 = vunpack.c.l.b16 %v145
  %v830 = vunpack.c.h.b16 %v145
  %v831 = vunpack.c.l.b16 %v146
  %v832 = vunpack.c.h.b16 %v146
  %v833 = vunpack.c.l.b16 %v147
  %v834 = vunpack.c.h.b16 %v147
  %v835 = vunpack.c.l.b16 %v148
  %v836 = vunpack.c.h.b16 %v148
  %v837 = vunpack.c.l.b16 %v149
  %v838 = vunpack.c.h.b16 %v149
  %v839 = vunpack.c.l.b16 %v150
  %v840 = vunpack.c.h.b16 %v150
  %v841 = vunpack.c.l.b16 %v151
  %v842 = vunpack.c.h.b16 %v151
  %v843 = vunpack.c.l.b16 %v152
  %v844 = vunpack.c.h.b16 %v152
  %v845 = vunpack.c.l.b16 %v153
  %v846 = vunpack.c.h.b16 %v153
  %v847 = vunpack.c.l.b16 %v154
  %v848 = vunpack.c.h.b16 %v154
  %v849 = vunpack.c.l.b16 %v155
  %v850 = vunpack.c.h.b16 %v155
  %v851 = vunpack.c.l.b16 %v156
  %v852 = vunpack.c.h.b16 %v156
  %v853 = vunpack.c.l.b16 %v157
  %v854 = vunpack.c.h.b16 %v157
  %v855 = vunpack.c.l.b16 %v158
  %v856 = vunpack.c.h.b16 %v158
  %v857 = vunpack.c.l.b16 %v159
  %v858 = vunpack.c.h.b16 %v159
  %v859 = vunpack.c.l.b16 %v160
  %v860 = vunpack.c.h.b16 %v160
  %v861 = vunpack.c.l.b16 %v161
  %v862 = vunpack.c.h.b16 %v161
  %v863 = vunpack.c.l.b16 %v162
  %v864 = vunpack.c.h.b16 %v162
  %v865 = vunpack.c.l.b16 %v163
  %v866 = vunpack.c.h.b16 %v163
  %v867 = vunpack.c.l.b16 %v164
  %v868 = vunpack.c.h.b16 %v164
  %v869 = vunpack.c.l.b16 %v165
  %v870 = vunpack.c.h.b16 %v165
  %v871 = vunpack.c.l.b16 %v166
  %v872 = vunpack.c.h.b16 %v166
  %v873 = vunpack.c.l.b16 %v167
  %v874 = vunpack.c.h.b16 %v167
  %v875 = vunpack.c.l.b16 %v168
  %v876 = vunpack.c.h.b16 %v168
  %v877 = vunpack.c.l.b16 %v169
  %v878 = vunpack.c.h.b16 %v169
  %v879 = vunpack.c.l.b16 %v170
  %v880 = vunpack.c.h.b16 %v170
  %v881 = vunpack.c.l.b16 %v171
  %v882 = vunpack.c.h.b16 %v171
  %v883 = vunpack.c.l.b16 %v172
  %v884 = vunpack.c.h.b16 %v172
  %v885 = vunpack.c.l.b16 %v173
  %v886 = vunpack.c.h.b16 %v173
  %v887 = vunpack.c.l.b16 %v174
  %v888 = vunpack.c.h.b16 %v174
  %v889 = vunpack.c.l.b16 %v175
  %v890 = vunpack.c.h.b16 %v175
  %v891 = vunpack.c.l.b16 %v176
  %v892 = vunpack.c.h.b16 %v176
  %v893 = vunpack.c.l.b16 %v177
  %v894 = vunpack.c.h.b16 %v177
  %v895 = vunpack.c.l.b16 %v178
  %v896 = vunpack.c.h.b16 %v178
  %v897 = vunpack.c.l.b16 %v179
  %v898 = vunpack.c.h.b16 %v179
  %v899 = vunpack.c.l.b16 %v180
  %v900 = vunpack.c.h.b16 %v180
  %v901 = vunpack.c.l.b16 %v181
  %v902 = vunpack.c.h.b16 %v181
  %v903 = vunpack.c.l.b16 %v182
  %v904 = vunpack.c.h.b16 %v182
  %v905 = vunpack.c.l.b16 %v183
  %v906 = vunpack.c.h.b16 %v183
  %v907 = vunpack.c.l.b16 %v184
  %v908 = vunpack.c.h.b16 %v184
  %v909 = vunpack.c.l.b16 %v185
  %v910 = vunpack.c.h.b16 %v185
  %v911 = vunpack.c.l.b16 %v186
  %v912 = vunpack.c.h.b16 %v186
  %v913 = vunpack.c.l.b16 %v187
  %v914 = vunpack.c.h.b16 %v187
  %v915 = vunpack.c.l.b16 %v188
  %v916 = vunpack.c.h.b16 %v188
  %v917 = vunpack.c.l.b16 %v189
  %v918 = vunpack.c.h.b16 %v189
  %v919 = vunpack.c.l.b16 %v190
  %v920 = vunpack.c.h.b16 %v190
  %v921 = vunpack.c.l.b16 %v191
  %v922 = vunpack.c.h.b16 %v191
  %v923 = vunpack.c.l.b16 %v192
  %v924 = vunpack.c.h.b16 %v192
  %v925 = vunpack.c.l.b16 %v193
  %v926 = vunpack.c.h.b16 %v193
  %v927 = vunpack.c.l.b16 %v194
  %v928 = vunpack.c.h.b16 %v194
  %v929 = vunpack.c.l.b16 %v195
  %v930 = vunpack.c.h.b16 %v195
  %v931 = vunpack.c.l.b16 %v196
  %v932 = vunpack.c.h.b16 %v196
  %v933 = vunpack.c.l.b16 %v197
  %v934 = vunpack.c.h.b16 %v197
  %v935 = vunpack.c.l.b16 %v198
  %v936 = vunpack.c.h.b16 %v198
  %v937 = vunpack.c.l.b16 %v199
  %v938 = vunpack.c.h.b16 %v199
  %v939 = vunpack.c.l.b16 %v200
  %v940 = vunpack.c.h.b16 %v200
  %v941 = vunpack.c.l.b16 %v201
  %v942 = vunpack.c.h.b16 %v201
  %v943 = vunpack.c.l.b16 %v202
  %v944 = vunpack.c.h.b16 %v202
  %v945 = vunpack.c.l.b16 %v203
  %v946 = vunpack.c.h.b16 %v203
  %v947 = vunpack.c.l.b16 %v204
  %v948 = vunpack.c.h.b16 %v204
  %v949 = vunpack.c.l.b16 %v205
  %v950 = vunpack.c.h.b16 %v205
  %v951 = vunpack.c.l.b16 %v206
  %v952 = vunpack.c.h.b16 %v206
  %v953 = vunpack.c.l.b16 %v207
  %v954 = vunpack.c.h.b16 %v207
  %v955 = vunpack.c.l.b16 %v208
  %v956 = vunpack.c.h.b16 %v208
  %v957 = vunpack.c.l.b16 %v209
  %v958 = vunpack.c.h.b16 %v209
  %v959 = vunpack.c.l.b16 %v210
  %v960 = vunpack.c.h.b16 %v210
  %v961 = vunpack.c.l.b16 %v211
  %v962 = vunpack.c.h.b16 %v211
  %v963 = vunpack.c.l.b16 %v212
  %v964 = vunpack.c.h.b16 %v212
  %v965 = vunpack.c.l.b16 %v213
  %v966 = vunpack.c.h.b16 %v213
  %v967 = vunpack.c.l.b16 %v214
  %v968 = vunpack.c.h.b16 %v214
  %v969 = vunpack.c.l.b16 %v215
  %v970 = vunpack.c.h.b16 %v215
  %v971 = vunpack.c.l.b16 %v216
  %v972 = vunpack.c.h.b16 %v216
  %v973 = vunpack.c.l.b16 %v217
  %v974 = vunpack.c.h.b16 %v217
  %v975 = vunpack.c.l.b16 %v218
  %v976 = vunpack.c.h.b16 %v218
  %v977 = vunpack.c.l.b16 %v219
  %v978 = vunpack.c.h.b16 %v219
  %v979 = vunpack.c.l.b16 %v220
  %v980 = vunpack.c.h.b16 %v220
  %v981 = vunpack.c.l.b16 %v221
  %v982 = vunpack.c.h.b16 %v221
  %v983 = vunpack.c.l.b16 %v222
  %v984 = vunpack.c.h.b16 %v222
  %v985 = vunpack.c.l.b16 %v223
  %v986 = vunpack.c.h.b16 %v223
  %v987 = vunpack.c.l.b16 %v224
  %v988 = vunpack.c.h.b16 %v224
  %v989 = vunpack.c.l.b16 %v225
  %v990 = vunpack.c.h.b16 %v225
  %v991 = vunpack.c.l.b16 %v226
  %v992 = vunpack.c.h.b16 %v226
  %v993 = vunpack.c.l.b16 %v227
  %v994 = vunpack.c.h.b16 %v227
  %v995 = vunpack.c.l.b16 %v228
  %v996 = vunpack.c.h.b16 %v228
  %v997 = vunpack.c.l.b16 %v229
  %v998 = vunpack.c.h.b16 %v229
  %v999 = vunpack.c.l.b16 %v230
  %v1000 = vunpack.c.h.b16 %v230
  %v1001 = vunpack.c.l.b16 %v231
  %v1002 = vunpack.c.h.b16 %v231
  %v1003 = vunpack.c.l.b16 %v232
  %v1004 = vunpack.c.h.b16 %v232
  %v1005 = vunpack.c.l.b16 %v233
  %v1006 = vunpack.c.h.b16 %v233
  %v1007 = vunpack.c.l.b16 %v234
  %v1008 = vunpack.c.h.b16 %v234
  %v1009 = vunpack.c.l.b16 %v235
  %v1010 = vunpack.c.h.b16 %v235
  %v1011 = vunpack.c.l.b16 %v236
  %v1012 = vunpack.c.h.b16 %v236
  %v1013 = vunpack.c.l.b16 %v237
  %v1014 = vunpack.c.h.b16 %v237
  %v1015 = vunpack.c.l.b16 %v238
  %v1016 = vunpack.c.h.b16 %v238
  %v1017 = vunpack.c.l.b16 %v239
  %v1018 = vunpack.c.h.b16 %v239
  %v1019 = vunpack.c.l.b16 %v240
  %v1020 = vunpack.c.h.b16 %v240
  %v1021 = vunpack.c.l.b16 %v241
  %v1022 = vunpack.c.h.b16 %v241
  %v1023 = vunpack.c.l.b16 %v242
  %v1024 = vunpack.c.h.b16 %v242
  %v1025 = vunpack.c.l.b16 %v243
  %v1026 = vunpack.c.h.b16 %v243
  %v1027 = vunpack.c.l.b16 %v244
  %v1028 = vunpack.c.h.b16 %v244
  %v1029 = vunpack.c.l.b16 %v245
  %v1030 = vunpack.c.h.b16 %v245
  %v1031 = vunpack.c.l.b16 %v246
  %v1032 = vunpack.c.h.b16 %v246
  %v1033 = vunpack.c.l.b16 %v247
  %v1034 = vunpack.c.h.b16 %v247
  %v1035 = vunpack.c.l.b16 %v248
  %v1036 = vunpack.c.h.b16 %v248
  %v1037 = vunpack.c.l.b16 %v249
  %v1038 = vunpack.c.h.b16 %v249
  %v1039 = vunpack.c.l.b16 %v250
  %v1040 = vunpack.c.h.b16 %v250
  %v1041 = vunpack.c.l.b16 %v251
  %v1042 = vunpack.c.h.b16 %v251
  %v1043 = vunpack.c.l.b16 %v252
  %v1044 = vunpack.c.h.b16 %v252
  %v1045 = vunpack.c.l.b16 %v253
  %v1046 = vunpack.c.h.b16 %v253
  %v1047 = vunpack.c.l.b16 %v254
  %v1048 = vunpack.c.h.b16 %v254
  %v1049 = vunpack.c.l.b16 %v255
  %v1050 = vunpack.c.h.b16 %v255
  %v1051 = vunpack.c.l.b16 %v256
  %v1052 = vunpack.c.h.b16 %v256
  %v1053 = vunpack.c.l.b16 %v257
  %v1054 = vunpack.c.h.b16 %v257
  %v1055 = vunpack.c.l.b16 %v258
  %v1056 = vunpack.c.h.b16 %v258
  %v1057 = vunpack.c.l.b16 %v259
  %v1058 = vunpack.c.h.b16 %v259
  %v1059 = vunpack.c.l.b16 %v260
  %v1060 = vunpack.c.h.b16 %v260
  %v1061 = vunpack.c.l.b16 %v261
  %v1062 = vunpack.c.h.b16 %v261
  %v1063 = vunpack.c.l.b16 %v262
  %v1064 = vunpack.c.h.b16 %v262
  %v1065 = vunpack.c.l.b16 %v263
  %v1066 = vunpack.c.h.b16 %v263
  %v1067 = vunpack.c.l.b16 %v264
  %v1068 = vunpack.c.h.b16 %v264
  %v1069 = vunpack.c.l.b16 %v265
  %v1070 = vunpack.c.h.b16 %v265
  %v1071 = vunpack.c.l.b16 %v266
  %v1072 = vunpack.c.h.b16 %v266
  %v1073 = vunpack.c.l.b16 %v267
  %v1074 = vunpack.c.h.b16 %v267
  %v1075 = vunpack.c.l.b16 %v268
  %v1076 = vunpack.c.h.b16 %v268
  %v1077 = vunpack.c.l.b16 %v269
  %v1078 = vunpack.c.h.b16 %v269
  %v1079 = vunpack.c.l.b16 %v270
  %v1080 = vunpack.c.h.b16 %v270
  %v1081 = vunpack.c.l.b16 %v271
  %v1082 = vunpack.c.h.b16 %v271
  %v1083 = vunpack.c.l.b16 %v272
  %v1084 = vunpack.c.h.b16 %v272
  %v1085 = vunpack.c.l.b16 %v273
  %v1086 = vunpack.c.h.b16 %v273
  %v1087 = vunpack.c.l.b16 %v274
  %v1088 = vunpack.c.h.b16 %v274
  %v1089 = vunpack.c.l.b16 %v275
  %v1090 = vunpack.c.h.b16 %v275
  %v1091 = vunpack.c.l.b16 %v276
  %v1092 = vunpack.c.h.b16 %v276
  %v1093 = vunpack.c.l.b16 %v277
  %v1094 = vunpack.c.h.b16 %v277
  %v1095 = vunpack.c.l.b16 %v278
  %v1096 = vunpack.c.h.b16 %v278
  %v1097 = vunpack.c.l.b16 %v279
  %v1098 = vunpack.c.h.b16 %v279
  %v1099 = vunpack.c.l.b16 %v280
  %v1100 = vunpack.c.h.b16 %v280
  %v1101 = vunpack.c.l.b16 %v281
  %v1102 = vunpack.c.h.b16 %v281
  %v1103 = vunpack.c.l.b16 %v282
  %v1104 = vunpack.c.h.b16 %v282
  %v1105 = vunpack.c.l.b16 %v283
  %v1106 = vunpack.c.h.b16 %v283
  %v1107 = vunpack.c.l.b16 %v284
  %v1108 = vunpack.c.h.b16 %v284
  %v1109 = vpack.c.b16 %v605, %v597
  %v1110 = vpack.c.b16 %v606, %v598
  %v1111 = vpack.c.b16 %v607, %v599
  %v1112 = vpack.c.b16 %v608, %v600
  %v1113 = vpack.c.b16 %v609, %v601
  %v1114 = vpack.c.b16 %v610, %v602
  %v1115 = vpack.c.b16 %v611, %v603
  %v1116 = vpack.c.b16 %v612, %v604
  %v1117 = vpack.c.b16 %v621, %v613
  %v1118 = vpack.c.b16 %v622, %v614
  %v1119 = vpack.c.b16 %v623, %v615
  %v1120 = vpack.c.b16 %v624, %v616
  %v1121 = vpack.c.b16 %v625, %v617
  %v1122 = vpack.c.b16 %v626, %v618
  %v1123 = vpack.c.b16 %v627, %v619
  %v1124 = vpack.c.b16 %v628, %v620
  %v1125 = vpack.c.b16 %v637, %v629
  %v1126 = vpack.c.b16 %v638, %v630
  %v1127 = vpack.c.b16 %v639, %v631
  %v1128 = vpack.c.b16 %v640, %v632
  %v1129 = vpack.c.b16 %v641, %v633
  %v1130 = vpack.c.b16 %v642, %v634
  %v1131 = vpack.c.b16 %v643, %v635
  %v1132 = vpack.c.b16 %v644, %v636
  %v1133 = vpack.c.b16 %v653, %v645
  %v1134 = vpack.c.b16 %v654, %v646
  %v1135 = vpack.c.b16 %v655, %v647
  %v1136 = vpack.c.b16 %v656, %v648
  %v1137 = vpack.c.b16 %v657, %v649
  %v1138 = vpack.c.b16 %v658, %v650
  %v1139 = vpack.c.b16 %v659, %v651
  %v1140 = vpack.c.b16 %v660, %v652
  %v1141 = vpack.c.b16 %v669, %v661
  %v1142 = vpack.c.b16 %v670, %v662
  %v1143 = vpack.c.b16 %v671, %v663
  %v1144 = vpack.c.b16 %v672, %v664
  %v1145 = vpack.c.b16 %v673, %v665
  %v1146 = vpack.c.b16 %v674, %v666
  %v1147 = vpack.c.b16 %v675, %v667
  %v1148 = vpack.c.b16 %v676, %v668
  %v1149 = vpack.c.b16 %v685, %v677
  %v1150 = vpack.c.b16 %v686, %v678
  %v1151 = vpack.c.b16 %v687, %v679
  %v1152 = vpack.c.b16 %v688, %v680
  %v1153 = vpack.c.b16 %v689, %v681
  %v1154 = vpack.c.b16 %v690, %v682
  %v1155 = vpack.c.b16 %v691, %v683
  %v1156 = vpack.c.b16 %v692, %v684
  %v1157 = vpack.c.b16 %v701, %v693
  %v1158 = vpack.c.b16 %v702, %v694
  %v1159 = vpack.c.b16 %v703, %v695
  %v1160 = vpack.c.b16 %v704, %v696
  %v1161 = vpack.c.b16 %v705, %v697
  %v1162 = vpack.c.b16 %v706, %v698
  %v1163 = vpack.c.b16 %v707, %v699
  %v1164 = vpack.c.b16 %v708, %v700
  %v1165 = vpack.c.b16 %v717, %v709
  %v1166 = vpack.c.b16 %v718, %v710
  %v1167 = vpack.c.b16 %v719, %v711
  %v1168 = vpack.c.b16 %v720, %v712
  %v1169 = vpack.c.b16 %v721, %v713
  %v1170 = vpack.c.b16 %v722, %v714
  %v1171 = vpack.c.b16 %v723, %v715
  %v1172 = vpack.c.b16 %v724, %v716
  %v1173 = vpack.c.b16 %v733, %v725
  %v1174 = vpack.c.b16 %v734, %v726
  %v1175 = vpack.c.b16 %v735, %v727
  %v1176 = vpack.c.b16 %v736, %v728
  %v1177 = vpack.c.b16 %v737, %v729
  %v1178 = vpack.c.b16 %v738, %v730
  %v1179 = vpack.c.b16 %v739, %v731
  %v1180 = vpack.c.b16 %v740, %v732
  %v1181 = vpack.c.b16 %v749, %v741
  %v1182 = vpack.c.b16 %v750, %v742
  %v1183 = vpack.c.b16 %v751, %v743
  %v1184 = vpack.c.b16 %v752, %v744
  %v1185 = vpack.c.b16 %v753, %v745
  %v1186 = vpack.c.b16 %v754, %v746
  %v1187 = vpack.c.b16 %v755, %v747
  %v1188 = vpack.c.b16 %v756, %v748
  %v1189 = vpack.c.b16 %v765, %v757
  %v1190 = vpack.c.b16 %v766, %v758
  %v1191 = vpack.c.b16 %v767, %v759
  %v1192 = vpack.c.b16 %v768, %v760
  %v1193 = vpack.c.b16 %v769, %v761
  %v1194 = vpack.c.b16 %v770, %v762
  %v1195 = vpack.c.b16 %v771, %v763
  %v1196 = vpack.c.b16 %v772, %v764
  %v1197 = vpack.c.b16 %v781, %v773
  %v1198 = vpack.c.b16 %v782, %v774
  %v1199 = vpack.c.b16 %v783, %v775
  %v1200 = vpack.c.b16 %v784, %v776
  %v1201 = vpack.c.b16 %v785, %v777
  %v1202 = vpack.c.b16 %v786, %v778
  %v1203 = vpack.c.b16 %v787, %v779
  %v1204 = vpack.c.b16 %v788, %v780
  %v1205 = vpack.c.b16 %v797, %v789
  %v1206 = vpack.c.b16 %v798, %v790
  %v1207 = vpack.c.b16 %v799, %v791
  %v1208 = vpack.c.b16 %v800, %v792
  %v1209 = vpack.c.b16 %v801, %v793
  %v1210 = vpack.c.b16 %v802, %v794
  %v1211 = vpack.c.b16 %v803, %v795
  %v1212 = vpack.c.b16 %v804, %v796
  %v1213 = vpack.c.b16 %v813, %v805
  %v1214 = vpack.c.b16 %v814, %v806
  %v1215 = vpack.c.b16 %v815, %v807
  %v1216 = vpack.c.b16 %v816, %v808
  %v1217 = vpack.c.b16 %v817, %v809
  %v1218 = vpack.c.b16 %v818, %v810
  %v1219 = vpack.c.b16 %v819, %v811
  %v1220 = vpack.c.b16 %v820, %v812
  %v1221 = vpack.c.b16 %v829, %v821
  %v1222 = vpack.c.b16 %v830, %v822
  %v1223 = vpack.c.b16 %v831, %v823
  %v1224 = vpack.c.b16 %v832, %v824
  %v1225 = vpack.c.b16 %v833, %v825
  %v1226 = vpack.c.b16 %v834, %v826
  %v1227 = vpack.c.b16 %v835, %v827
  %v1228 = vpack.c.b16 %v836, %v828
  %v1229 = vpack.c.b16 %v845, %v837
  %v1230 = vpack.c.b16 %v846, %v838
  %v1231 = vpack.c.b16 %v847, %v839
  %v1232 = vpack.c.b16 %v848, %v840
  %v1233 = vpack.c.b16 %v849, %v841
  %v1234 = vpack.c.b16 %v850, %v842
  %v1235 = vpack.c.b16 %v851, %v843
  %v1236 = vpack.c.b16 %v852, %v844
  %v1237 = vpack.c.b16 %v861, %v853
  %v1238 = vpack.c.b16 %v862, %v854
  %v1239 = vpack.c.b16 %v863, %v855
  %v1240 = vpack.c.b16 %v864, %v856
  %v1241 = vpack.c.b16 %v865, %v857
  %v1242 = vpack.c.b16 %v866, %v858
  %v1243 = vpack.c.b16 %v867, %v859
  %v1244 = vpack.c.b16 %v868, %v860
  %v1245 = vpack.c.b16 %v877, %v869
  %v1246 = vpack.c.b16 %v878, %v870
  %v1247 = vpack.c.b16 %v879, %v871
  %v1248 = vpack.c.b16 %v880, %v872
  %v1249 = vpack.c.b16 %v881, %v873
  %v1250 = vpack.c.b16 %v882, %v874
  %v1251 = vpack.c.b16 %v883, %v875
  %v1252 = vpack.c.b16 %v884, %v876
  %v1253 = vpack.c.b16 %v893, %v885
  %v1254 = vpack.c.b16 %v894, %v886
  %v1255 = vpack.c.b16 %v895, %v887
  %v1256 = vpack.c.b16 %v896, %v888
  %v1257 = vpack.c.b16 %v897, %v889
  %v1258 = vpack.c.b16 %v898, %v890
  %v1259 = vpack.c.b16 %v899, %v891
  %v1260 = vpack.c.b16 %v900, %v892
  %v1261 = vpack.c.b16 %v909, %v901
  %v1262 = vpack.c.b16 %v910, %v902
  %v1263 = vpack.c.b16 %v911, %v903
  %v1264 = vpack.c.b16 %v912, %v904
  %v1265 = vpack.c.b16 %v913, %v905
  %v1266 = vpack.c.b16 %v914, %v906
  %v1267 = vpack.c.b16 %v915, %v907
  %v1268 = vpack.c.b16 %v916, %v908
  %v1269 = vpack.c.b16 %v925, %v917
  %v1270 = vpack.c.b16 %v926, %v918
  %v1271 = vpack.c.b16 %v927, %v919
  %v1272 = vpack.c.b16 %v928, %v920
  %v1273 = vpack.c.b16 %v929, %v921
  %v1274 = vpack.c.b16 %v930, %v922
  %v1275 = vpack.c.b16 %v931, %v923
  %v1276 = vpack.c.b16 %v932, %v924
  %v1277 = vpack.c.b16 %v941, %v933
  %v1278 = vpack.c.b16 %v942, %v934
  %v1279 = vpack.c.b16 %v943, %v935
  %v1280 = vpack.c.b16 %v944, %v936
  %v1281 = vpack.c.b16 %v945, %v937
  %v1282 = vpack.c.b16 %v946, %v938
  %v1283 = vpack.c.b16 %v947, %v939
  %v1284 = vpack.c.b16 %v948, %v940
  %v1285 = vpack.c.b16 %v957, %v949
  %v1286 = vpack.c.b16 %v958, %v950
  %v1287 = vpack.c.b16 %v959, %v951
  %v1288 = vpack.c.b16 %v960, %v952
  %v1289 = vpack.c.b16 %v961, %v953
  %v1290 = vpack.c.b16 %v962, %v954
  %v1291 = vpack.c.b16 %v963, %v955
  %v1292 = vpack.c.b16 %v964, %v956
  %v1293 = vpack.c.b16 %v973, %v965
  %v1294 = vpack.c.b16 %v974, %v966
  %v1295 = vpack.c.b16 %v975, %v967
  %v1296 = vpack.c.b16 %v976, %v968
  %v1297 = vpack.c.b16 %v977, %v969
  %v1298 = vpack.c.b16 %v978, %v970
  %v1299 = vpack.c.b16 %v979, %v971
  %v1300 = vpack.c.b16 %v980, %v972
  %v1301 = vpack.c.b16 %v989, %v981
  %v1302 = vpack.c.b16 %v990, %v982
  %v1303 = vpack.c.b16 %v991, %v983
  %v1304 = vpack.c.b16 %v992, %v984
  %v1305 = vpack.c.b16 %v993, %v985
  %v1306 = vpack.c.b16 %v994, %v986
  %v1307 = vpack.c.b16 %v995, %v987
  %v1308 = vpack.c.b16 %v996, %v988
  %v1309 = vpack.c.b16 %v1005, %v997
  %v1310 = vpack.c.b16 %v1006, %v998
  %v1311 = vpack.c.b16 %v1007, %v999
  %v1312 = vpack.c.b16 %v1008, %v1000
  %v1313 = vpack.c.b16 %v1009, %v1001
  %v1314 = vpack.c.b16 %v1010, %v1002
  %v1315 = vpack.c.b16 %v1011, %v1003
  %v1316 = vpack.c.b16 %v1012, %v1004
  %v1317 = vpack.c.b16 %v1021, %v1013
  %v1318 = vpack.c.b16 %v1022, %v1014
  %v1319 = vpack.c.b16 %v1023, %v1015
  %v1320 = vpack.c.b16 %v1024, %v1016
  %v1321 = vpack.c.b16 %v1025, %v1017
  %v1322 = vpack.c.b16 %v1026, %v1018
  %v1323 = vpack.c.b16 %v1027, %v1019
  %v1324 = vpack.c.b16 %v1028, %v1020
  %v1325 = vpack.c.b16 %v1037, %v1029
  %v1326 = vpack.c.b16 %v1038, %v1030
  %v1327 = vpack.c.b16 %v1039, %v1031
  %v1328 = vpack.c.b16 %v1040, %v1032
  %v1329 = vpack.c.b16 %v1041, %v1033
  %v1330 = vpack.c.b16 %v1042, %v1034
  %v1331 = vpack.c.b16 %v1043, %v1035
  %v1332 = vpack.c.b16 %v1044, %v1036
  %v1333 = vpack.c.b16 %v1053, %v1045
  %v1334 = vpack.c.b16 %v1054, %v1046
  %v1335 = vpack.c.b16 %v1055, %v1047
  %v1336 = vpack.c.b16 %v1056, %v1048
  %v1337 = vpack.c.b16 %v1057, %v1049
  %v1338 = vpack.c.b16 %v1058, %v1050
  %v1339 = vpack.c.b16 %v1059, %v1051
  %v1340 = vpack.c.b16 %v1060, %v1052
  %v1341 = vpack.c.b16 %v1069, %v1061
  %v1342 = vpack.c.b16 %v1070, %v1062
  %v1343 = vpack.c.b16 %v1071, %v1063
  %v1344 = vpack.c.b16 %v1072, %v1064
  %v1345 = vpack.c.b16 %v1073, %v1065
  %v1346 = vpack.c.b16 %v1074, %v1066
  %v1347 = vpack.c.b16 %v1075, %v1067
  %v1348 = vpack.c.b16 %v1076, %v1068
  %v1349 = vpack.c.b16 %v1085, %v1077
  %v1350 = vpack.c.b16 %v1086, %v1078
  %v1351 = vpack.c.b16 %v1087, %v1079
  %v1352 = vpack.c.b16 %v1088, %v1080
  %v1353 = vpack.c.b16 %v1089, %v1081
  %v1354 = vpack.c.b16 %v1090, %v1082
  %v1355 = vpack.c.b16 %v1091, %v1083
  %v1356 = vpack.c.b16 %v1092, %v1084
  %v1357 = vpack.c.b16 %v1101, %v1093
  %v1358 = vpack.c.b16 %v1102, %v1094
  %v1359 = vpack.c.b16 %v1103, %v1095
  %v1360 = vpack.c.b16 %v1104, %v1096
  %v1361 = vpack.c.b16 %v1105, %v1097
  %v1362 = vpack.c.b16 %v1106, %v1098
  %v1363 = vpack.c.b16 %v1107, %v1099
  %v1364 = vpack.c.b16 %v1108, %v1100
  %1621 = vmatprep.subr.bf16.mxu0 %v1110
  %1622 = vmatpush1.bf16.msra.mxu0 %v1109
  %1623 = vmatprep.subr.bf16.mxu0 %v1118
  %1624 = vmatpush1.bf16.msra.mxu0 %v1117
  %1625 = vmatprep.subr.bf16.mxu0 %v1126
  %1626 = vmatpush1.bf16.msra.mxu0 %v1125
  %1627 = vmatprep.subr.bf16.mxu0 %v1134
  %1628 = vmatpush1.bf16.msra.mxu0 %v1133
  %1629 = vmatprep.subr.bf16.mxu0 %v1142
  %1630 = vmatpush1.bf16.msra.mxu0 %v1141
  %1631 = vmatprep.subr.bf16.mxu0 %v1150
  %1632 = vmatpush1.bf16.msra.mxu0 %v1149
  %1633 = vmatprep.subr.bf16.mxu0 %v1158
  %1634 = vmatpush1.bf16.msra.mxu0 %v1157
  %1635 = vmatprep.subr.bf16.mxu0 %v1166
  %1636 = vmatpush1.bf16.msra.mxu0 %v1165
  %1637 = vmatprep.subr.bf16.mxu0 %v1174
  %1638 = vmatpush1.bf16.msra.mxu0 %v1173
  %1639 = vmatprep.subr.bf16.mxu0 %v1182
  %1640 = vmatpush1.bf16.msra.mxu0 %v1181
  %1641 = vmatprep.subr.bf16.mxu0 %v1190
  %1642 = vmatpush1.bf16.msra.mxu0 %v1189
  %1643 = vmatprep.subr.bf16.mxu0 %v1198
  %1644 = vmatpush1.bf16.msra.mxu0 %v1197
  %1645 = vmatprep.subr.bf16.mxu0 %v1206
  %1646 = vmatpush1.bf16.msra.mxu0 %v1205
  %1647 = vmatprep.subr.bf16.mxu0 %v1214
  %1648 = vmatpush1.bf16.msra.mxu0 %v1213
  %1649 = vmatprep.subr.bf16.mxu0 %v1222
  %1650 = vmatpush1.bf16.msra.mxu0 %v1221
  %1651 = vmatprep.subr.bf16.mxu0 %v1230
  %1652 = vmatpush1.bf16.msra.mxu0 %v1229
  %1653 = vmatprep.mubr.bf16.mxu0 %v334
  %1654 = vmatmul.mubr.bf16.gmra.mrb[0].mxu0 %v333
  %v1655 = vpop.f32.mrb[0].mxu0
  %v1656 = vadd.f32 %v290, %v1655
  %v1657 = vpop.f32.mrb[0].mxu0
  %v1658 = vadd.f32 %v294, %v1657
  %v1659 = vpop.f32.mrb[0].mxu0
  %v1660 = vpop.f32.mrb[0].mxu0
  %1661 = vdwg.mxu0
  %1662 = vmatprep.subr.bf16.mxu0 %v1238
  %1663 = vmatpush1.bf16.msra.mxu0 %v1237
  %1664 = vmatprep.subr.bf16.mxu0 %v1246
  %1665 = vmatpush1.bf16.msra.mxu0 %v1245
  %1666 = vmatprep.subr.bf16.mxu0 %v1254
  %1667 = vmatpush1.bf16.msra.mxu0 %v1253
  %1668 = vmatprep.subr.bf16.mxu0 %v1262
  %1669 = vmatpush1.bf16.msra.mxu0 %v1261
  %1670 = vmatprep.subr.bf16.mxu0 %v1270
  %1671 = vmatpush1.bf16.msra.mxu0 %v1269
  %1672 = vmatprep.subr.bf16.mxu0 %v1278
  %1673 = vmatpush1.bf16.msra.mxu0 %v1277
  %1674 = vmatprep.subr.bf16.mxu0 %v1286
  %1675 = vmatpush1.bf16.msra.mxu0 %v1285
  %1676 = vmatprep.subr.bf16.mxu0 %v1294
  %1677 = vmatpush1.bf16.msra.mxu0 %v1293
  %1678 = vmatprep.subr.bf16.mxu0 %v1302
  %1679 = vmatpush1.bf16.msra.mxu0 %v1301
  %1680 = vmatprep.subr.bf16.mxu0 %v1310
  %1681 = vmatpush1.bf16.msra.mxu0 %v1309
  %1682 = vmatprep.subr.bf16.mxu0 %v1318
  %1683 = vmatpush1.bf16.msra.mxu0 %v1317
  %1684 = vmatprep.subr.bf16.mxu0 %v1326
  %1685 = vmatpush1.bf16.msra.mxu0 %v1325
  %1686 = vmatprep.subr.bf16.mxu0 %v1334
  %1687 = vmatpush1.bf16.msra.mxu0 %v1333
  %1688 = vmatprep.subr.bf16.mxu0 %v1342
  %1689 = vmatpush1.bf16.msra.mxu0 %v1341
  %1690 = vmatprep.subr.bf16.mxu0 %v1350
  %1691 = vmatpush1.bf16.msra.mxu0 %v1349
  %1692 = vmatprep.subr.bf16.mxu0 %v1358
  %1693 = vmatpush1.bf16.msra.mxu0 %v1357
  %1694 = vmatprep.mubr.bf16.mxu0 %v336
  %1695 = vmatmul.mubr.bf16.gmra.mrb[0].mxu0 %v335
  %v1696 = vpop.f32.mrb[0].mxu0
  %v1697 = vadd.f32 %v1656, %v1696
  %v1698 = vpop.f32.mrb[0].mxu0
  %v1699 = vadd.f32 %v1658, %v1698
  %v1700 = vpop.f32.mrb[0].mxu0
  %v1701 = vpop.f32.mrb[0].mxu0
  %1702 = vdwg.mxu0
  %1703 = vmatprep.subr.bf16.mxu0 %v1112
  %1704 = vmatpush1.bf16.msra.mxu0 %v1111
  %1705 = vmatprep.subr.bf16.mxu0 %v1120
  %1706 = vmatpush1.bf16.msra.mxu0 %v1119
  %1707 = vmatprep.subr.bf16.mxu0 %v1128
  %1708 = vmatpush1.bf16.msra.mxu0 %v1127
  %1709 = vmatprep.subr.bf16.mxu0 %v1136
  %1710 = vmatpush1.bf16.msra.mxu0 %v1135
  %1711 = vmatprep.subr.bf16.mxu0 %v1144
  %1712 = vmatpush1.bf16.msra.mxu0 %v1143
  %1713 = vmatprep.subr.bf16.mxu0 %v1152
  %1714 = vmatpush1.bf16.msra.mxu0 %v1151
  %1715 = vmatprep.subr.bf16.mxu0 %v1160
  %1716 = vmatpush1.bf16.msra.mxu0 %v1159
  %1717 = vmatprep.subr.bf16.mxu0 %v1168
  %1718 = vmatpush1.bf16.msra.mxu0 %v1167
  %1719 = vmatprep.subr.bf16.mxu0 %v1176
  %1720 = vmatpush1.bf16.msra.mxu0 %v1175
  %1721 = vmatprep.subr.bf16.mxu0 %v1184
  %1722 = vmatpush1.bf16.msra.mxu0 %v1183
  %1723 = vmatprep.subr.bf16.mxu0 %v1192
  %1724 = vmatpush1.bf16.msra.mxu0 %v1191
  %1725 = vmatprep.subr.bf16.mxu0 %v1200
  %1726 = vmatpush1.bf16.msra.mxu0 %v1199
  %1727 = vmatprep.subr.bf16.mxu0 %v1208
  %1728 = vmatpush1.bf16.msra.mxu0 %v1207
  %1729 = vmatprep.subr.bf16.mxu0 %v1216
  %1730 = vmatpush1.bf16.msra.mxu0 %v1215
  %1731 = vmatprep.subr.bf16.mxu0 %v1224
  %1732 = vmatpush1.bf16.msra.mxu0 %v1223
  %1733 = vmatprep.subr.bf16.mxu0 %v1232
  %1734 = vmatpush1.bf16.msra.mxu0 %v1231
  %1735 = vmatprep.mubr.bf16.mxu0 %v334
  %1736 = vmatmul.mubr.bf16.gmra.mrb[0].mxu0 %v333
  %v1737 = vpop.f32.mrb[0].mxu0
  %v1738 = vadd.f32 %v298, %v1737
  %v1739 = vpop.f32.mrb[0].mxu0
  %v1740 = vadd.f32 %v302, %v1739
  %v1741 = vpop.f32.mrb[0].mxu0
  %v1742 = vpop.f32.mrb[0].mxu0
  %1743 = vdwg.mxu0
  %1744 = vmatprep.subr.bf16.mxu0 %v1240
  %1745 = vmatpush1.bf16.msra.mxu0 %v1239
  %1746 = vmatprep.subr.bf16.mxu0 %v1248
  %1747 = vmatpush1.bf16.msra.mxu0 %v1247
  %1748 = vmatprep.subr.bf16.mxu0 %v1256
  %1749 = vmatpush1.bf16.msra.mxu0 %v1255
  %1750 = vmatprep.subr.bf16.mxu0 %v1264
  %1751 = vmatpush1.bf16.msra.mxu0 %v1263
  %1752 = vmatprep.subr.bf16.mxu0 %v1272
  %1753 = vmatpush1.bf16.msra.mxu0 %v1271
  %1754 = vmatprep.subr.bf16.mxu0 %v1280
  %1755 = vmatpush1.bf16.msra.mxu0 %v1279
  %1756 = vmatprep.subr.bf16.mxu0 %v1288
  %1757 = vmatpush1.bf16.msra.mxu0 %v1287
  %1758 = vmatprep.subr.bf16.mxu0 %v1296
  %1759 = vmatpush1.bf16.msra.mxu0 %v1295
  %1760 = vmatprep.subr.bf16.mxu0 %v1304
  %1761 = vmatpush1.bf16.msra.mxu0 %v1303
  %1762 = vmatprep.subr.bf16.mxu0 %v1312
  %1763 = vmatpush1.bf16.msra.mxu0 %v1311
  %1764 = vmatprep.subr.bf16.mxu0 %v1320
  %1765 = vmatpush1.bf16.msra.mxu0 %v1319
  %1766 = vmatprep.subr.bf16.mxu0 %v1328
  %1767 = vmatpush1.bf16.msra.mxu0 %v1327
  %1768 = vmatprep.subr.bf16.mxu0 %v1336
  %1769 = vmatpush1.bf16.msra.mxu0 %v1335
  %1770 = vmatprep.subr.bf16.mxu0 %v1344
  %1771 = vmatpush1.bf16.msra.mxu0 %v1343
  %1772 = vmatprep.subr.bf16.mxu0 %v1352
  %1773 = vmatpush1.bf16.msra.mxu0 %v1351
  %1774 = vmatprep.subr.bf16.mxu0 %v1360
  %1775 = vmatpush1.bf16.msra.mxu0 %v1359
  %1776 = vmatprep.mubr.bf16.mxu0 %v336
  %1777 = vmatmul.mubr.bf16.gmra.mrb[0].mxu0 %v335
  %v1778 = vpop.f32.mrb[0].mxu0
  %v1779 = vadd.f32 %v1738, %v1778
  %v1780 = vpop.f32.mrb[0].mxu0
  %v1781 = vadd.f32 %v1740, %v1780
  %v1782 = vpop.f32.mrb[0].mxu0
  %v1783 = vpop.f32.mrb[0].mxu0
  %1784 = vdwg.mxu0
  %1785 = vmatprep.subr.bf16.mxu0 %v1114
  %1786 = vmatpush1.bf16.msra.mxu0 %v1113
  %1787 = vmatprep.subr.bf16.mxu0 %v1122
  %1788 = vmatpush1.bf16.msra.mxu0 %v1121
  %1789 = vmatprep.subr.bf16.mxu0 %v1130
  %1790 = vmatpush1.bf16.msra.mxu0 %v1129
  %1791 = vmatprep.subr.bf16.mxu0 %v1138
  %1792 = vmatpush1.bf16.msra.mxu0 %v1137
  %1793 = vmatprep.subr.bf16.mxu0 %v1146
  %1794 = vmatpush1.bf16.msra.mxu0 %v1145
  %1795 = vmatprep.subr.bf16.mxu0 %v1154
  %1796 = vmatpush1.bf16.msra.mxu0 %v1153
  %1797 = vmatprep.subr.bf16.mxu0 %v1162
  %1798 = vmatpush1.bf16.msra.mxu0 %v1161
  %1799 = vmatprep.subr.bf16.mxu0 %v1170
  %1800 = vmatpush1.bf16.msra.mxu0 %v1169
  %1801 = vmatprep.subr.bf16.mxu0 %v1178
  %1802 = vmatpush1.bf16.msra.mxu0 %v1177
  %1803 = vmatprep.subr.bf16.mxu0 %v1186
  %1804 = vmatpush1.bf16.msra.mxu0 %v1185
  %1805 = vmatprep.subr.bf16.mxu0 %v1194
  %1806 = vmatpush1.bf16.msra.mxu0 %v1193
  %1807 = vmatprep.subr.bf16.mxu0 %v1202
  %1808 = vmatpush1.bf16.msra.mxu0 %v1201
  %1809 = vmatprep.subr.bf16.mxu0 %v1210
  %1810 = vmatpush1.bf16.msra.mxu0 %v1209
  %1811 = vmatprep.subr.bf16.mxu0 %v1218
  %1812 = vmatpush1.bf16.msra.mxu0 %v1217
  %1813 = vmatprep.subr.bf16.mxu0 %v1226
  %1814 = vmatpush1.bf16.msra.mxu0 %v1225
  %1815 = vmatprep.subr.bf16.mxu0 %v1234
  %1816 = vmatpush1.bf16.msra.mxu0 %v1233
  %1817 = vmatprep.mubr.bf16.mxu0 %v334
  %1818 = vmatmul.mubr.bf16.gmra.mrb[0].mxu0 %v333
  %v1819 = vpop.f32.mrb[0].mxu0
  %v1820 = vadd.f32 %v306, %v1819
  %v1821 = vpop.f32.mrb[0].mxu0
  %v1822 = vadd.f32 %v310, %v1821
  %v1823 = vpop.f32.mrb[0].mxu0
  %v1824 = vpop.f32.mrb[0].mxu0
  %1825 = vdwg.mxu0
  %1826 = vmatprep.subr.bf16.mxu0 %v1242
  %1827 = vmatpush1.bf16.msra.mxu0 %v1241
  %1828 = vmatprep.subr.bf16.mxu0 %v1250
  %1829 = vmatpush1.bf16.msra.mxu0 %v1249
  %1830 = vmatprep.subr.bf16.mxu0 %v1258
  %1831 = vmatpush1.bf16.msra.mxu0 %v1257
  %1832 = vmatprep.subr.bf16.mxu0 %v1266
  %1833 = vmatpush1.bf16.msra.mxu0 %v1265
  %1834 = vmatprep.subr.bf16.mxu0 %v1274
  %1835 = vmatpush1.bf16.msra.mxu0 %v1273
  %1836 = vmatprep.subr.bf16.mxu0 %v1282
  %1837 = vmatpush1.bf16.msra.mxu0 %v1281
  %1838 = vmatprep.subr.bf16.mxu0 %v1290
  %1839 = vmatpush1.bf16.msra.mxu0 %v1289
  %1840 = vmatprep.subr.bf16.mxu0 %v1298
  %1841 = vmatpush1.bf16.msra.mxu0 %v1297
  %1842 = vmatprep.subr.bf16.mxu0 %v1306
  %1843 = vmatpush1.bf16.msra.mxu0 %v1305
  %1844 = vmatprep.subr.bf16.mxu0 %v1314
  %1845 = vmatpush1.bf16.msra.mxu0 %v1313
  %1846 = vmatprep.subr.bf16.mxu0 %v1322
  %1847 = vmatpush1.bf16.msra.mxu0 %v1321
  %1848 = vmatprep.subr.bf16.mxu0 %v1330
  %1849 = vmatpush1.bf16.msra.mxu0 %v1329
  %1850 = vmatprep.subr.bf16.mxu0 %v1338
  %1851 = vmatpush1.bf16.msra.mxu0 %v1337
  %1852 = vmatprep.subr.bf16.mxu0 %v1346
  %1853 = vmatpush1.bf16.msra.mxu0 %v1345
  %1854 = vmatprep.subr.bf16.mxu0 %v1354
  %1855 = vmatpush1.bf16.msra.mxu0 %v1353
  %1856 = vmatprep.subr.bf16.mxu0 %v1362
  %1857 = vmatpush1.bf16.msra.mxu0 %v1361
  %1858 = vmatprep.mubr.bf16.mxu0 %v336
  %1859 = vmatmul.mubr.bf16.gmra.mrb[0].mxu0 %v335
  %v1860 = vpop.f32.mrb[0].mxu0
  %v1861 = vadd.f32 %v1820, %v1860
  %v1862 = vpop.f32.mrb[0].mxu0
  %v1863 = vadd.f32 %v1822, %v1862
  %v1864 = vpop.f32.mrb[0].mxu0
  %v1865 = vpop.f32.mrb[0].mxu0
  %1866 = vdwg.mxu0
  %1867 = vmatprep.subr.bf16.mxu0 %v1116
  %1868 = vmatpush1.bf16.msra.mxu0 %v1115
  %1869 = vmatprep.subr.bf16.mxu0 %v1124
  %1870 = vmatpush1.bf16.msra.mxu0 %v1123
  %1871 = vmatprep.subr.bf16.mxu0 %v1132
  %1872 = vmatpush1.bf16.msra.mxu0 %v1131
  %1873 = vmatprep.subr.bf16.mxu0 %v1140
  %1874 = vmatpush1.bf16.msra.mxu0 %v1139
  %1875 = vmatprep.subr.bf16.mxu0 %v1148
  %1876 = vmatpush1.bf16.msra.mxu0 %v1147
  %1877 = vmatprep.subr.bf16.mxu0 %v1156
  %1878 = vmatpush1.bf16.msra.mxu0 %v1155
  %1879 = vmatprep.subr.bf16.mxu0 %v1164
  %1880 = vmatpush1.bf16.msra.mxu0 %v1163
  %1881 = vmatprep.subr.bf16.mxu0 %v1172
  %1882 = vmatpush1.bf16.msra.mxu0 %v1171
  %1883 = vmatprep.subr.bf16.mxu0 %v1180
  %1884 = vmatpush1.bf16.msra.mxu0 %v1179
  %1885 = vmatprep.subr.bf16.mxu0 %v1188
  %1886 = vmatpush1.bf16.msra.mxu0 %v1187
  %1887 = vmatprep.subr.bf16.mxu0 %v1196
  %1888 = vmatpush1.bf16.msra.mxu0 %v1195
  %1889 = vmatprep.subr.bf16.mxu0 %v1204
  %1890 = vmatpush1.bf16.msra.mxu0 %v1203
  %1891 = vmatprep.subr.bf16.mxu0 %v1212
  %1892 = vmatpush1.bf16.msra.mxu0 %v1211
  %1893 = vmatprep.subr.bf16.mxu0 %v1220
  %1894 = vmatpush1.bf16.msra.mxu0 %v1219
  %1895 = vmatprep.subr.bf16.mxu0 %v1228
  %1896 = vmatpush1.bf16.msra.mxu0 %v1227
  %1897 = vmatprep.subr.bf16.mxu0 %v1236
  %1898 = vmatpush1.bf16.msra.mxu0 %v1235
  %1899 = vmatprep.mubr.bf16.mxu0 %v334
  %1900 = vmatmul.mubr.bf16.gmra.mrb[0].mxu0 %v333
  %v1901 = vpop.f32.mrb[0].mxu0
  %v1902 = vadd.f32 %v314, %v1901
  %v1903 = vpop.f32.mrb[0].mxu0
  %v1904 = vadd.f32 %v318, %v1903
  %v1905 = vpop.f32.mrb[0].mxu0
  %v1906 = vpop.f32.mrb[0].mxu0
  %1907 = vdwg.mxu0
  %1908 = vmatprep.subr.bf16.mxu0 %v1244
  %1909 = vmatpush1.bf16.msra.mxu0 %v1243
  %1910 = vmatprep.subr.bf16.mxu0 %v1252
  %1911 = vmatpush1.bf16.msra.mxu0 %v1251
  %1912 = vmatprep.subr.bf16.mxu0 %v1260
  %1913 = vmatpush1.bf16.msra.mxu0 %v1259
  %1914 = vmatprep.subr.bf16.mxu0 %v1268
  %1915 = vmatpush1.bf16.msra.mxu0 %v1267
  %1916 = vmatprep.subr.bf16.mxu0 %v1276
  %1917 = vmatpush1.bf16.msra.mxu0 %v1275
  %1918 = vmatprep.subr.bf16.mxu0 %v1284
  %1919 = vmatpush1.bf16.msra.mxu0 %v1283
  %1920 = vmatprep.subr.bf16.mxu0 %v1292
  %1921 = vmatpush1.bf16.msra.mxu0 %v1291
  %1922 = vmatprep.subr.bf16.mxu0 %v1300
  %1923 = vmatpush1.bf16.msra.mxu0 %v1299
  %1924 = vmatprep.subr.bf16.mxu0 %v1308
  %1925 = vmatpush1.bf16.msra.mxu0 %v1307
  %1926 = vmatprep.subr.bf16.mxu0 %v1316
  %1927 = vmatpush1.bf16.msra.mxu0 %v1315
  %1928 = vmatprep.subr.bf16.mxu0 %v1324
  %1929 = vmatpush1.bf16.msra.mxu0 %v1323
  %1930 = vmatprep.subr.bf16.mxu0 %v1332
  %1931 = vmatpush1.bf16.msra.mxu0 %v1331
  %1932 = vmatprep.subr.bf16.mxu0 %v1340
  %1933 = vmatpush1.bf16.msra.mxu0 %v1339
  %1934 = vmatprep.subr.bf16.mxu0 %v1348
  %1935 = vmatpush1.bf16.msra.mxu0 %v1347
  %1936 = vmatprep.subr.bf16.mxu0 %v1356
  %1937 = vmatpush1.bf16.msra.mxu0 %v1355
  %1938 = vmatprep.subr.bf16.mxu0 %v1364
  %1939 = vmatpush1.bf16.msra.mxu0 %v1363
  %1940 = vmatprep.mubr.bf16.mxu0 %v336
  %1941 = vmatmul.mubr.bf16.gmra.mrb[0].mxu0 %v335
  %v1942 = vpop.f32.mrb[0].mxu0
  %v1943 = vadd.f32 %v1902, %v1942
  %v1944 = vpop.f32.mrb[0].mxu0
  %v1945 = vadd.f32 %v1904, %v1944
  %v1946 = vpop.f32.mrb[0].mxu0
  %v1947 = vpop.f32.mrb[0].mxu0
  %1948 = vdwg.mxu0
  %v1949 = vmax.f32 %v1697, 0.0
  %v1950 = vmax.f32 %v1699, 0.0
  %v1951 = vmax.f32 %v1779, 0.0
  %v1952 = vmax.f32 %v1781, 0.0
  %v1953 = vmax.f32 %v1861, 0.0
  %v1954 = vmax.f32 %v1863, 0.0
  %v1955 = vmax.f32 %v1943, 0.0
  %v1956 = vmax.f32 %v1945, 0.0
  %v1957 = vpack.c.bf16 %v1949, %v1949
  %v1958 = vpack.c.bf16 %v1950, %v1950
  %v1959 = vpack.c.bf16 %v1951, %v1951
  %v1960 = vpack.c.bf16 %v1952, %v1952
  %v1961 = vpack.c.bf16 %v1953, %v1953
  %v1962 = vpack.c.bf16 %v1954, %v1954
  %v1963 = vpack.c.bf16 %v1955, %v1955
  %v1964 = vpack.c.bf16 %v1956, %v1956
  %v1965 = vld [vmem:[%s3] sm:$0xff]
  %v1966 = vld [vmem:[%s3 + $0x8] sm:$0xff]
  %v1967 = vld [vmem:[%s3 + $0x10] sm:$0xff]
  %v1968 = vld [vmem:[%s3 + $0x18] sm:$0xff]
  %v1969 = vld [vmem:[%s3 + $0x20] sm:$0xff]
  %v1970 = vld [vmem:[%s3 + $0x28] sm:$0xff]
  %v1971 = vld [vmem:[%s3 + $0x30] sm:$0xff]
  %v1972 = vld [vmem:[%s3 + $0x38] sm:$0xff]
  %v1973 = vld [vmem:[%s3 + $0x40] sm:$0xff]
  %v1974 = vld [vmem:[%s3 + $0x48] sm:$0xff]
  %v1975 = vld [vmem:[%s3 + $0x50] sm:$0xff]
  %v1976 = vld [vmem:[%s3 + $0x58] sm:$0xff]
  %v1977 = vld [vmem:[%s3 + $0x60] sm:$0xff]
  %v1978 = vld [vmem:[%s3 + $0x68] sm:$0xff]
  %v1979 = vld [vmem:[%s3 + $0x70] sm:$0xff]
  %v1980 = vld [vmem:[%s3 + $0x78] sm:$0xff]
  %v1981 = vld [vmem:[%s3 + $0x80] sm:$0xff]
  %v1982 = vld [vmem:[%s3 + $0x88] sm:$0xff]
  %v1983 = vld [vmem:[%s3 + $0x90] sm:$0xff]
  %v1984 = vld [vmem:[%s3 + $0x98] sm:$0xff]
  %v1985 = vld [vmem:[%s3 + $0xa0] sm:$0xff]
  %v1986 = vld [vmem:[%s3 + $0xa8] sm:$0xff]
  %v1987 = vld [vmem:[%s3 + $0xb0] sm:$0xff]
  %v1988 = vld [vmem:[%s3 + $0xb8] sm:$0xff]
  %v1989 = vld [vmem:[%s3 + $0xc0] sm:$0xff]
  %v1990 = vld [vmem:[%s3 + $0xc8] sm:$0xff]
  %v1991 = vld [vmem:[%s3 + $0xd0] sm:$0xff]
  %v1992 = vld [vmem:[%s3 + $0xd8] sm:$0xff]
  %v1993 = vld [vmem:[%s3 + $0xe0] sm:$0xff]
  %v1994 = vld [vmem:[%s3 + $0xe8] sm:$0xff]
  %v1995 = vld [vmem:[%s3 + $0xf0] sm:$0xff]
  %v1996 = vld [vmem:[%s3 + $0xf8] sm:$0xff]
  %v1997 = vld [vmem:[%s3 + $0x100] sm:$0xff]
  %v1998 = vld [vmem:[%s3 + $0x108] sm:$0xff]
  %v1999 = vld [vmem:[%s3 + $0x110] sm:$0xff]
  %v2000 = vld [vmem:[%s3 + $0x118] sm:$0xff]
  %v2001 = vld [vmem:[%s3 + $0x120] sm:$0xff]
  %v2002 = vld [vmem:[%s3 + $0x128] sm:$0xff]
  %v2003 = vld [vmem:[%s3 + $0x130] sm:$0xff]
  %v2004 = vld [vmem:[%s3 + $0x138] sm:$0xff]
  %v2005 = vld [vmem:[%s3 + $0x140] sm:$0xff]
  %v2006 = vld [vmem:[%s3 + $0x148] sm:$0xff]
  %v2007 = vld [vmem:[%s3 + $0x150] sm:$0xff]
  %v2008 = vld [vmem:[%s3 + $0x158] sm:$0xff]
  %v2009 = vld [vmem:[%s3 + $0x160] sm:$0xff]
  %v2010 = vld [vmem:[%s3 + $0x168] sm:$0xff]
  %v2011 = vld [vmem:[%s3 + $0x170] sm:$0xff]
  %v2012 = vld [vmem:[%s3 + $0x178] sm:$0xff]
  %v2013 = vld [vmem:[%s3 + $0x180] sm:$0xff]
  %v2014 = vld [vmem:[%s3 + $0x188] sm:$0xff]
  %v2015 = vld [vmem:[%s3 + $0x190] sm:$0xff]
  %v2016 = vld [vmem:[%s3 + $0x198] sm:$0xff]
  %v2017 = vld [vmem:[%s3 + $0x1a0] sm:$0xff]
  %v2018 = vld [vmem:[%s3 + $0x1a8] sm:$0xff]
  %v2019 = vld [vmem:[%s3 + $0x1b0] sm:$0xff]
  %v2020 = vld [vmem:[%s3 + $0x1b8] sm:$0xff]
  %v2021 = vld [vmem:[%s3 + $0x1c0] sm:$0xff]
  %v2022 = vld [vmem:[%s3 + $0x1c8] sm:$0xff]
  %v2023 = vld [vmem:[%s3 + $0x1d0] sm:$0xff]
  %v2024 = vld [vmem:[%s3 + $0x1d8] sm:$0xff]
  %v2025 = vld [vmem:[%s3 + $0x1e0] sm:$0xff]
  %v2026 = vld [vmem:[%s3 + $0x1e8] sm:$0xff]
  %v2027 = vld [vmem:[%s3 + $0x1f0] sm:$0xff]
  %v2028 = vld [vmem:[%s3 + $0x1f8] sm:$0xff]
  %v2029 = vld [vmem:[%s3 + $0x200] sm:$0xff]
  %v2030 = vld [vmem:[%s3 + $0x208] sm:$0xff]
  %v2031 = vld [vmem:[%s3 + $0x210] sm:$0xff]
  %v2032 = vld [vmem:[%s3 + $0x218] sm:$0xff]
  %v2033 = vld [vmem:[%s3 + $0x220] sm:$0xff]
  %v2034 = vld [vmem:[%s3 + $0x228] sm:$0xff]
  %v2035 = vld [vmem:[%s3 + $0x230] sm:$0xff]
  %v2036 = vld [vmem:[%s3 + $0x238] sm:$0xff]
  %v2037 = vld [vmem:[%s3 + $0x240] sm:$0xff]
  %v2038 = vld [vmem:[%s3 + $0x248] sm:$0xff]
  %v2039 = vld [vmem:[%s3 + $0x250] sm:$0xff]
  %v2040 = vld [vmem:[%s3 + $0x258] sm:$0xff]
  %v2041 = vld [vmem:[%s3 + $0x260] sm:$0xff]
  %v2042 = vld [vmem:[%s3 + $0x268] sm:$0xff]
  %v2043 = vld [vmem:[%s3 + $0x270] sm:$0xff]
  %v2044 = vld [vmem:[%s3 + $0x278] sm:$0xff]
  %v2045 = vld [vmem:[%s3 + $0x280] sm:$0xff]
  %v2046 = vld [vmem:[%s3 + $0x288] sm:$0xff]
  %v2047 = vld [vmem:[%s3 + $0x290] sm:$0xff]
  %v2048 = vld [vmem:[%s3 + $0x298] sm:$0xff]
  %v2049 = vld [vmem:[%s3 + $0x2a0] sm:$0xff]
  %v2050 = vld [vmem:[%s3 + $0x2a8] sm:$0xff]
  %v2051 = vld [vmem:[%s3 + $0x2b0] sm:$0xff]
  %v2052 = vld [vmem:[%s3 + $0x2b8] sm:$0xff]
  %v2053 = vld [vmem:[%s3 + $0x2c0] sm:$0xff]
  %v2054 = vld [vmem:[%s3 + $0x2c8] sm:$0xff]
  %v2055 = vld [vmem:[%s3 + $0x2d0] sm:$0xff]
  %v2056 = vld [vmem:[%s3 + $0x2d8] sm:$0xff]
  %v2057 = vld [vmem:[%s3 + $0x2e0] sm:$0xff]
  %v2058 = vld [vmem:[%s3 + $0x2e8] sm:$0xff]
  %v2059 = vld [vmem:[%s3 + $0x2f0] sm:$0xff]
  %v2060 = vld [vmem:[%s3 + $0x2f8] sm:$0xff]
  %v2061 = vld [vmem:[%s3 + $0x300] sm:$0xff]
  %v2062 = vld [vmem:[%s3 + $0x308] sm:$0xff]
  %v2063 = vld [vmem:[%s3 + $0x310] sm:$0xff]
  %v2064 = vld [vmem:[%s3 + $0x318] sm:$0xff]
  %v2065 = vld [vmem:[%s3 + $0x320] sm:$0xff]
  %v2066 = vld [vmem:[%s3 + $0x328] sm:$0xff]
  %v2067 = vld [vmem:[%s3 + $0x330] sm:$0xff]
  %v2068 = vld [vmem:[%s3 + $0x338] sm:$0xff]
  %v2069 = vld [vmem:[%s3 + $0x340] sm:$0xff]
  %v2070 = vld [vmem:[%s3 + $0x348] sm:$0xff]
  %v2071 = vld [vmem:[%s3 + $0x350] sm:$0xff]
  %v2072 = vld [vmem:[%s3 + $0x358] sm:$0xff]
  %v2073 = vld [vmem:[%s3 + $0x360] sm:$0xff]
  %v2074 = vld [vmem:[%s3 + $0x368] sm:$0xff]
  %v2075 = vld [vmem:[%s3 + $0x370] sm:$0xff]
  %v2076 = vld [vmem:[%s3 + $0x378] sm:$0xff]
  %v2077 = vld [vmem:[%s3 + $0x380] sm:$0xff]
  %v2078 = vld [vmem:[%s3 + $0x388] sm:$0xff]
  %v2079 = vld [vmem:[%s3 + $0x390] sm:$0xff]
  %v2080 = vld [vmem:[%s3 + $0x398] sm:$0xff]
  %v2081 = vld [vmem:[%s3 + $0x3a0] sm:$0xff]
  %v2082 = vld [vmem:[%s3 + $0x3a8] sm:$0xff]
  %v2083 = vld [vmem:[%s3 + $0x3b0] sm:$0xff]
  %v2084 = vld [vmem:[%s3 + $0x3b8] sm:$0xff]
  %v2085 = vld [vmem:[%s3 + $0x3c0] sm:$0xff]
  %v2086 = vld [vmem:[%s3 + $0x3c8] sm:$0xff]
  %v2087 = vld [vmem:[%s3 + $0x3d0] sm:$0xff]
  %v2088 = vld [vmem:[%s3 + $0x3d8] sm:$0xff]
  %v2089 = vld [vmem:[%s3 + $0x3e0] sm:$0xff]
  %v2090 = vld [vmem:[%s3 + $0x3e8] sm:$0xff]
  %v2091 = vld [vmem:[%s3 + $0x3f0] sm:$0xff]
  %v2092 = vld [vmem:[%s3 + $0x3f8] sm:$0xff]
  %v2093 = vld [vmem:[%s3 + $0x400] sm:$0xff]
  %v2094 = vld [vmem:[%s3 + $0x408] sm:$0xff]
  %v2095 = vld [vmem:[%s3 + $0x410] sm:$0xff]
  %v2096 = vld [vmem:[%s3 + $0x418] sm:$0xff]
  %v2097 = vld [vmem:[%s3 + $0x420] sm:$0xff]
  %v2098 = vld [vmem:[%s3 + $0x428] sm:$0xff]
  %v2099 = vld [vmem:[%s3 + $0x430] sm:$0xff]
  %v2100 = vld [vmem:[%s3 + $0x438] sm:$0xff]
  %v2101 = vld [vmem:[%s3 + $0x440] sm:$0xff]
  %v2102 = vld [vmem:[%s3 + $0x448] sm:$0xff]
  %v2103 = vld [vmem:[%s3 + $0x450] sm:$0xff]
  %v2104 = vld [vmem:[%s3 + $0x458] sm:$0xff]
  %v2105 = vld [vmem:[%s3 + $0x460] sm:$0xff]
  %v2106 = vld [vmem:[%s3 + $0x468] sm:$0xff]
  %v2107 = vld [vmem:[%s3 + $0x470] sm:$0xff]
  %v2108 = vld [vmem:[%s3 + $0x478] sm:$0xff]
  %v2109 = vld [vmem:[%s3 + $0x480] sm:$0xff]
  %v2110 = vld [vmem:[%s3 + $0x488] sm:$0xff]
  %v2111 = vld [vmem:[%s3 + $0x490] sm:$0xff]
  %v2112 = vld [vmem:[%s3 + $0x498] sm:$0xff]
  %v2113 = vld [vmem:[%s3 + $0x4a0] sm:$0xff]
  %v2114 = vld [vmem:[%s3 + $0x4a8] sm:$0xff]
  %v2115 = vld [vmem:[%s3 + $0x4b0] sm:$0xff]
  %v2116 = vld [vmem:[%s3 + $0x4b8] sm:$0xff]
  %v2117 = vld [vmem:[%s3 + $0x4c0] sm:$0xff]
  %v2118 = vld [vmem:[%s3 + $0x4c8] sm:$0xff]
  %v2119 = vld [vmem:[%s3 + $0x4d0] sm:$0xff]
  %v2120 = vld [vmem:[%s3 + $0x4d8] sm:$0xff]
  %v2121 = vld [vmem:[%s3 + $0x4e0] sm:$0xff]
  %v2122 = vld [vmem:[%s3 + $0x4e8] sm:$0xff]
  %v2123 = vld [vmem:[%s3 + $0x4f0] sm:$0xff]
  %v2124 = vld [vmem:[%s3 + $0x4f8] sm:$0xff]
  %v2125 = vld [vmem:[%s3 + $0x500] sm:$0xff]
  %v2126 = vld [vmem:[%s3 + $0x508] sm:$0xff]
  %v2127 = vld [vmem:[%s3 + $0x510] sm:$0xff]
  %v2128 = vld [vmem:[%s3 + $0x518] sm:$0xff]
  %v2129 = vld [vmem:[%s3 + $0x520] sm:$0xff]
  %v2130 = vld [vmem:[%s3 + $0x528] sm:$0xff]
  %v2131 = vld [vmem:[%s3 + $0x530] sm:$0xff]
  %v2132 = vld [vmem:[%s3 + $0x538] sm:$0xff]
  %v2133 = vld [vmem:[%s3 + $0x540] sm:$0xff]
  %v2134 = vld [vmem:[%s3 + $0x548] sm:$0xff]
  %v2135 = vld [vmem:[%s3 + $0x550] sm:$0xff]
  %v2136 = vld [vmem:[%s3 + $0x558] sm:$0xff]
  %v2137 = vld [vmem:[%s3 + $0x560] sm:$0xff]
  %v2138 = vld [vmem:[%s3 + $0x568] sm:$0xff]
  %v2139 = vld [vmem:[%s3 + $0x570] sm:$0xff]
  %v2140 = vld [vmem:[%s3 + $0x578] sm:$0xff]
  %v2141 = vld [vmem:[%s3 + $0x580] sm:$0xff]
  %v2142 = vld [vmem:[%s3 + $0x588] sm:$0xff]
  %v2143 = vld [vmem:[%s3 + $0x590] sm:$0xff]
  %v2144 = vld [vmem:[%s3 + $0x598] sm:$0xff]
  %v2145 = vld [vmem:[%s3 + $0x5a0] sm:$0xff]
  %v2146 = vld [vmem:[%s3 + $0x5a8] sm:$0xff]
  %v2147 = vld [vmem:[%s3 + $0x5b0] sm:$0xff]
  %v2148 = vld [vmem:[%s3 + $0x5b8] sm:$0xff]
  %v2149 = vld [vmem:[%s3 + $0x5c0] sm:$0xff]
  %v2150 = vld [vmem:[%s3 + $0x5c8] sm:$0xff]
  %v2151 = vld [vmem:[%s3 + $0x5d0] sm:$0xff]
  %v2152 = vld [vmem:[%s3 + $0x5d8] sm:$0xff]
  %v2153 = vld [vmem:[%s3 + $0x5e0] sm:$0xff]
  %v2154 = vld [vmem:[%s3 + $0x5e8] sm:$0xff]
  %v2155 = vld [vmem:[%s3 + $0x5f0] sm:$0xff]
  %v2156 = vld [vmem:[%s3 + $0x5f8] sm:$0xff]
  %v2157 = vld [vmem:[%s3 + $0x600] sm:$0xff]
  %v2158 = vld [vmem:[%s3 + $0x608] sm:$0xff]
  %v2159 = vld [vmem:[%s3 + $0x610] sm:$0xff]
  %v2160 = vld [vmem:[%s3 + $0x618] sm:$0xff]
  %v2161 = vld [vmem:[%s3 + $0x620] sm:$0xff]
  %v2162 = vld [vmem:[%s3 + $0x628] sm:$0xff]
  %v2163 = vld [vmem:[%s3 + $0x630] sm:$0xff]
  %v2164 = vld [vmem:[%s3 + $0x638] sm:$0xff]
  %v2165 = vld [vmem:[%s3 + $0x640] sm:$0xff]
  %v2166 = vld [vmem:[%s3 + $0x648] sm:$0xff]
  %v2167 = vld [vmem:[%s3 + $0x650] sm:$0xff]
  %v2168 = vld [vmem:[%s3 + $0x658] sm:$0xff]
  %v2169 = vld [vmem:[%s3 + $0x660] sm:$0xff]
  %v2170 = vld [vmem:[%s3 + $0x668] sm:$0xff]
  %v2171 = vld [vmem:[%s3 + $0x670] sm:$0xff]
  %v2172 = vld [vmem:[%s3 + $0x678] sm:$0xff]
  %v2173 = vld [vmem:[%s3 + $0x680] sm:$0xff]
  %v2174 = vld [vmem:[%s3 + $0x688] sm:$0xff]
  %v2175 = vld [vmem:[%s3 + $0x690] sm:$0xff]
  %v2176 = vld [vmem:[%s3 + $0x698] sm:$0xff]
  %v2177 = vld [vmem:[%s3 + $0x6a0] sm:$0xff]
  %v2178 = vld [vmem:[%s3 + $0x6a8] sm:$0xff]
  %v2179 = vld [vmem:[%s3 + $0x6b0] sm:$0xff]
  %v2180 = vld [vmem:[%s3 + $0x6b8] sm:$0xff]
  %v2181 = vld [vmem:[%s3 + $0x6c0] sm:$0xff]
  %v2182 = vld [vmem:[%s3 + $0x6c8] sm:$0xff]
  %v2183 = vld [vmem:[%s3 + $0x6d0] sm:$0xff]
  %v2184 = vld [vmem:[%s3 + $0x6d8] sm:$0xff]
  %v2185 = vld [vmem:[%s3 + $0x6e0] sm:$0xff]
  %v2186 = vld [vmem:[%s3 + $0x6e8] sm:$0xff]
  %v2187 = vld [vmem:[%s3 + $0x6f0] sm:$0xff]
  %v2188 = vld [vmem:[%s3 + $0x6f8] sm:$0xff]
  %v2189 = vld [vmem:[%s3 + $0x700] sm:$0xff]
  %v2190 = vld [vmem:[%s3 + $0x708] sm:$0xff]
  %v2191 = vld [vmem:[%s3 + $0x710] sm:$0xff]
  %v2192 = vld [vmem:[%s3 + $0x718] sm:$0xff]
  %v2193 = vld [vmem:[%s3 + $0x720] sm:$0xff]
  %v2194 = vld [vmem:[%s3 + $0x728] sm:$0xff]
  %v2195 = vld [vmem:[%s3 + $0x730] sm:$0xff]
  %v2196 = vld [vmem:[%s3 + $0x738] sm:$0xff]
  %v2197 = vld [vmem:[%s3 + $0x740] sm:$0xff]
  %v2198 = vld [vmem:[%s3 + $0x748] sm:$0xff]
  %v2199 = vld [vmem:[%s3 + $0x750] sm:$0xff]
  %v2200 = vld [vmem:[%s3 + $0x758] sm:$0xff]
  %v2201 = vld [vmem:[%s3 + $0x760] sm:$0xff]
  %v2202 = vld [vmem:[%s3 + $0x768] sm:$0xff]
  %v2203 = vld [vmem:[%s3 + $0x770] sm:$0xff]
  %v2204 = vld [vmem:[%s3 + $0x778] sm:$0xff]
  %v2205 = vld [vmem:[%s3 + $0x780] sm:$0xff]
  %v2206 = vld [vmem:[%s3 + $0x788] sm:$0xff]
  %v2207 = vld [vmem:[%s3 + $0x790] sm:$0xff]
  %v2208 = vld [vmem:[%s3 + $0x798] sm:$0xff]
  %v2209 = vld [vmem:[%s3 + $0x7a0] sm:$0xff]
  %v2210 = vld [vmem:[%s3 + $0x7a8] sm:$0xff]
  %v2211 = vld [vmem:[%s3 + $0x7b0] sm:$0xff]
  %v2212 = vld [vmem:[%s3 + $0x7b8] sm:$0xff]
  %v2213 = vld [vmem:[%s3 + $0x7c0] sm:$0xff]
  %v2214 = vld [vmem:[%s3 + $0x7c8] sm:$0xff]
  %v2215 = vld [vmem:[%s3 + $0x7d0] sm:$0xff]
  %v2216 = vld [vmem:[%s3 + $0x7d8] sm:$0xff]
  %v2217 = vld [vmem:[%s3 + $0x7e0] sm:$0xff]
  %v2218 = vld [vmem:[%s3 + $0x7e8] sm:$0xff]
  %v2219 = vld [vmem:[%s3 + $0x7f0] sm:$0xff]
  %v2220 = vld [vmem:[%s3 + $0x7f8] sm:$0xff]
  %v2221 = vld [vmem:[%s4] sm:$0xf]
  %v2223 = vlaneseq
  %v2224 = vshrl.u32 %v2223, 7
  %v2225 = vsub.s32 0, %v2224
  %v2226 = vrot.slane %v2221, %v2225
  %v2227 = vlaneseq
  %v2228 = vshrl.u32 %v2227, 7
  %v2229 = vsub.s32 1, %v2228
  %v2230 = vrot.slane %v2221, %v2229
  %v2231 = vlaneseq
  %v2232 = vshrl.u32 %v2231, 7
  %v2233 = vsub.s32 2, %v2232
  %v2234 = vrot.slane %v2221, %v2233
  %v2235 = vlaneseq
  %v2236 = vshrl.u32 %v2235, 7
  %v2237 = vsub.s32 3, %v2236
  %v2238 = vrot.slane %v2221, %v2237
  %v2499 = vunpack.c.l.b16 %v1965
  %v2500 = vunpack.c.h.b16 %v1965
  %v2501 = vunpack.c.l.b16 %v1966
  %v2502 = vunpack.c.h.b16 %v1966
  %v2503 = vunpack.c.l.b16 %v1967
  %v2504 = vunpack.c.h.b16 %v1967
  %v2505 = vunpack.c.l.b16 %v1968
  %v2506 = vunpack.c.h.b16 %v1968
  %v2507 = vunpack.c.l.b16 %v1969
  %v2508 = vunpack.c.h.b16 %v1969
  %v2509 = vunpack.c.l.b16 %v1970
  %v2510 = vunpack.c.h.b16 %v1970
  %v2511 = vunpack.c.l.b16 %v1971
  %v2512 = vunpack.c.h.b16 %v1971
  %v2513 = vunpack.c.l.b16 %v1972
  %v2514 = vunpack.c.h.b16 %v1972
  %v2515 = vunpack.c.l.b16 %v1973
  %v2516 = vunpack.c.h.b16 %v1973
  %v2517 = vunpack.c.l.b16 %v1974
  %v2518 = vunpack.c.h.b16 %v1974
  %v2519 = vunpack.c.l.b16 %v1975
  %v2520 = vunpack.c.h.b16 %v1975
  %v2521 = vunpack.c.l.b16 %v1976
  %v2522 = vunpack.c.h.b16 %v1976
  %v2523 = vunpack.c.l.b16 %v1977
  %v2524 = vunpack.c.h.b16 %v1977
  %v2525 = vunpack.c.l.b16 %v1978
  %v2526 = vunpack.c.h.b16 %v1978
  %v2527 = vunpack.c.l.b16 %v1979
  %v2528 = vunpack.c.h.b16 %v1979
  %v2529 = vunpack.c.l.b16 %v1980
  %v2530 = vunpack.c.h.b16 %v1980
  %v2531 = vunpack.c.l.b16 %v1981
  %v2532 = vunpack.c.h.b16 %v1981
  %v2533 = vunpack.c.l.b16 %v1982
  %v2534 = vunpack.c.h.b16 %v1982
  %v2535 = vunpack.c.l.b16 %v1983
  %v2536 = vunpack.c.h.b16 %v1983
  %v2537 = vunpack.c.l.b16 %v1984
  %v2538 = vunpack.c.h.b16 %v1984
  %v2539 = vunpack.c.l.b16 %v1985
  %v2540 = vunpack.c.h.b16 %v1985
  %v2541 = vunpack.c.l.b16 %v1986
  %v2542 = vunpack.c.h.b16 %v1986
  %v2543 = vunpack.c.l.b16 %v1987
  %v2544 = vunpack.c.h.b16 %v1987
  %v2545 = vunpack.c.l.b16 %v1988
  %v2546 = vunpack.c.h.b16 %v1988
  %v2547 = vunpack.c.l.b16 %v1989
  %v2548 = vunpack.c.h.b16 %v1989
  %v2549 = vunpack.c.l.b16 %v1990
  %v2550 = vunpack.c.h.b16 %v1990
  %v2551 = vunpack.c.l.b16 %v1991
  %v2552 = vunpack.c.h.b16 %v1991
  %v2553 = vunpack.c.l.b16 %v1992
  %v2554 = vunpack.c.h.b16 %v1992
  %v2555 = vunpack.c.l.b16 %v1993
  %v2556 = vunpack.c.h.b16 %v1993
  %v2557 = vunpack.c.l.b16 %v1994
  %v2558 = vunpack.c.h.b16 %v1994
  %v2559 = vunpack.c.l.b16 %v1995
  %v2560 = vunpack.c.h.b16 %v1995
  %v2561 = vunpack.c.l.b16 %v1996
  %v2562 = vunpack.c.h.b16 %v1996
  %v2563 = vunpack.c.l.b16 %v1997
  %v2564 = vunpack.c.h.b16 %v1997
  %v2565 = vunpack.c.l.b16 %v1998
  %v2566 = vunpack.c.h.b16 %v1998
  %v2567 = vunpack.c.l.b16 %v1999
  %v2568 = vunpack.c.h.b16 %v1999
  %v2569 = vunpack.c.l.b16 %v2000
  %v2570 = vunpack.c.h.b16 %v2000
  %v2571 = vunpack.c.l.b16 %v2001
  %v2572 = vunpack.c.h.b16 %v2001
  %v2573 = vunpack.c.l.b16 %v2002
  %v2574 = vunpack.c.h.b16 %v2002
  %v2575 = vunpack.c.l.b16 %v2003
  %v2576 = vunpack.c.h.b16 %v2003
  %v2577 = vunpack.c.l.b16 %v2004
  %v2578 = vunpack.c.h.b16 %v2004
  %v2579 = vunpack.c.l.b16 %v2005
  %v2580 = vunpack.c.h.b16 %v2005
  %v2581 = vunpack.c.l.b16 %v2006
  %v2582 = vunpack.c.h.b16 %v2006
  %v2583 = vunpack.c.l.b16 %v2007
  %v2584 = vunpack.c.h.b16 %v2007
  %v2585 = vunpack.c.l.b16 %v2008
  %v2586 = vunpack.c.h.b16 %v2008
  %v2587 = vunpack.c.l.b16 %v2009
  %v2588 = vunpack.c.h.b16 %v2009
  %v2589 = vunpack.c.l.b16 %v2010
  %v2590 = vunpack.c.h.b16 %v2010
  %v2591 = vunpack.c.l.b16 %v2011
  %v2592 = vunpack.c.h.b16 %v2011
  %v2593 = vunpack.c.l.b16 %v2012
  %v2594 = vunpack.c.h.b16 %v2012
  %v2595 = vunpack.c.l.b16 %v2013
  %v2596 = vunpack.c.h.b16 %v2013
  %v2597 = vunpack.c.l.b16 %v2014
  %v2598 = vunpack.c.h.b16 %v2014
  %v2599 = vunpack.c.l.b16 %v2015
  %v2600 = vunpack.c.h.b16 %v2015
  %v2601 = vunpack.c.l.b16 %v2016
  %v2602 = vunpack.c.h.b16 %v2016
  %v2603 = vunpack.c.l.b16 %v2017
  %v2604 = vunpack.c.h.b16 %v2017
  %v2605 = vunpack.c.l.b16 %v2018
  %v2606 = vunpack.c.h.b16 %v2018
  %v2607 = vunpack.c.l.b16 %v2019
  %v2608 = vunpack.c.h.b16 %v2019
  %v2609 = vunpack.c.l.b16 %v2020
  %v2610 = vunpack.c.h.b16 %v2020
  %v2611 = vunpack.c.l.b16 %v2021
  %v2612 = vunpack.c.h.b16 %v2021
  %v2613 = vunpack.c.l.b16 %v2022
  %v2614 = vunpack.c.h.b16 %v2022
  %v2615 = vunpack.c.l.b16 %v2023
  %v2616 = vunpack.c.h.b16 %v2023
  %v2617 = vunpack.c.l.b16 %v2024
  %v2618 = vunpack.c.h.b16 %v2024
  %v2619 = vunpack.c.l.b16 %v2025
  %v2620 = vunpack.c.h.b16 %v2025
  %v2621 = vunpack.c.l.b16 %v2026
  %v2622 = vunpack.c.h.b16 %v2026
  %v2623 = vunpack.c.l.b16 %v2027
  %v2624 = vunpack.c.h.b16 %v2027
  %v2625 = vunpack.c.l.b16 %v2028
  %v2626 = vunpack.c.h.b16 %v2028
  %v2627 = vunpack.c.l.b16 %v2029
  %v2628 = vunpack.c.h.b16 %v2029
  %v2629 = vunpack.c.l.b16 %v2030
  %v2630 = vunpack.c.h.b16 %v2030
  %v2631 = vunpack.c.l.b16 %v2031
  %v2632 = vunpack.c.h.b16 %v2031
  %v2633 = vunpack.c.l.b16 %v2032
  %v2634 = vunpack.c.h.b16 %v2032
  %v2635 = vunpack.c.l.b16 %v2033
  %v2636 = vunpack.c.h.b16 %v2033
  %v2637 = vunpack.c.l.b16 %v2034
  %v2638 = vunpack.c.h.b16 %v2034
  %v2639 = vunpack.c.l.b16 %v2035
  %v2640 = vunpack.c.h.b16 %v2035
  %v2641 = vunpack.c.l.b16 %v2036
  %v2642 = vunpack.c.h.b16 %v2036
  %v2643 = vunpack.c.l.b16 %v2037
  %v2644 = vunpack.c.h.b16 %v2037
  %v2645 = vunpack.c.l.b16 %v2038
  %v2646 = vunpack.c.h.b16 %v2038
  %v2647 = vunpack.c.l.b16 %v2039
  %v2648 = vunpack.c.h.b16 %v2039
  %v2649 = vunpack.c.l.b16 %v2040
  %v2650 = vunpack.c.h.b16 %v2040
  %v2651 = vunpack.c.l.b16 %v2041
  %v2652 = vunpack.c.h.b16 %v2041
  %v2653 = vunpack.c.l.b16 %v2042
  %v2654 = vunpack.c.h.b16 %v2042
  %v2655 = vunpack.c.l.b16 %v2043
  %v2656 = vunpack.c.h.b16 %v2043
  %v2657 = vunpack.c.l.b16 %v2044
  %v2658 = vunpack.c.h.b16 %v2044
  %v2659 = vunpack.c.l.b16 %v2045
  %v2660 = vunpack.c.h.b16 %v2045
  %v2661 = vunpack.c.l.b16 %v2046
  %v2662 = vunpack.c.h.b16 %v2046
  %v2663 = vunpack.c.l.b16 %v2047
  %v2664 = vunpack.c.h.b16 %v2047
  %v2665 = vunpack.c.l.b16 %v2048
  %v2666 = vunpack.c.h.b16 %v2048
  %v2667 = vunpack.c.l.b16 %v2049
  %v2668 = vunpack.c.h.b16 %v2049
  %v2669 = vunpack.c.l.b16 %v2050
  %v2670 = vunpack.c.h.b16 %v2050
  %v2671 = vunpack.c.l.b16 %v2051
  %v2672 = vunpack.c.h.b16 %v2051
  %v2673 = vunpack.c.l.b16 %v2052
  %v2674 = vunpack.c.h.b16 %v2052
  %v2675 = vunpack.c.l.b16 %v2053
  %v2676 = vunpack.c.h.b16 %v2053
  %v2677 = vunpack.c.l.b16 %v2054
  %v2678 = vunpack.c.h.b16 %v2054
  %v2679 = vunpack.c.l.b16 %v2055
  %v2680 = vunpack.c.h.b16 %v2055
  %v2681 = vunpack.c.l.b16 %v2056
  %v2682 = vunpack.c.h.b16 %v2056
  %v2683 = vunpack.c.l.b16 %v2057
  %v2684 = vunpack.c.h.b16 %v2057
  %v2685 = vunpack.c.l.b16 %v2058
  %v2686 = vunpack.c.h.b16 %v2058
  %v2687 = vunpack.c.l.b16 %v2059
  %v2688 = vunpack.c.h.b16 %v2059
  %v2689 = vunpack.c.l.b16 %v2060
  %v2690 = vunpack.c.h.b16 %v2060
  %v2691 = vunpack.c.l.b16 %v2061
  %v2692 = vunpack.c.h.b16 %v2061
  %v2693 = vunpack.c.l.b16 %v2062
  %v2694 = vunpack.c.h.b16 %v2062
  %v2695 = vunpack.c.l.b16 %v2063
  %v2696 = vunpack.c.h.b16 %v2063
  %v2697 = vunpack.c.l.b16 %v2064
  %v2698 = vunpack.c.h.b16 %v2064
  %v2699 = vunpack.c.l.b16 %v2065
  %v2700 = vunpack.c.h.b16 %v2065
  %v2701 = vunpack.c.l.b16 %v2066
  %v2702 = vunpack.c.h.b16 %v2066
  %v2703 = vunpack.c.l.b16 %v2067
  %v2704 = vunpack.c.h.b16 %v2067
  %v2705 = vunpack.c.l.b16 %v2068
  %v2706 = vunpack.c.h.b16 %v2068
  %v2707 = vunpack.c.l.b16 %v2069
  %v2708 = vunpack.c.h.b16 %v2069
  %v2709 = vunpack.c.l.b16 %v2070
  %v2710 = vunpack.c.h.b16 %v2070
  %v2711 = vunpack.c.l.b16 %v2071
  %v2712 = vunpack.c.h.b16 %v2071
  %v2713 = vunpack.c.l.b16 %v2072
  %v2714 = vunpack.c.h.b16 %v2072
  %v2715 = vunpack.c.l.b16 %v2073
  %v2716 = vunpack.c.h.b16 %v2073
  %v2717 = vunpack.c.l.b16 %v2074
  %v2718 = vunpack.c.h.b16 %v2074
  %v2719 = vunpack.c.l.b16 %v2075
  %v2720 = vunpack.c.h.b16 %v2075
  %v2721 = vunpack.c.l.b16 %v2076
  %v2722 = vunpack.c.h.b16 %v2076
  %v2723 = vunpack.c.l.b16 %v2077
  %v2724 = vunpack.c.h.b16 %v2077
  %v2725 = vunpack.c.l.b16 %v2078
  %v2726 = vunpack.c.h.b16 %v2078
  %v2727 = vunpack.c.l.b16 %v2079
  %v2728 = vunpack.c.h.b16 %v2079
  %v2729 = vunpack.c.l.b16 %v2080
  %v2730 = vunpack.c.h.b16 %v2080
  %v2731 = vunpack.c.l.b16 %v2081
  %v2732 = vunpack.c.h.b16 %v2081
  %v2733 = vunpack.c.l.b16 %v2082
  %v2734 = vunpack.c.h.b16 %v2082
  %v2735 = vunpack.c.l.b16 %v2083
  %v2736 = vunpack.c.h.b16 %v2083
  %v2737 = vunpack.c.l.b16 %v2084
  %v2738 = vunpack.c.h.b16 %v2084
  %v2739 = vunpack.c.l.b16 %v2085
  %v2740 = vunpack.c.h.b16 %v2085
  %v2741 = vunpack.c.l.b16 %v2086
  %v2742 = vunpack.c.h.b16 %v2086
  %v2743 = vunpack.c.l.b16 %v2087
  %v2744 = vunpack.c.h.b16 %v2087
  %v2745 = vunpack.c.l.b16 %v2088
  %v2746 = vunpack.c.h.b16 %v2088
  %v2747 = vunpack.c.l.b16 %v2089
  %v2748 = vunpack.c.h.b16 %v2089
  %v2749 = vunpack.c.l.b16 %v2090
  %v2750 = vunpack.c.h.b16 %v2090
  %v2751 = vunpack.c.l.b16 %v2091
  %v2752 = vunpack.c.h.b16 %v2091
  %v2753 = vunpack.c.l.b16 %v2092
  %v2754 = vunpack.c.h.b16 %v2092
  %v2755 = vunpack.c.l.b16 %v2093
  %v2756 = vunpack.c.h.b16 %v2093
  %v2757 = vunpack.c.l.b16 %v2094
  %v2758 = vunpack.c.h.b16 %v2094
  %v2759 = vunpack.c.l.b16 %v2095
  %v2760 = vunpack.c.h.b16 %v2095
  %v2761 = vunpack.c.l.b16 %v2096
  %v2762 = vunpack.c.h.b16 %v2096
  %v2763 = vunpack.c.l.b16 %v2097
  %v2764 = vunpack.c.h.b16 %v2097
  %v2765 = vunpack.c.l.b16 %v2098
  %v2766 = vunpack.c.h.b16 %v2098
  %v2767 = vunpack.c.l.b16 %v2099
  %v2768 = vunpack.c.h.b16 %v2099
  %v2769 = vunpack.c.l.b16 %v2100
  %v2770 = vunpack.c.h.b16 %v2100
  %v2771 = vunpack.c.l.b16 %v2101
  %v2772 = vunpack.c.h.b16 %v2101
  %v2773 = vunpack.c.l.b16 %v2102
  %v2774 = vunpack.c.h.b16 %v2102
  %v2775 = vunpack.c.l.b16 %v2103
  %v2776 = vunpack.c.h.b16 %v2103
  %v2777 = vunpack.c.l.b16 %v2104
  %v2778 = vunpack.c.h.b16 %v2104
  %v2779 = vunpack.c.l.b16 %v2105
  %v2780 = vunpack.c.h.b16 %v2105
  %v2781 = vunpack.c.l.b16 %v2106
  %v2782 = vunpack.c.h.b16 %v2106
  %v2783 = vunpack.c.l.b16 %v2107
  %v2784 = vunpack.c.h.b16 %v2107
  %v2785 = vunpack.c.l.b16 %v2108
  %v2786 = vunpack.c.h.b16 %v2108
  %v2787 = vunpack.c.l.b16 %v2109
  %v2788 = vunpack.c.h.b16 %v2109
  %v2789 = vunpack.c.l.b16 %v2110
  %v2790 = vunpack.c.h.b16 %v2110
  %v2791 = vunpack.c.l.b16 %v2111
  %v2792 = vunpack.c.h.b16 %v2111
  %v2793 = vunpack.c.l.b16 %v2112
  %v2794 = vunpack.c.h.b16 %v2112
  %v2795 = vunpack.c.l.b16 %v2113
  %v2796 = vunpack.c.h.b16 %v2113
  %v2797 = vunpack.c.l.b16 %v2114
  %v2798 = vunpack.c.h.b16 %v2114
  %v2799 = vunpack.c.l.b16 %v2115
  %v2800 = vunpack.c.h.b16 %v2115
  %v2801 = vunpack.c.l.b16 %v2116
  %v2802 = vunpack.c.h.b16 %v2116
  %v2803 = vunpack.c.l.b16 %v2117
  %v2804 = vunpack.c.h.b16 %v2117
  %v2805 = vunpack.c.l.b16 %v2118
  %v2806 = vunpack.c.h.b16 %v2118
  %v2807 = vunpack.c.l.b16 %v2119
  %v2808 = vunpack.c.h.b16 %v2119
  %v2809 = vunpack.c.l.b16 %v2120
  %v2810 = vunpack.c.h.b16 %v2120
  %v2811 = vunpack.c.l.b16 %v2121
  %v2812 = vunpack.c.h.b16 %v2121
  %v2813 = vunpack.c.l.b16 %v2122
  %v2814 = vunpack.c.h.b16 %v2122
  %v2815 = vunpack.c.l.b16 %v2123
  %v2816 = vunpack.c.h.b16 %v2123
  %v2817 = vunpack.c.l.b16 %v2124
  %v2818 = vunpack.c.h.b16 %v2124
  %v2819 = vunpack.c.l.b16 %v2125
  %v2820 = vunpack.c.h.b16 %v2125
  %v2821 = vunpack.c.l.b16 %v2126
  %v2822 = vunpack.c.h.b16 %v2126
  %v2823 = vunpack.c.l.b16 %v2127
  %v2824 = vunpack.c.h.b16 %v2127
  %v2825 = vunpack.c.l.b16 %v2128
  %v2826 = vunpack.c.h.b16 %v2128
  %v2827 = vunpack.c.l.b16 %v2129
  %v2828 = vunpack.c.h.b16 %v2129
  %v2829 = vunpack.c.l.b16 %v2130
  %v2830 = vunpack.c.h.b16 %v2130
  %v2831 = vunpack.c.l.b16 %v2131
  %v2832 = vunpack.c.h.b16 %v2131
  %v2833 = vunpack.c.l.b16 %v2132
  %v2834 = vunpack.c.h.b16 %v2132
  %v2835 = vunpack.c.l.b16 %v2133
  %v2836 = vunpack.c.h.b16 %v2133
  %v2837 = vunpack.c.l.b16 %v2134
  %v2838 = vunpack.c.h.b16 %v2134
  %v2839 = vunpack.c.l.b16 %v2135
  %v2840 = vunpack.c.h.b16 %v2135
  %v2841 = vunpack.c.l.b16 %v2136
  %v2842 = vunpack.c.h.b16 %v2136
  %v2843 = vunpack.c.l.b16 %v2137
  %v2844 = vunpack.c.h.b16 %v2137
  %v2845 = vunpack.c.l.b16 %v2138
  %v2846 = vunpack.c.h.b16 %v2138
  %v2847 = vunpack.c.l.b16 %v2139
  %v2848 = vunpack.c.h.b16 %v2139
  %v2849 = vunpack.c.l.b16 %v2140
  %v2850 = vunpack.c.h.b16 %v2140
  %v2851 = vunpack.c.l.b16 %v2141
  %v2852 = vunpack.c.h.b16 %v2141
  %v2853 = vunpack.c.l.b16 %v2142
  %v2854 = vunpack.c.h.b16 %v2142
  %v2855 = vunpack.c.l.b16 %v2143
  %v2856 = vunpack.c.h.b16 %v2143
  %v2857 = vunpack.c.l.b16 %v2144
  %v2858 = vunpack.c.h.b16 %v2144
  %v2859 = vunpack.c.l.b16 %v2145
  %v2860 = vunpack.c.h.b16 %v2145
  %v2861 = vunpack.c.l.b16 %v2146
  %v2862 = vunpack.c.h.b16 %v2146
  %v2863 = vunpack.c.l.b16 %v2147
  %v2864 = vunpack.c.h.b16 %v2147
  %v2865 = vunpack.c.l.b16 %v2148
  %v2866 = vunpack.c.h.b16 %v2148
  %v2867 = vunpack.c.l.b16 %v2149
  %v2868 = vunpack.c.h.b16 %v2149
  %v2869 = vunpack.c.l.b16 %v2150
  %v2870 = vunpack.c.h.b16 %v2150
  %v2871 = vunpack.c.l.b16 %v2151
  %v2872 = vunpack.c.h.b16 %v2151
  %v2873 = vunpack.c.l.b16 %v2152
  %v2874 = vunpack.c.h.b16 %v2152
  %v2875 = vunpack.c.l.b16 %v2153
  %v2876 = vunpack.c.h.b16 %v2153
  %v2877 = vunpack.c.l.b16 %v2154
  %v2878 = vunpack.c.h.b16 %v2154
  %v2879 = vunpack.c.l.b16 %v2155
  %v2880 = vunpack.c.h.b16 %v2155
  %v2881 = vunpack.c.l.b16 %v2156
  %v2882 = vunpack.c.h.b16 %v2156
  %v2883 = vunpack.c.l.b16 %v2157
  %v2884 = vunpack.c.h.b16 %v2157
  %v2885 = vunpack.c.l.b16 %v2158
  %v2886 = vunpack.c.h.b16 %v2158
  %v2887 = vunpack.c.l.b16 %v2159
  %v2888 = vunpack.c.h.b16 %v2159
  %v2889 = vunpack.c.l.b16 %v2160
  %v2890 = vunpack.c.h.b16 %v2160
  %v2891 = vunpack.c.l.b16 %v2161
  %v2892 = vunpack.c.h.b16 %v2161
  %v2893 = vunpack.c.l.b16 %v2162
  %v2894 = vunpack.c.h.b16 %v2162
  %v2895 = vunpack.c.l.b16 %v2163
  %v2896 = vunpack.c.h.b16 %v2163
  %v2897 = vunpack.c.l.b16 %v2164
  %v2898 = vunpack.c.h.b16 %v2164
  %v2899 = vunpack.c.l.b16 %v2165
  %v2900 = vunpack.c.h.b16 %v2165
  %v2901 = vunpack.c.l.b16 %v2166
  %v2902 = vunpack.c.h.b16 %v2166
  %v2903 = vunpack.c.l.b16 %v2167
  %v2904 = vunpack.c.h.b16 %v2167
  %v2905 = vunpack.c.l.b16 %v2168
  %v2906 = vunpack.c.h.b16 %v2168
  %v2907 = vunpack.c.l.b16 %v2169
  %v2908 = vunpack.c.h.b16 %v2169
  %v2909 = vunpack.c.l.b16 %v2170
  %v2910 = vunpack.c.h.b16 %v2170
  %v2911 = vunpack.c.l.b16 %v2171
  %v2912 = vunpack.c.h.b16 %v2171
  %v2913 = vunpack.c.l.b16 %v2172
  %v2914 = vunpack.c.h.b16 %v2172
  %v2915 = vunpack.c.l.b16 %v2173
  %v2916 = vunpack.c.h.b16 %v2173
  %v2917 = vunpack.c.l.b16 %v2174
  %v2918 = vunpack.c.h.b16 %v2174
  %v2919 = vunpack.c.l.b16 %v2175
  %v2920 = vunpack.c.h.b16 %v2175
  %v2921 = vunpack.c.l.b16 %v2176
  %v2922 = vunpack.c.h.b16 %v2176
  %v2923 = vunpack.c.l.b16 %v2177
  %v2924 = vunpack.c.h.b16 %v2177
  %v2925 = vunpack.c.l.b16 %v2178
  %v2926 = vunpack.c.h.b16 %v2178
  %v2927 = vunpack.c.l.b16 %v2179
  %v2928 = vunpack.c.h.b16 %v2179
  %v2929 = vunpack.c.l.b16 %v2180
  %v2930 = vunpack.c.h.b16 %v2180
  %v2931 = vunpack.c.l.b16 %v2181
  %v2932 = vunpack.c.h.b16 %v2181
  %v2933 = vunpack.c.l.b16 %v2182
  %v2934 = vunpack.c.h.b16 %v2182
  %v2935 = vunpack.c.l.b16 %v2183
  %v2936 = vunpack.c.h.b16 %v2183
  %v2937 = vunpack.c.l.b16 %v2184
  %v2938 = vunpack.c.h.b16 %v2184
  %v2939 = vunpack.c.l.b16 %v2185
  %v2940 = vunpack.c.h.b16 %v2185
  %v2941 = vunpack.c.l.b16 %v2186
  %v2942 = vunpack.c.h.b16 %v2186
  %v2943 = vunpack.c.l.b16 %v2187
  %v2944 = vunpack.c.h.b16 %v2187
  %v2945 = vunpack.c.l.b16 %v2188
  %v2946 = vunpack.c.h.b16 %v2188
  %v2947 = vunpack.c.l.b16 %v2189
  %v2948 = vunpack.c.h.b16 %v2189
  %v2949 = vunpack.c.l.b16 %v2190
  %v2950 = vunpack.c.h.b16 %v2190
  %v2951 = vunpack.c.l.b16 %v2191
  %v2952 = vunpack.c.h.b16 %v2191
  %v2953 = vunpack.c.l.b16 %v2192
  %v2954 = vunpack.c.h.b16 %v2192
  %v2955 = vunpack.c.l.b16 %v2193
  %v2956 = vunpack.c.h.b16 %v2193
  %v2957 = vunpack.c.l.b16 %v2194
  %v2958 = vunpack.c.h.b16 %v2194
  %v2959 = vunpack.c.l.b16 %v2195
  %v2960 = vunpack.c.h.b16 %v2195
  %v2961 = vunpack.c.l.b16 %v2196
  %v2962 = vunpack.c.h.b16 %v2196
  %v2963 = vunpack.c.l.b16 %v2197
  %v2964 = vunpack.c.h.b16 %v2197
  %v2965 = vunpack.c.l.b16 %v2198
  %v2966 = vunpack.c.h.b16 %v2198
  %v2967 = vunpack.c.l.b16 %v2199
  %v2968 = vunpack.c.h.b16 %v2199
  %v2969 = vunpack.c.l.b16 %v2200
  %v2970 = vunpack.c.h.b16 %v2200
  %v2971 = vunpack.c.l.b16 %v2201
  %v2972 = vunpack.c.h.b16 %v2201
  %v2973 = vunpack.c.l.b16 %v2202
  %v2974 = vunpack.c.h.b16 %v2202
  %v2975 = vunpack.c.l.b16 %v2203
  %v2976 = vunpack.c.h.b16 %v2203
  %v2977 = vunpack.c.l.b16 %v2204
  %v2978 = vunpack.c.h.b16 %v2204
  %v2979 = vunpack.c.l.b16 %v2205
  %v2980 = vunpack.c.h.b16 %v2205
  %v2981 = vunpack.c.l.b16 %v2206
  %v2982 = vunpack.c.h.b16 %v2206
  %v2983 = vunpack.c.l.b16 %v2207
  %v2984 = vunpack.c.h.b16 %v2207
  %v2985 = vunpack.c.l.b16 %v2208
  %v2986 = vunpack.c.h.b16 %v2208
  %v2987 = vunpack.c.l.b16 %v2209
  %v2988 = vunpack.c.h.b16 %v2209
  %v2989 = vunpack.c.l.b16 %v2210
  %v2990 = vunpack.c.h.b16 %v2210
  %v2991 = vunpack.c.l.b16 %v2211
  %v2992 = vunpack.c.h.b16 %v2211
  %v2993 = vunpack.c.l.b16 %v2212
  %v2994 = vunpack.c.h.b16 %v2212
  %v2995 = vunpack.c.l.b16 %v2213
  %v2996 = vunpack.c.h.b16 %v2213
  %v2997 = vunpack.c.l.b16 %v2214
  %v2998 = vunpack.c.h.b16 %v2214
  %v2999 = vunpack.c.l.b16 %v2215
  %v3000 = vunpack.c.h.b16 %v2215
  %v3001 = vunpack.c.l.b16 %v2216
  %v3002 = vunpack.c.h.b16 %v2216
  %v3003 = vunpack.c.l.b16 %v2217
  %v3004 = vunpack.c.h.b16 %v2217
  %v3005 = vunpack.c.l.b16 %v2218
  %v3006 = vunpack.c.h.b16 %v2218
  %v3007 = vunpack.c.l.b16 %v2219
  %v3008 = vunpack.c.h.b16 %v2219
  %v3009 = vunpack.c.l.b16 %v2220
  %v3010 = vunpack.c.h.b16 %v2220
  %v3011 = vpack.c.b16 %v2503, %v2499
  %v3012 = vpack.c.b16 %v2504, %v2500
  %v3013 = vpack.c.b16 %v2505, %v2501
  %v3014 = vpack.c.b16 %v2506, %v2502
  %v3015 = vpack.c.b16 %v2511, %v2507
  %v3016 = vpack.c.b16 %v2512, %v2508
  %v3017 = vpack.c.b16 %v2513, %v2509
  %v3018 = vpack.c.b16 %v2514, %v2510
  %v3019 = vpack.c.b16 %v2519, %v2515
  %v3020 = vpack.c.b16 %v2520, %v2516
  %v3021 = vpack.c.b16 %v2521, %v2517
  %v3022 = vpack.c.b16 %v2522, %v2518
  %v3023 = vpack.c.b16 %v2527, %v2523
  %v3024 = vpack.c.b16 %v2528, %v2524
  %v3025 = vpack.c.b16 %v2529, %v2525
  %v3026 = vpack.c.b16 %v2530, %v2526
  %v3027 = vpack.c.b16 %v2535, %v2531
  %v3028 = vpack.c.b16 %v2536, %v2532
  %v3029 = vpack.c.b16 %v2537, %v2533
  %v3030 = vpack.c.b16 %v2538, %v2534
  %v3031 = vpack.c.b16 %v2543, %v2539
  %v3032 = vpack.c.b16 %v2544, %v2540
  %v3033 = vpack.c.b16 %v2545, %v2541
  %v3034 = vpack.c.b16 %v2546, %v2542
  %v3035 = vpack.c.b16 %v2551, %v2547
  %v3036 = vpack.c.b16 %v2552, %v2548
  %v3037 = vpack.c.b16 %v2553, %v2549
  %v3038 = vpack.c.b16 %v2554, %v2550
  %v3039 = vpack.c.b16 %v2559, %v2555
  %v3040 = vpack.c.b16 %v2560, %v2556
  %v3041 = vpack.c.b16 %v2561, %v2557
  %v3042 = vpack.c.b16 %v2562, %v2558
  %v3043 = vpack.c.b16 %v2567, %v2563
  %v3044 = vpack.c.b16 %v2568, %v2564
  %v3045 = vpack.c.b16 %v2569, %v2565
  %v3046 = vpack.c.b16 %v2570, %v2566
  %v3047 = vpack.c.b16 %v2575, %v2571
  %v3048 = vpack.c.b16 %v2576, %v2572
  %v3049 = vpack.c.b16 %v2577, %v2573
  %v3050 = vpack.c.b16 %v2578, %v2574
  %v3051 = vpack.c.b16 %v2583, %v2579
  %v3052 = vpack.c.b16 %v2584, %v2580
  %v3053 = vpack.c.b16 %v2585, %v2581
  %v3054 = vpack.c.b16 %v2586, %v2582
  %v3055 = vpack.c.b16 %v2591, %v2587
  %v3056 = vpack.c.b16 %v2592, %v2588
  %v3057 = vpack.c.b16 %v2593, %v2589
  %v3058 = vpack.c.b16 %v2594, %v2590
  %v3059 = vpack.c.b16 %v2599, %v2595
  %v3060 = vpack.c.b16 %v2600, %v2596
  %v3061 = vpack.c.b16 %v2601, %v2597
  %v3062 = vpack.c.b16 %v2602, %v2598
  %v3063 = vpack.c.b16 %v2607, %v2603
  %v3064 = vpack.c.b16 %v2608, %v2604
  %v3065 = vpack.c.b16 %v2609, %v2605
  %v3066 = vpack.c.b16 %v2610, %v2606
  %v3067 = vpack.c.b16 %v2615, %v2611
  %v3068 = vpack.c.b16 %v2616, %v2612
  %v3069 = vpack.c.b16 %v2617, %v2613
  %v3070 = vpack.c.b16 %v2618, %v2614
  %v3071 = vpack.c.b16 %v2623, %v2619
  %v3072 = vpack.c.b16 %v2624, %v2620
  %v3073 = vpack.c.b16 %v2625, %v2621
  %v3074 = vpack.c.b16 %v2626, %v2622
  %v3075 = vpack.c.b16 %v2631, %v2627
  %v3076 = vpack.c.b16 %v2632, %v2628
  %v3077 = vpack.c.b16 %v2633, %v2629
  %v3078 = vpack.c.b16 %v2634, %v2630
  %v3079 = vpack.c.b16 %v2639, %v2635
  %v3080 = vpack.c.b16 %v2640, %v2636
  %v3081 = vpack.c.b16 %v2641, %v2637
  %v3082 = vpack.c.b16 %v2642, %v2638
  %v3083 = vpack.c.b16 %v2647, %v2643
  %v3084 = vpack.c.b16 %v2648, %v2644
  %v3085 = vpack.c.b16 %v2649, %v2645
  %v3086 = vpack.c.b16 %v2650, %v2646
  %v3087 = vpack.c.b16 %v2655, %v2651
  %v3088 = vpack.c.b16 %v2656, %v2652
  %v3089 = vpack.c.b16 %v2657, %v2653
  %v3090 = vpack.c.b16 %v2658, %v2654
  %v3091 = vpack.c.b16 %v2663, %v2659
  %v3092 = vpack.c.b16 %v2664, %v2660
  %v3093 = vpack.c.b16 %v2665, %v2661
  %v3094 = vpack.c.b16 %v2666, %v2662
  %v3095 = vpack.c.b16 %v2671, %v2667
  %v3096 = vpack.c.b16 %v2672, %v2668
  %v3097 = vpack.c.b16 %v2673, %v2669
  %v3098 = vpack.c.b16 %v2674, %v2670
  %v3099 = vpack.c.b16 %v2679, %v2675
  %v3100 = vpack.c.b16 %v2680, %v2676
  %v3101 = vpack.c.b16 %v2681, %v2677
  %v3102 = vpack.c.b16 %v2682, %v2678
  %v3103 = vpack.c.b16 %v2687, %v2683
  %v3104 = vpack.c.b16 %v2688, %v2684
  %v3105 = vpack.c.b16 %v2689, %v2685
  %v3106 = vpack.c.b16 %v2690, %v2686
  %v3107 = vpack.c.b16 %v2695, %v2691
  %v3108 = vpack.c.b16 %v2696, %v2692
  %v3109 = vpack.c.b16 %v2697, %v2693
  %v3110 = vpack.c.b16 %v2698, %v2694
  %v3111 = vpack.c.b16 %v2703, %v2699
  %v3112 = vpack.c.b16 %v2704, %v2700
  %v3113 = vpack.c.b16 %v2705, %v2701
  %v3114 = vpack.c.b16 %v2706, %v2702
  %v3115 = vpack.c.b16 %v2711, %v2707
  %v3116 = vpack.c.b16 %v2712, %v2708
  %v3117 = vpack.c.b16 %v2713, %v2709
  %v3118 = vpack.c.b16 %v2714, %v2710
  %v3119 = vpack.c.b16 %v2719, %v2715
  %v3120 = vpack.c.b16 %v2720, %v2716
  %v3121 = vpack.c.b16 %v2721, %v2717
  %v3122 = vpack.c.b16 %v2722, %v2718
  %v3123 = vpack.c.b16 %v2727, %v2723
  %v3124 = vpack.c.b16 %v2728, %v2724
  %v3125 = vpack.c.b16 %v2729, %v2725
  %v3126 = vpack.c.b16 %v2730, %v2726
  %v3127 = vpack.c.b16 %v2735, %v2731
  %v3128 = vpack.c.b16 %v2736, %v2732
  %v3129 = vpack.c.b16 %v2737, %v2733
  %v3130 = vpack.c.b16 %v2738, %v2734
  %v3131 = vpack.c.b16 %v2743, %v2739
  %v3132 = vpack.c.b16 %v2744, %v2740
  %v3133 = vpack.c.b16 %v2745, %v2741
  %v3134 = vpack.c.b16 %v2746, %v2742
  %v3135 = vpack.c.b16 %v2751, %v2747
  %v3136 = vpack.c.b16 %v2752, %v2748
  %v3137 = vpack.c.b16 %v2753, %v2749
  %v3138 = vpack.c.b16 %v2754, %v2750
  %v3139 = vpack.c.b16 %v2759, %v2755
  %v3140 = vpack.c.b16 %v2760, %v2756
  %v3141 = vpack.c.b16 %v2761, %v2757
  %v3142 = vpack.c.b16 %v2762, %v2758
  %v3143 = vpack.c.b16 %v2767, %v2763
  %v3144 = vpack.c.b16 %v2768, %v2764
  %v3145 = vpack.c.b16 %v2769, %v2765
  %v3146 = vpack.c.b16 %v2770, %v2766
  %v3147 = vpack.c.b16 %v2775, %v2771
  %v3148 = vpack.c.b16 %v2776, %v2772
  %v3149 = vpack.c.b16 %v2777, %v2773
  %v3150 = vpack.c.b16 %v2778, %v2774
  %v3151 = vpack.c.b16 %v2783, %v2779
  %v3152 = vpack.c.b16 %v2784, %v2780
  %v3153 = vpack.c.b16 %v2785, %v2781
  %v3154 = vpack.c.b16 %v2786, %v2782
  %v3155 = vpack.c.b16 %v2791, %v2787
  %v3156 = vpack.c.b16 %v2792, %v2788
  %v3157 = vpack.c.b16 %v2793, %v2789
  %v3158 = vpack.c.b16 %v2794, %v2790
  %v3159 = vpack.c.b16 %v2799, %v2795
  %v3160 = vpack.c.b16 %v2800, %v2796
  %v3161 = vpack.c.b16 %v2801, %v2797
  %v3162 = vpack.c.b16 %v2802, %v2798
  %v3163 = vpack.c.b16 %v2807, %v2803
  %v3164 = vpack.c.b16 %v2808, %v2804
  %v3165 = vpack.c.b16 %v2809, %v2805
  %v3166 = vpack.c.b16 %v2810, %v2806
  %v3167 = vpack.c.b16 %v2815, %v2811
  %v3168 = vpack.c.b16 %v2816, %v2812
  %v3169 = vpack.c.b16 %v2817, %v2813
  %v3170 = vpack.c.b16 %v2818, %v2814
  %v3171 = vpack.c.b16 %v2823, %v2819
  %v3172 = vpack.c.b16 %v2824, %v2820
  %v3173 = vpack.c.b16 %v2825, %v2821
  %v3174 = vpack.c.b16 %v2826, %v2822
  %v3175 = vpack.c.b16 %v2831, %v2827
  %v3176 = vpack.c.b16 %v2832, %v2828
  %v3177 = vpack.c.b16 %v2833, %v2829
  %v3178 = vpack.c.b16 %v2834, %v2830
  %v3179 = vpack.c.b16 %v2839, %v2835
  %v3180 = vpack.c.b16 %v2840, %v2836
  %v3181 = vpack.c.b16 %v2841, %v2837
  %v3182 = vpack.c.b16 %v2842, %v2838
  %v3183 = vpack.c.b16 %v2847, %v2843
  %v3184 = vpack.c.b16 %v2848, %v2844
  %v3185 = vpack.c.b16 %v2849, %v2845
  %v3186 = vpack.c.b16 %v2850, %v2846
  %v3187 = vpack.c.b16 %v2855, %v2851
  %v3188 = vpack.c.b16 %v2856, %v2852
  %v3189 = vpack.c.b16 %v2857, %v2853
  %v3190 = vpack.c.b16 %v2858, %v2854
  %v3191 = vpack.c.b16 %v2863, %v2859
  %v3192 = vpack.c.b16 %v2864, %v2860
  %v3193 = vpack.c.b16 %v2865, %v2861
  %v3194 = vpack.c.b16 %v2866, %v2862
  %v3195 = vpack.c.b16 %v2871, %v2867
  %v3196 = vpack.c.b16 %v2872, %v2868
  %v3197 = vpack.c.b16 %v2873, %v2869
  %v3198 = vpack.c.b16 %v2874, %v2870
  %v3199 = vpack.c.b16 %v2879, %v2875
  %v3200 = vpack.c.b16 %v2880, %v2876
  %v3201 = vpack.c.b16 %v2881, %v2877
  %v3202 = vpack.c.b16 %v2882, %v2878
  %v3203 = vpack.c.b16 %v2887, %v2883
  %v3204 = vpack.c.b16 %v2888, %v2884
  %v3205 = vpack.c.b16 %v2889, %v2885
  %v3206 = vpack.c.b16 %v2890, %v2886
  %v3207 = vpack.c.b16 %v2895, %v2891
  %v3208 = vpack.c.b16 %v2896, %v2892
  %v3209 = vpack.c.b16 %v2897, %v2893
  %v3210 = vpack.c.b16 %v2898, %v2894
  %v3211 = vpack.c.b16 %v2903, %v2899
  %v3212 = vpack.c.b16 %v2904, %v2900
  %v3213 = vpack.c.b16 %v2905, %v2901
  %v3214 = vpack.c.b16 %v2906, %v2902
  %v3215 = vpack.c.b16 %v2911, %v2907
  %v3216 = vpack.c.b16 %v2912, %v2908
  %v3217 = vpack.c.b16 %v2913, %v2909
  %v3218 = vpack.c.b16 %v2914, %v2910
  %v3219 = vpack.c.b16 %v2919, %v2915
  %v3220 = vpack.c.b16 %v2920, %v2916
  %v3221 = vpack.c.b16 %v2921, %v2917
  %v3222 = vpack.c.b16 %v2922, %v2918
  %v3223 = vpack.c.b16 %v2927, %v2923
  %v3224 = vpack.c.b16 %v2928, %v2924
  %v3225 = vpack.c.b16 %v2929, %v2925
  %v3226 = vpack.c.b16 %v2930, %v2926
  %v3227 = vpack.c.b16 %v2935, %v2931
  %v3228 = vpack.c.b16 %v2936, %v2932
  %v3229 = vpack.c.b16 %v2937, %v2933
  %v3230 = vpack.c.b16 %v2938, %v2934
  %v3231 = vpack.c.b16 %v2943, %v2939
  %v3232 = vpack.c.b16 %v2944, %v2940
  %v3233 = vpack.c.b16 %v2945, %v2941
  %v3234 = vpack.c.b16 %v2946, %v2942
  %v3235 = vpack.c.b16 %v2951, %v2947
  %v3236 = vpack.c.b16 %v2952, %v2948
  %v3237 = vpack.c.b16 %v2953, %v2949
  %v3238 = vpack.c.b16 %v2954, %v2950
  %v3239 = vpack.c.b16 %v2959, %v2955
  %v3240 = vpack.c.b16 %v2960, %v2956
  %v3241 = vpack.c.b16 %v2961, %v2957
  %v3242 = vpack.c.b16 %v2962, %v2958
  %v3243 = vpack.c.b16 %v2967, %v2963
  %v3244 = vpack.c.b16 %v2968, %v2964
  %v3245 = vpack.c.b16 %v2969, %v2965
  %v3246 = vpack.c.b16 %v2970, %v2966
  %v3247 = vpack.c.b16 %v2975, %v2971
  %v3248 = vpack.c.b16 %v2976, %v2972
  %v3249 = vpack.c.b16 %v2977, %v2973
  %v3250 = vpack.c.b16 %v2978, %v2974
  %v3251 = vpack.c.b16 %v2983, %v2979
  %v3252 = vpack.c.b16 %v2984, %v2980
  %v3253 = vpack.c.b16 %v2985, %v2981
  %v3254 = vpack.c.b16 %v2986, %v2982
  %v3255 = vpack.c.b16 %v2991, %v2987
  %v3256 = vpack.c.b16 %v2992, %v2988
  %v3257 = vpack.c.b16 %v2993, %v2989
  %v3258 = vpack.c.b16 %v2994, %v2990
  %v3259 = vpack.c.b16 %v2999, %v2995
  %v3260 = vpack.c.b16 %v3000, %v2996
  %v3261 = vpack.c.b16 %v3001, %v2997
  %v3262 = vpack.c.b16 %v3002, %v2998
  %v3263 = vpack.c.b16 %v3007, %v3003
  %v3264 = vpack.c.b16 %v3008, %v3004
  %v3265 = vpack.c.b16 %v3009, %v3005
  %v3266 = vpack.c.b16 %v3010, %v3006
  %3523 = vmatprep.subr.bf16.mxu0 %v3012
  %3524 = vmatpush1.bf16.msra.mxu0 %v3011
  %3525 = vmatprep.subr.bf16.mxu0 %v3016
  %3526 = vmatpush1.bf16.msra.mxu0 %v3015
  %3527 = vmatprep.subr.bf16.mxu0 %v3020
  %3528 = vmatpush1.bf16.msra.mxu0 %v3019
  %3529 = vmatprep.subr.bf16.mxu0 %v3024
  %3530 = vmatpush1.bf16.msra.mxu0 %v3023
  %3531 = vmatprep.subr.bf16.mxu0 %v3028
  %3532 = vmatpush1.bf16.msra.mxu0 %v3027
  %3533 = vmatprep.subr.bf16.mxu0 %v3032
  %3534 = vmatpush1.bf16.msra.mxu0 %v3031
  %3535 = vmatprep.subr.bf16.mxu0 %v3036
  %3536 = vmatpush1.bf16.msra.mxu0 %v3035
  %3537 = vmatprep.subr.bf16.mxu0 %v3040
  %3538 = vmatpush1.bf16.msra.mxu0 %v3039
  %3539 = vmatprep.subr.bf16.mxu0 %v3044
  %3540 = vmatpush1.bf16.msra.mxu0 %v3043
  %3541 = vmatprep.subr.bf16.mxu0 %v3048
  %3542 = vmatpush1.bf16.msra.mxu0 %v3047
  %3543 = vmatprep.subr.bf16.mxu0 %v3052
  %3544 = vmatpush1.bf16.msra.mxu0 %v3051
  %3545 = vmatprep.subr.bf16.mxu0 %v3056
  %3546 = vmatpush1.bf16.msra.mxu0 %v3055
  %3547 = vmatprep.subr.bf16.mxu0 %v3060
  %3548 = vmatpush1.bf16.msra.mxu0 %v3059
  %3549 = vmatprep.subr.bf16.mxu0 %v3064
  %3550 = vmatpush1.bf16.msra.mxu0 %v3063
  %3551 = vmatprep.subr.bf16.mxu0 %v3068
  %3552 = vmatpush1.bf16.msra.mxu0 %v3067
  %3553 = vmatprep.subr.bf16.mxu0 %v3072
  %3554 = vmatpush1.bf16.msra.mxu0 %v3071
  %3555 = vmatprep.mubr.bf16.mxu0 %v1958
  %3556 = vmatmul.mubr.bf16.gmra.mrb[0].mxu0 %v1957
  %v3557 = vpop.f32.mrb[0].mxu0
  %v3558 = vadd.f32 %v2226, %v3557
  %v3559 = vpop.f32.mrb[0].mxu0
  %v3560 = vadd.f32 %v2230, %v3559
  %v3561 = vpop.f32.mrb[0].mxu0
  %v3562 = vpop.f32.mrb[0].mxu0
  %3563 = vdwg.mxu0
  %3564 = vmatprep.subr.bf16.mxu0 %v3076
  %3565 = vmatpush1.bf16.msra.mxu0 %v3075
  %3566 = vmatprep.subr.bf16.mxu0 %v3080
  %3567 = vmatpush1.bf16.msra.mxu0 %v3079
  %3568 = vmatprep.subr.bf16.mxu0 %v3084
  %3569 = vmatpush1.bf16.msra.mxu0 %v3083
  %3570 = vmatprep.subr.bf16.mxu0 %v3088
  %3571 = vmatpush1.bf16.msra.mxu0 %v3087
  %3572 = vmatprep.subr.bf16.mxu0 %v3092
  %3573 = vmatpush1.bf16.msra.mxu0 %v3091
  %3574 = vmatprep.subr.bf16.mxu0 %v3096
  %3575 = vmatpush1.bf16.msra.mxu0 %v3095
  %3576 = vmatprep.subr.bf16.mxu0 %v3100
  %3577 = vmatpush1.bf16.msra.mxu0 %v3099
  %3578 = vmatprep.subr.bf16.mxu0 %v3104
  %3579 = vmatpush1.bf16.msra.mxu0 %v3103
  %3580 = vmatprep.subr.bf16.mxu0 %v3108
  %3581 = vmatpush1.bf16.msra.mxu0 %v3107
  %3582 = vmatprep.subr.bf16.mxu0 %v3112
  %3583 = vmatpush1.bf16.msra.mxu0 %v3111
  %3584 = vmatprep.subr.bf16.mxu0 %v3116
  %3585 = vmatpush1.bf16.msra.mxu0 %v3115
  %3586 = vmatprep.subr.bf16.mxu0 %v3120
  %3587 = vmatpush1.bf16.msra.mxu0 %v3119
  %3588 = vmatprep.subr.bf16.mxu0 %v3124
  %3589 = vmatpush1.bf16.msra.mxu0 %v3123
  %3590 = vmatprep.subr.bf16.mxu0 %v3128
  %3591 = vmatpush1.bf16.msra.mxu0 %v3127
  %3592 = vmatprep.subr.bf16.mxu0 %v3132
  %3593 = vmatpush1.bf16.msra.mxu0 %v3131
  %3594 = vmatprep.subr.bf16.mxu0 %v3136
  %3595 = vmatpush1.bf16.msra.mxu0 %v3135
  %3596 = vmatprep.mubr.bf16.mxu0 %v1960
  %3597 = vmatmul.mubr.bf16.gmra.mrb[0].mxu0 %v1959
  %v3598 = vpop.f32.mrb[0].mxu0
  %v3599 = vadd.f32 %v3558, %v3598
  %v3600 = vpop.f32.mrb[0].mxu0
  %v3601 = vadd.f32 %v3560, %v3600
  %v3602 = vpop.f32.mrb[0].mxu0
  %v3603 = vpop.f32.mrb[0].mxu0
  %3604 = vdwg.mxu0
  %3605 = vmatprep.subr.bf16.mxu0 %v3140
  %3606 = vmatpush1.bf16.msra.mxu0 %v3139
  %3607 = vmatprep.subr.bf16.mxu0 %v3144
  %3608 = vmatpush1.bf16.msra.mxu0 %v3143
  %3609 = vmatprep.subr.bf16.mxu0 %v3148
  %3610 = vmatpush1.bf16.msra.mxu0 %v3147
  %3611 = vmatprep.subr.bf16.mxu0 %v3152
  %3612 = vmatpush1.bf16.msra.mxu0 %v3151
  %3613 = vmatprep.subr.bf16.mxu0 %v3156
  %3614 = vmatpush1.bf16.msra.mxu0 %v3155
  %3615 = vmatprep.subr.bf16.mxu0 %v3160
  %3616 = vmatpush1.bf16.msra.mxu0 %v3159
  %3617 = vmatprep.subr.bf16.mxu0 %v3164
  %3618 = vmatpush1.bf16.msra.mxu0 %v3163
  %3619 = vmatprep.subr.bf16.mxu0 %v3168
  %3620 = vmatpush1.bf16.msra.mxu0 %v3167
  %3621 = vmatprep.subr.bf16.mxu0 %v3172
  %3622 = vmatpush1.bf16.msra.mxu0 %v3171
  %3623 = vmatprep.subr.bf16.mxu0 %v3176
  %3624 = vmatpush1.bf16.msra.mxu0 %v3175
  %3625 = vmatprep.subr.bf16.mxu0 %v3180
  %3626 = vmatpush1.bf16.msra.mxu0 %v3179
  %3627 = vmatprep.subr.bf16.mxu0 %v3184
  %3628 = vmatpush1.bf16.msra.mxu0 %v3183
  %3629 = vmatprep.subr.bf16.mxu0 %v3188
  %3630 = vmatpush1.bf16.msra.mxu0 %v3187
  %3631 = vmatprep.subr.bf16.mxu0 %v3192
  %3632 = vmatpush1.bf16.msra.mxu0 %v3191
  %3633 = vmatprep.subr.bf16.mxu0 %v3196
  %3634 = vmatpush1.bf16.msra.mxu0 %v3195
  %3635 = vmatprep.subr.bf16.mxu0 %v3200
  %3636 = vmatpush1.bf16.msra.mxu0 %v3199
  %3637 = vmatprep.mubr.bf16.mxu0 %v1962
  %3638 = vmatmul.mubr.bf16.gmra.mrb[0].mxu0 %v1961
  %v3639 = vpop.f32.mrb[0].mxu0
  %v3640 = vadd.f32 %v3599, %v3639
  %v3641 = vpop.f32.mrb[0].mxu0
  %v3642 = vadd.f32 %v3601, %v3641
  %v3643 = vpop.f32.mrb[0].mxu0
  %v3644 = vpop.f32.mrb[0].mxu0
  %3645 = vdwg.mxu0
  %3646 = vmatprep.subr.bf16.mxu0 %v3204
  %3647 = vmatpush1.bf16.msra.mxu0 %v3203
  %3648 = vmatprep.subr.bf16.mxu0 %v3208
  %3649 = vmatpush1.bf16.msra.mxu0 %v3207
  %3650 = vmatprep.subr.bf16.mxu0 %v3212
  %3651 = vmatpush1.bf16.msra.mxu0 %v3211
  %3652 = vmatprep.subr.bf16.mxu0 %v3216
  %3653 = vmatpush1.bf16.msra.mxu0 %v3215
  %3654 = vmatprep.subr.bf16.mxu0 %v3220
  %3655 = vmatpush1.bf16.msra.mxu0 %v3219
  %3656 = vmatprep.subr.bf16.mxu0 %v3224
  %3657 = vmatpush1.bf16.msra.mxu0 %v3223
  %3658 = vmatprep.subr.bf16.mxu0 %v3228
  %3659 = vmatpush1.bf16.msra.mxu0 %v3227
  %3660 = vmatprep.subr.bf16.mxu0 %v3232
  %3661 = vmatpush1.bf16.msra.mxu0 %v3231
  %3662 = vmatprep.subr.bf16.mxu0 %v3236
  %3663 = vmatpush1.bf16.msra.mxu0 %v3235
  %3664 = vmatprep.subr.bf16.mxu0 %v3240
  %3665 = vmatpush1.bf16.msra.mxu0 %v3239
  %3666 = vmatprep.subr.bf16.mxu0 %v3244
  %3667 = vmatpush1.bf16.msra.mxu0 %v3243
  %3668 = vmatprep.subr.bf16.mxu0 %v3248
  %3669 = vmatpush1.bf16.msra.mxu0 %v3247
  %3670 = vmatprep.subr.bf16.mxu0 %v3252
  %3671 = vmatpush1.bf16.msra.mxu0 %v3251
  %3672 = vmatprep.subr.bf16.mxu0 %v3256
  %3673 = vmatpush1.bf16.msra.mxu0 %v3255
  %3674 = vmatprep.subr.bf16.mxu0 %v3260
  %3675 = vmatpush1.bf16.msra.mxu0 %v3259
  %3676 = vmatprep.subr.bf16.mxu0 %v3264
  %3677 = vmatpush1.bf16.msra.mxu0 %v3263
  %3678 = vmatprep.mubr.bf16.mxu0 %v1964
  %3679 = vmatmul.mubr.bf16.gmra.mrb[0].mxu0 %v1963
  %v3680 = vpop.f32.mrb[0].mxu0
  %v3681 = vadd.f32 %v3640, %v3680
  %v3682 = vpop.f32.mrb[0].mxu0
  %v3683 = vadd.f32 %v3642, %v3682
  %v3684 = vpop.f32.mrb[0].mxu0
  %v3685 = vpop.f32.mrb[0].mxu0
  %3686 = vdwg.mxu0
  %3687 = vmatprep.subr.bf16.mxu0 %v3014
  %3688 = vmatpush1.bf16.msra.mxu0 %v3013
  %3689 = vmatprep.subr.bf16.mxu0 %v3018
  %3690 = vmatpush1.bf16.msra.mxu0 %v3017
  %3691 = vmatprep.subr.bf16.mxu0 %v3022
  %3692 = vmatpush1.bf16.msra.mxu0 %v3021
  %3693 = vmatprep.subr.bf16.mxu0 %v3026
  %3694 = vmatpush1.bf16.msra.mxu0 %v3025
  %3695 = vmatprep.subr.bf16.mxu0 %v3030
  %3696 = vmatpush1.bf16.msra.mxu0 %v3029
  %3697 = vmatprep.subr.bf16.mxu0 %v3034
  %3698 = vmatpush1.bf16.msra.mxu0 %v3033
  %3699 = vmatprep.subr.bf16.mxu0 %v3038
  %3700 = vmatpush1.bf16.msra.mxu0 %v3037
  %3701 = vmatprep.subr.bf16.mxu0 %v3042
  %3702 = vmatpush1.bf16.msra.mxu0 %v3041
  %3703 = vmatprep.subr.bf16.mxu0 %v3046
  %3704 = vmatpush1.bf16.msra.mxu0 %v3045
  %3705 = vmatprep.subr.bf16.mxu0 %v3050
  %3706 = vmatpush1.bf16.msra.mxu0 %v3049
  %3707 = vmatprep.subr.bf16.mxu0 %v3054
  %3708 = vmatpush1.bf16.msra.mxu0 %v3053
  %3709 = vmatprep.subr.bf16.mxu0 %v3058
  %3710 = vmatpush1.bf16.msra.mxu0 %v3057
  %3711 = vmatprep.subr.bf16.mxu0 %v3062
  %3712 = vmatpush1.bf16.msra.mxu0 %v3061
  %3713 = vmatprep.subr.bf16.mxu0 %v3066
  %3714 = vmatpush1.bf16.msra.mxu0 %v3065
  %3715 = vmatprep.subr.bf16.mxu0 %v3070
  %3716 = vmatpush1.bf16.msra.mxu0 %v3069
  %3717 = vmatprep.subr.bf16.mxu0 %v3074
  %3718 = vmatpush1.bf16.msra.mxu0 %v3073
  %3719 = vmatprep.mubr.bf16.mxu0 %v1958
  %3720 = vmatmul.mubr.bf16.gmra.mrb[0].mxu0 %v1957
  %v3721 = vpop.f32.mrb[0].mxu0
  %v3722 = vadd.f32 %v2234, %v3721
  %v3723 = vpop.f32.mrb[0].mxu0
  %v3724 = vadd.f32 %v2238, %v3723
  %v3725 = vpop.f32.mrb[0].mxu0
  %v3726 = vpop.f32.mrb[0].mxu0
  %3727 = vdwg.mxu0
  %3728 = vmatprep.subr.bf16.mxu0 %v3078
  %3729 = vmatpush1.bf16.msra.mxu0 %v3077
  %3730 = vmatprep.subr.bf16.mxu0 %v3082
  %3731 = vmatpush1.bf16.msra.mxu0 %v3081
  %3732 = vmatprep.subr.bf16.mxu0 %v3086
  %3733 = vmatpush1.bf16.msra.mxu0 %v3085
  %3734 = vmatprep.subr.bf16.mxu0 %v3090
  %3735 = vmatpush1.bf16.msra.mxu0 %v3089
  %3736 = vmatprep.subr.bf16.mxu0 %v3094
  %3737 = vmatpush1.bf16.msra.mxu0 %v3093
  %3738 = vmatprep.subr.bf16.mxu0 %v3098
  %3739 = vmatpush1.bf16.msra.mxu0 %v3097
  %3740 = vmatprep.subr.bf16.mxu0 %v3102
  %3741 = vmatpush1.bf16.msra.mxu0 %v3101
  %3742 = vmatprep.subr.bf16.mxu0 %v3106
  %3743 = vmatpush1.bf16.msra.mxu0 %v3105
  %3744 = vmatprep.subr.bf16.mxu0 %v3110
  %3745 = vmatpush1.bf16.msra.mxu0 %v3109
  %3746 = vmatprep.subr.bf16.mxu0 %v3114
  %3747 = vmatpush1.bf16.msra.mxu0 %v3113
  %3748 = vmatprep.subr.bf16.mxu0 %v3118
  %3749 = vmatpush1.bf16.msra.mxu0 %v3117
  %3750 = vmatprep.subr.bf16.mxu0 %v3122
  %3751 = vmatpush1.bf16.msra.mxu0 %v3121
  %3752 = vmatprep.subr.bf16.mxu0 %v3126
  %3753 = vmatpush1.bf16.msra.mxu0 %v3125
  %3754 = vmatprep.subr.bf16.mxu0 %v3130
  %3755 = vmatpush1.bf16.msra.mxu0 %v3129
  %3756 = vmatprep.subr.bf16.mxu0 %v3134
  %3757 = vmatpush1.bf16.msra.mxu0 %v3133
  %3758 = vmatprep.subr.bf16.mxu0 %v3138
  %3759 = vmatpush1.bf16.msra.mxu0 %v3137
  %3760 = vmatprep.mubr.bf16.mxu0 %v1960
  %3761 = vmatmul.mubr.bf16.gmra.mrb[0].mxu0 %v1959
  %v3762 = vpop.f32.mrb[0].mxu0
  %v3763 = vadd.f32 %v3722, %v3762
  %v3764 = vpop.f32.mrb[0].mxu0
  %v3765 = vadd.f32 %v3724, %v3764
  %v3766 = vpop.f32.mrb[0].mxu0
  %v3767 = vpop.f32.mrb[0].mxu0
  %3768 = vdwg.mxu0
  %3769 = vmatprep.subr.bf16.mxu0 %v3142
  %3770 = vmatpush1.bf16.msra.mxu0 %v3141
  %3771 = vmatprep.subr.bf16.mxu0 %v3146
  %3772 = vmatpush1.bf16.msra.mxu0 %v3145
  %3773 = vmatprep.subr.bf16.mxu0 %v3150
  %3774 = vmatpush1.bf16.msra.mxu0 %v3149
  %3775 = vmatprep.subr.bf16.mxu0 %v3154
  %3776 = vmatpush1.bf16.msra.mxu0 %v3153
  %3777 = vmatprep.subr.bf16.mxu0 %v3158
  %3778 = vmatpush1.bf16.msra.mxu0 %v3157
  %3779 = vmatprep.subr.bf16.mxu0 %v3162
  %3780 = vmatpush1.bf16.msra.mxu0 %v3161
  %3781 = vmatprep.subr.bf16.mxu0 %v3166
  %3782 = vmatpush1.bf16.msra.mxu0 %v3165
  %3783 = vmatprep.subr.bf16.mxu0 %v3170
  %3784 = vmatpush1.bf16.msra.mxu0 %v3169
  %3785 = vmatprep.subr.bf16.mxu0 %v3174
  %3786 = vmatpush1.bf16.msra.mxu0 %v3173
  %3787 = vmatprep.subr.bf16.mxu0 %v3178
  %3788 = vmatpush1.bf16.msra.mxu0 %v3177
  %3789 = vmatprep.subr.bf16.mxu0 %v3182
  %3790 = vmatpush1.bf16.msra.mxu0 %v3181
  %3791 = vmatprep.subr.bf16.mxu0 %v3186
  %3792 = vmatpush1.bf16.msra.mxu0 %v3185
  %3793 = vmatprep.subr.bf16.mxu0 %v3190
  %3794 = vmatpush1.bf16.msra.mxu0 %v3189
  %3795 = vmatprep.subr.bf16.mxu0 %v3194
  %3796 = vmatpush1.bf16.msra.mxu0 %v3193
  %3797 = vmatprep.subr.bf16.mxu0 %v3198
  %3798 = vmatpush1.bf16.msra.mxu0 %v3197
  %3799 = vmatprep.subr.bf16.mxu0 %v3202
  %3800 = vmatpush1.bf16.msra.mxu0 %v3201
  %3801 = vmatprep.mubr.bf16.mxu0 %v1962
  %3802 = vmatmul.mubr.bf16.gmra.mrb[0].mxu0 %v1961
  %v3803 = vpop.f32.mrb[0].mxu0
  %v3804 = vadd.f32 %v3763, %v3803
  %v3805 = vpop.f32.mrb[0].mxu0
  %v3806 = vadd.f32 %v3765, %v3805
  %v3807 = vpop.f32.mrb[0].mxu0
  %v3808 = vpop.f32.mrb[0].mxu0
  %3809 = vdwg.mxu0
  %3810 = vmatprep.subr.bf16.mxu0 %v3206
  %3811 = vmatpush1.bf16.msra.mxu0 %v3205
  %3812 = vmatprep.subr.bf16.mxu0 %v3210
  %3813 = vmatpush1.bf16.msra.mxu0 %v3209
  %3814 = vmatprep.subr.bf16.mxu0 %v3214
  %3815 = vmatpush1.bf16.msra.mxu0 %v3213
  %3816 = vmatprep.subr.bf16.mxu0 %v3218
  %3817 = vmatpush1.bf16.msra.mxu0 %v3217
  %3818 = vmatprep.subr.bf16.mxu0 %v3222
  %3819 = vmatpush1.bf16.msra.mxu0 %v3221
  %3820 = vmatprep.subr.bf16.mxu0 %v3226
  %3821 = vmatpush1.bf16.msra.mxu0 %v3225
  %3822 = vmatprep.subr.bf16.mxu0 %v3230
  %3823 = vmatpush1.bf16.msra.mxu0 %v3229
  %3824 = vmatprep.subr.bf16.mxu0 %v3234
  %3825 = vmatpush1.bf16.msra.mxu0 %v3233
  %3826 = vmatprep.subr.bf16.mxu0 %v3238
  %3827 = vmatpush1.bf16.msra.mxu0 %v3237
  %3828 = vmatprep.subr.bf16.mxu0 %v3242
  %3829 = vmatpush1.bf16.msra.mxu0 %v3241
  %3830 = vmatprep.subr.bf16.mxu0 %v3246
  %3831 = vmatpush1.bf16.msra.mxu0 %v3245
  %3832 = vmatprep.subr.bf16.mxu0 %v3250
  %3833 = vmatpush1.bf16.msra.mxu0 %v3249
  %3834 = vmatprep.subr.bf16.mxu0 %v3254
  %3835 = vmatpush1.bf16.msra.mxu0 %v3253
  %3836 = vmatprep.subr.bf16.mxu0 %v3258
  %3837 = vmatpush1.bf16.msra.mxu0 %v3257
  %3838 = vmatprep.subr.bf16.mxu0 %v3262
  %3839 = vmatpush1.bf16.msra.mxu0 %v3261
  %3840 = vmatprep.subr.bf16.mxu0 %v3266
  %3841 = vmatpush1.bf16.msra.mxu0 %v3265
  %3842 = vmatprep.mubr.bf16.mxu0 %v1964
  %3843 = vmatmul.mubr.bf16.gmra.mrb[0].mxu0 %v1963
  %v3844 = vpop.f32.mrb[0].mxu0
  %v3845 = vadd.f32 %v3804, %v3844
  %v3846 = vpop.f32.mrb[0].mxu0
  %v3847 = vadd.f32 %v3806, %v3846
  %v3848 = vpop.f32.mrb[0].mxu0
  %v3849 = vpop.f32.mrb[0].mxu0
  %3850 = vdwg.mxu0
  %v3851 = vmax.f32 %v3681, 0.0
  %v3852 = vmax.f32 %v3683, 0.0
  %v3853 = vmax.f32 %v3845, 0.0
  %v3854 = vmax.f32 %v3847, 0.0
  %v3855 = vpack.c.bf16 %v3851, %v3851
  %v3856 = vpack.c.bf16 %v3852, %v3852
  %v3857 = vpack.c.bf16 %v3853, %v3853
  %v3858 = vpack.c.bf16 %v3854, %v3854
  %v3859 = vld [vmem:[%s5] sm:$0xf]
  %v3860 = vld [vmem:[%s5 + $0x4] sm:$0xf]
  %v3861 = vld [vmem:[%s5 + $0x8] sm:$0xf]
  %v3862 = vld [vmem:[%s5 + $0xc] sm:$0xf]
  %v3863 = vld [vmem:[%s5 + $0x10] sm:$0xf]
  %v3864 = vld [vmem:[%s5 + $0x14] sm:$0xf]
  %v3865 = vld [vmem:[%s5 + $0x18] sm:$0xf]
  %v3866 = vld [vmem:[%s5 + $0x1c] sm:$0xf]
  %v3867 = vld [vmem:[%s5 + $0x20] sm:$0xf]
  %v3868 = vld [vmem:[%s5 + $0x24] sm:$0xf]
  %v3869 = vld [vmem:[%s5 + $0x28] sm:$0xf]
  %v3870 = vld [vmem:[%s5 + $0x2c] sm:$0xf]
  %v3871 = vld [vmem:[%s5 + $0x30] sm:$0xf]
  %v3872 = vld [vmem:[%s5 + $0x34] sm:$0xf]
  %v3873 = vld [vmem:[%s5 + $0x38] sm:$0xf]
  %v3874 = vld [vmem:[%s5 + $0x3c] sm:$0xf]
  %v3875 = vld [vmem:[%s5 + $0x40] sm:$0xf]
  %v3876 = vld [vmem:[%s5 + $0x44] sm:$0xf]
  %v3877 = vld [vmem:[%s5 + $0x48] sm:$0xf]
  %v3878 = vld [vmem:[%s5 + $0x4c] sm:$0xf]
  %v3879 = vld [vmem:[%s5 + $0x50] sm:$0xf]
  %v3880 = vld [vmem:[%s5 + $0x54] sm:$0xf]
  %v3881 = vld [vmem:[%s5 + $0x58] sm:$0xf]
  %v3882 = vld [vmem:[%s5 + $0x5c] sm:$0xf]
  %v3883 = vld [vmem:[%s5 + $0x60] sm:$0xf]
  %v3884 = vld [vmem:[%s5 + $0x64] sm:$0xf]
  %v3885 = vld [vmem:[%s5 + $0x68] sm:$0xf]
  %v3886 = vld [vmem:[%s5 + $0x6c] sm:$0xf]
  %v3887 = vld [vmem:[%s5 + $0x70] sm:$0xf]
  %v3888 = vld [vmem:[%s5 + $0x74] sm:$0xf]
  %v3889 = vld [vmem:[%s5 + $0x78] sm:$0xf]
  %v3890 = vld [vmem:[%s5 + $0x7c] sm:$0xf]
  %v3891 = vld [vmem:[%s5 + $0x80] sm:$0xf]
  %v3892 = vld [vmem:[%s5 + $0x84] sm:$0xf]
  %v3893 = vld [vmem:[%s5 + $0x88] sm:$0xf]
  %v3894 = vld [vmem:[%s5 + $0x8c] sm:$0xf]
  %v3895 = vld [vmem:[%s5 + $0x90] sm:$0xf]
  %v3896 = vld [vmem:[%s5 + $0x94] sm:$0xf]
  %v3897 = vld [vmem:[%s5 + $0x98] sm:$0xf]
  %v3898 = vld [vmem:[%s5 + $0x9c] sm:$0xf]
  %v3899 = vld [vmem:[%s5 + $0xa0] sm:$0xf]
  %v3900 = vld [vmem:[%s5 + $0xa4] sm:$0xf]
  %v3901 = vld [vmem:[%s5 + $0xa8] sm:$0xf]
  %v3902 = vld [vmem:[%s5 + $0xac] sm:$0xf]
  %v3903 = vld [vmem:[%s5 + $0xb0] sm:$0xf]
  %v3904 = vld [vmem:[%s5 + $0xb4] sm:$0xf]
  %v3905 = vld [vmem:[%s5 + $0xb8] sm:$0xf]
  %v3906 = vld [vmem:[%s5 + $0xbc] sm:$0xf]
  %v3907 = vld [vmem:[%s5 + $0xc0] sm:$0xf]
  %v3908 = vld [vmem:[%s5 + $0xc4] sm:$0xf]
  %v3909 = vld [vmem:[%s5 + $0xc8] sm:$0xf]
  %v3910 = vld [vmem:[%s5 + $0xcc] sm:$0xf]
  %v3911 = vld [vmem:[%s5 + $0xd0] sm:$0xf]
  %v3912 = vld [vmem:[%s5 + $0xd4] sm:$0xf]
  %v3913 = vld [vmem:[%s5 + $0xd8] sm:$0xf]
  %v3914 = vld [vmem:[%s5 + $0xdc] sm:$0xf]
  %v3915 = vld [vmem:[%s5 + $0xe0] sm:$0xf]
  %v3916 = vld [vmem:[%s5 + $0xe4] sm:$0xf]
  %v3917 = vld [vmem:[%s5 + $0xe8] sm:$0xf]
  %v3918 = vld [vmem:[%s5 + $0xec] sm:$0xf]
  %v3919 = vld [vmem:[%s5 + $0xf0] sm:$0xf]
  %v3920 = vld [vmem:[%s5 + $0xf4] sm:$0xf]
  %v3921 = vld [vmem:[%s5 + $0xf8] sm:$0xf]
  %v3922 = vld [vmem:[%s5 + $0xfc] sm:$0xf]
  %v3923 = vld [vmem:[%s6] sm:$0x1]
  %v3925 = vlaneseq
  %v3926 = vshrl.u32 %v3925, 7
  %v3927 = vsub.s32 0, %v3926
  %v3928 = vrot.slane %v3923, %v3927
  %v3994 = vunpack.c.l.b16 %v3859
  %v3995 = vunpack.c.l.b16 %v3860
  %v3996 = vunpack.c.l.b16 %v3861
  %v3997 = vunpack.c.l.b16 %v3862
  %v3998 = vunpack.c.l.b16 %v3863
  %v3999 = vunpack.c.l.b16 %v3864
  %v4000 = vunpack.c.l.b16 %v3865
  %v4001 = vunpack.c.l.b16 %v3866
  %v4002 = vunpack.c.l.b16 %v3867
  %v4003 = vunpack.c.l.b16 %v3868
  %v4004 = vunpack.c.l.b16 %v3869
  %v4005 = vunpack.c.l.b16 %v3870
  %v4006 = vunpack.c.l.b16 %v3871
  %v4007 = vunpack.c.l.b16 %v3872
  %v4008 = vunpack.c.l.b16 %v3873
  %v4009 = vunpack.c.l.b16 %v3874
  %v4010 = vunpack.c.l.b16 %v3875
  %v4011 = vunpack.c.l.b16 %v3876
  %v4012 = vunpack.c.l.b16 %v3877
  %v4013 = vunpack.c.l.b16 %v3878
  %v4014 = vunpack.c.l.b16 %v3879
  %v4015 = vunpack.c.l.b16 %v3880
  %v4016 = vunpack.c.l.b16 %v3881
  %v4017 = vunpack.c.l.b16 %v3882
  %v4018 = vunpack.c.l.b16 %v3883
  %v4019 = vunpack.c.l.b16 %v3884
  %v4020 = vunpack.c.l.b16 %v3885
  %v4021 = vunpack.c.l.b16 %v3886
  %v4022 = vunpack.c.l.b16 %v3887
  %v4023 = vunpack.c.l.b16 %v3888
  %v4024 = vunpack.c.l.b16 %v3889
  %v4025 = vunpack.c.l.b16 %v3890
  %v4026 = vunpack.c.l.b16 %v3891
  %v4027 = vunpack.c.l.b16 %v3892
  %v4028 = vunpack.c.l.b16 %v3893
  %v4029 = vunpack.c.l.b16 %v3894
  %v4030 = vunpack.c.l.b16 %v3895
  %v4031 = vunpack.c.l.b16 %v3896
  %v4032 = vunpack.c.l.b16 %v3897
  %v4033 = vunpack.c.l.b16 %v3898
  %v4034 = vunpack.c.l.b16 %v3899
  %v4035 = vunpack.c.l.b16 %v3900
  %v4036 = vunpack.c.l.b16 %v3901
  %v4037 = vunpack.c.l.b16 %v3902
  %v4038 = vunpack.c.l.b16 %v3903
  %v4039 = vunpack.c.l.b16 %v3904
  %v4040 = vunpack.c.l.b16 %v3905
  %v4041 = vunpack.c.l.b16 %v3906
  %v4042 = vunpack.c.l.b16 %v3907
  %v4043 = vunpack.c.l.b16 %v3908
  %v4044 = vunpack.c.l.b16 %v3909
  %v4045 = vunpack.c.l.b16 %v3910
  %v4046 = vunpack.c.l.b16 %v3911
  %v4047 = vunpack.c.l.b16 %v3912
  %v4048 = vunpack.c.l.b16 %v3913
  %v4049 = vunpack.c.l.b16 %v3914
  %v4050 = vunpack.c.l.b16 %v3915
  %v4051 = vunpack.c.l.b16 %v3916
  %v4052 = vunpack.c.l.b16 %v3917
  %v4053 = vunpack.c.l.b16 %v3918
  %v4054 = vunpack.c.l.b16 %v3919
  %v4055 = vunpack.c.l.b16 %v3920
  %v4056 = vunpack.c.l.b16 %v3921
  %v4057 = vunpack.c.l.b16 %v3922
  %v4058 = vpack.c.b16 %v3995, %v3994
  %v4059 = vpack.c.b16 %v3997, %v3996
  %v4060 = vpack.c.b16 %v3999, %v3998
  %v4061 = vpack.c.b16 %v4001, %v4000
  %v4062 = vpack.c.b16 %v4003, %v4002
  %v4063 = vpack.c.b16 %v4005, %v4004
  %v4064 = vpack.c.b16 %v4007, %v4006
  %v4065 = vpack.c.b16 %v4009, %v4008
  %v4066 = vpack.c.b16 %v4011, %v4010
  %v4067 = vpack.c.b16 %v4013, %v4012
  %v4068 = vpack.c.b16 %v4015, %v4014
  %v4069 = vpack.c.b16 %v4017, %v4016
  %v4070 = vpack.c.b16 %v4019, %v4018
  %v4071 = vpack.c.b16 %v4021, %v4020
  %v4072 = vpack.c.b16 %v4023, %v4022
  %v4073 = vpack.c.b16 %v4025, %v4024
  %v4074 = vpack.c.b16 %v4027, %v4026
  %v4075 = vpack.c.b16 %v4029, %v4028
  %v4076 = vpack.c.b16 %v4031, %v4030
  %v4077 = vpack.c.b16 %v4033, %v4032
  %v4078 = vpack.c.b16 %v4035, %v4034
  %v4079 = vpack.c.b16 %v4037, %v4036
  %v4080 = vpack.c.b16 %v4039, %v4038
  %v4081 = vpack.c.b16 %v4041, %v4040
  %v4082 = vpack.c.b16 %v4043, %v4042
  %v4083 = vpack.c.b16 %v4045, %v4044
  %v4084 = vpack.c.b16 %v4047, %v4046
  %v4085 = vpack.c.b16 %v4049, %v4048
  %v4086 = vpack.c.b16 %v4051, %v4050
  %v4087 = vpack.c.b16 %v4053, %v4052
  %v4088 = vpack.c.b16 %v4055, %v4054
  %v4089 = vpack.c.b16 %v4057, %v4056
  %4122 = vmatprep.subr.bf16.mxu0 0
  %4123 = vmatpush1.bf16.msra.mxu0 %v4058
  %4124 = vmatprep.subr.bf16.mxu0 0
  %4125 = vmatpush1.bf16.msra.mxu0 %v4059
  %4126 = vmatprep.subr.bf16.mxu0 0
  %4127 = vmatpush1.bf16.msra.mxu0 %v4060
  %4128 = vmatprep.subr.bf16.mxu0 0
  %4129 = vmatpush1.bf16.msra.mxu0 %v4061
  %4130 = vmatprep.subr.bf16.mxu0 0
  %4131 = vmatpush1.bf16.msra.mxu0 %v4062
  %4132 = vmatprep.subr.bf16.mxu0 0
  %4133 = vmatpush1.bf16.msra.mxu0 %v4063
  %4134 = vmatprep.subr.bf16.mxu0 0
  %4135 = vmatpush1.bf16.msra.mxu0 %v4064
  %4136 = vmatprep.subr.bf16.mxu0 0
  %4137 = vmatpush1.bf16.msra.mxu0 %v4065
  %4138 = vmatprep.subr.bf16.mxu0 0
  %4139 = vmatpush1.bf16.msra.mxu0 %v4066
  %4140 = vmatprep.subr.bf16.mxu0 0
  %4141 = vmatpush1.bf16.msra.mxu0 %v4067
  %4142 = vmatprep.subr.bf16.mxu0 0
  %4143 = vmatpush1.bf16.msra.mxu0 %v4068
  %4144 = vmatprep.subr.bf16.mxu0 0
  %4145 = vmatpush1.bf16.msra.mxu0 %v4069
  %4146 = vmatprep.subr.bf16.mxu0 0
  %4147 = vmatpush1.bf16.msra.mxu0 %v4070
  %4148 = vmatprep.subr.bf16.mxu0 0
  %4149 = vmatpush1.bf16.msra.mxu0 %v4071
  %4150 = vmatprep.subr.bf16.mxu0 0
  %4151 = vmatpush1.bf16.msra.mxu0 %v4072
  %4152 = vmatprep.subr.bf16.mxu0 0
  %4153 = vmatpush1.bf16.msra.mxu0 %v4073
  %4154 = vmatprep.mubr.bf16.mxu0 %v3856
  %4155 = vmatmul.mubr.bf16.gmra.mrb[0].mxu0 %v3855
  %v4156 = vpop.f32.mrb[0].mxu0
  %v4157 = vadd.f32 %v3928, %v4156
  %v4158 = vpop.f32.mrb[0].mxu0
  %v4159 = vpop.f32.mrb[0].mxu0
  %v4160 = vpop.f32.mrb[0].mxu0
  %4161 = vdwg.mxu0
  %4162 = vmatprep.subr.bf16.mxu0 0
  %4163 = vmatpush1.bf16.msra.mxu0 %v4074
  %4164 = vmatprep.subr.bf16.mxu0 0
  %4165 = vmatpush1.bf16.msra.mxu0 %v4075
  %4166 = vmatprep.subr.bf16.mxu0 0
  %4167 = vmatpush1.bf16.msra.mxu0 %v4076
  %4168 = vmatprep.subr.bf16.mxu0 0
  %4169 = vmatpush1.bf16.msra.mxu0 %v4077
  %4170 = vmatprep.subr.bf16.mxu0 0
  %4171 = vmatpush1.bf16.msra.mxu0 %v4078
  %4172 = vmatprep.subr.bf16.mxu0 0
  %4173 = vmatpush1.bf16.msra.mxu0 %v4079
  %4174 = vmatprep.subr.bf16.mxu0 0
  %4175 = vmatpush1.bf16.msra.mxu0 %v4080
  %4176 = vmatprep.subr.bf16.mxu0 0
  %4177 = vmatpush1.bf16.msra.mxu0 %v4081
  %4178 = vmatprep.subr.bf16.mxu0 0
  %4179 = vmatpush1.bf16.msra.mxu0 %v4082
  %4180 = vmatprep.subr.bf16.mxu0 0
  %4181 = vmatpush1.bf16.msra.mxu0 %v4083
  %4182 = vmatprep.subr.bf16.mxu0 0
  %4183 = vmatpush1.bf16.msra.mxu0 %v4084
  %4184 = vmatprep.subr.bf16.mxu0 0
  %4185 = vmatpush1.bf16.msra.mxu0 %v4085
  %4186 = vmatprep.subr.bf16.mxu0 0
  %4187 = vmatpush1.bf16.msra.mxu0 %v4086
  %4188 = vmatprep.subr.bf16.mxu0 0
  %4189 = vmatpush1.bf16.msra.mxu0 %v4087
  %4190 = vmatprep.subr.bf16.mxu0 0
  %4191 = vmatpush1.bf16.msra.mxu0 %v4088
  %4192 = vmatprep.subr.bf16.mxu0 0
  %4193 = vmatpush1.bf16.msra.mxu0 %v4089
  %4194 = vmatprep.mubr.bf16.mxu0 %v3858
  %4195 = vmatmul.mubr.bf16.gmra.mrb[0].mxu0 %v3857
  %v4196 = vpop.f32.mrb[0].mxu0
  %v4197 = vadd.f32 %v4157, %v4196
  %v4198 = vpop.f32.mrb[0].mxu0
  %v4199 = vpop.f32.mrb[0].mxu0
  %v4200 = vpop.f32.mrb[0].mxu0
  %4201 = vdwg.mxu0
  %4202 = vst [vmem:[%s7] sm:$0xff] %v4197
  // Predicated region
  $region30: #{custom_network_forward.5} parent=0 // pred_check
    _
  $region31: #{custom_network_forward.5} parent=0 // pred_check_branch
    %4204 = sbr.rel (0) target = $region33
  $region32: #{custom_network_forward.5} parent=0 // pred_region
    _
  $region33: #{custom_network_forward.5} parent=0 // pred_fallthru
    _
  // Predicated region
  $region34: #{custom_network_forward.5} parent=0 // pred_check
    _
  $region35: #{custom_network_forward.5} parent=0 // pred_check_branch
    %4206 = sbr.rel (0) target = $region37
  $region36: #{custom_network_forward.5} parent=0 // pred_region
    _
  $region37: #{custom_network_forward.5} parent=0 // pred_fallthru
    _

</llo_original>
